<compile_context>
chip_gen: v5e
topology: v5e:2x2
jax: 0.10.0
libtpu: 0.0.40
codegen_flags: <defaults>
</compile_context>

<pallas_src>
import functools

import jax
import jax.numpy as jnp
from jax.experimental import pallas as pl
from jax.experimental.pallas import tpu as pltpu


def _cdiv(a, b):
    return -(-a // b)


def _round_up(x, m):
    return ((x + m - 1) // m) * m


def _make_conv_bn_silu_kernel(*, bh, kh, kw, s, Wq, Wo, tn, has_next, out_dtype):
    """Fused conv + folded-BN + SiLU for one (bh rows, Wo, tn) output tile.

    Refs:
      x_cur  : (1, bh*s, s*Wq, Cin) bf16  current block of padded, phase-split rows
      x_next : (1, bh*s, s*Wq, Cin) bf16  next block (halo rows), only if has_next
      w      : (kh*kw, Cin, tn)     bf16  conv weight per tap
      scale  : (1, tn) f32                folded BN scale
      bias   : (1, tn) f32                folded BN bias
      o      : (1, bh, Wo, tn)            output tile
    """

    def kernel(*refs):
        if has_next:
            x_cur, x_next, w_ref, scale_ref, bias_ref, o_ref = refs
        else:
            x_cur, w_ref, scale_ref, bias_ref, o_ref = refs
            x_next = x_cur  # never actually read when has_next is False
        scale = scale_ref[...]  # (1, tn) f32
        bias = bias_ref[...]    # (1, tn) f32
        for r in range(bh):                         # output row within the block
            acc = jnp.zeros((Wo, tn), jnp.float32)
            for dy in range(kh):
                idx = r * s + dy                    # input row within cur||next
                src, row = (x_cur, idx) if idx < bh * s else (x_next, idx - bh * s)
                for dx in range(kw):
                    p, off = dx % s, dx // s        # W phase + offset inside phase
                    c0 = p * Wq + off
                    a = src[0, row, c0:c0 + Wo, :]  # (Wo, Cin) bf16, contiguous
                    acc = acc + jnp.dot(a, w_ref[dy * kw + dx],
                                        preferred_element_type=jnp.float32)
            y = acc * scale + bias                  # folded BatchNorm (f32)
            y = y * jax.nn.sigmoid(y)               # SiLU (f32)
            o_ref[0, r] = y.astype(out_dtype)

    return kernel


def basic_conv(x, weight, gamma, beta, running_mean, running_var, *,
               stride=1, eps=1e-5):
    """BasicConv forward: conv(no bias) -> BN(inference) -> SiLU. NCHW in/out."""
    N, Cin, H, W = x.shape
    Cout, Cin_w, kh, kw = weight.shape
    assert Cin_w == Cin
    assert kh == kw, "BasicConv uses square kernels (padding = kernel_size // 2)"
    s = int(stride)
    pad = kh // 2
    Ho = (H + 2 * pad - kh) // s + 1
    Wo = (W + 2 * pad - kw) // s + 1
    Hp, Wp = H + 2 * pad, W + 2 * pad

    # ---- output tiling: Cout tiles (lane-dense) and output-row blocks --------
    tn = min(512, _round_up(Cout, 128))
    Coutp = _round_up(Cout, tn)
    nj = Coutp // tn
    bh = min(8, Ho)
    # Megacore: make sure the parallel grid exposes >= 2 tiles when possible.
    if nj * N * _cdiv(Ho, bh) < 2 and Ho > 1:
        bh = _cdiv(Ho, 2)
    # Halo constraint: taps of the last rows must land in cur or next block only.
    if kh > s:
        bh = max(bh, _cdiv(kh - s, s))
    nho = _cdiv(Ho, bh)

    # ---- activation prep: ONE pass over the input, no im2col materialization -
    # NHWC (channels -> lanes), zero-pad spatially, split W into stride phases
    # (identity for stride 1), cast to bf16 for the MXU.
    # TODO(synk): keep activations NHWC across the whole CSPdarknet layer chain;
    # the NCHW<->NHWC transposes here only preserve the module's NCHW interface.
    x_nhwc = jnp.transpose(x, (0, 2, 3, 1))
    Wq = _cdiv(Wp, s)
    assert Wq >= Wo + (kw - 1) // s
    Hp_pad = _round_up(max((nho + 1) * bh * s, Hp), bh * s)  # room for halo block
    xp = jnp.pad(x_nhwc, ((0, 0), (pad, Hp_pad - H - pad),
                          (pad, Wq * s - W - pad), (0, 0)))
    # xw[n, h, p*Wq + q, c] == xp[n, h, q*s + p, c]   (phase-major W axis)
    xw = (xp.reshape(N, Hp_pad, Wq, s, Cin)
            .transpose(0, 1, 3, 2, 4)
            .reshape(N, Hp_pad, s * Wq, Cin)
            .astype(jnp.bfloat16))

    # ---- weights: (Cout, Cin, kh, kw) -> (kh*kw, Cin, Coutp), bf16 -----------
    w_mat = jnp.transpose(weight, (2, 3, 1, 0)).reshape(kh * kw, Cin, Cout)
    w_mat = jnp.pad(w_mat, ((0, 0), (0, 0), (0, Coutp - Cout))).astype(jnp.bfloat16)

    # ---- fold BatchNorm (inference) into per-channel scale / bias ------------
    scale = (gamma / jnp.sqrt(running_var + eps)).astype(jnp.float32)
    bias = (beta - running_mean * scale).astype(jnp.float32)
    scale = jnp.pad(scale, (0, Coutp - Cout)).reshape(1, Coutp)
    bias = jnp.pad(bias, (0, Coutp - Cout)).reshape(1, Coutp)

    has_next = (kh - 1) >= s  # taps of the last block rows spill into next block
    kernel = _make_conv_bn_silu_kernel(
        bh=bh, kh=kh, kw=kw, s=s, Wq=Wq, Wo=Wo, tn=tn,
        has_next=has_next, out_dtype=x.dtype)

    x_blk = (1, bh * s, s * Wq, Cin)
    x_cur_spec = pl.BlockSpec(x_blk, lambda j, n, i: (n, i, 0, 0))
    x_next_spec = pl.BlockSpec(x_blk, lambda j, n, i: (n, i + 1, 0, 0))
    w_spec = pl.BlockSpec((kh * kw, Cin, tn), lambda j, n, i: (0, 0, j))
    sb_spec = pl.BlockSpec((1, tn), lambda j, n, i: (0, j))
    o_spec = pl.BlockSpec((1, bh, Wo, tn), lambda j, n, i: (n, i, 0, j))

    in_specs = ([x_cur_spec] + ([x_next_spec] if has_next else [])
                + [w_spec, sb_spec, sb_spec])
    inputs = [xw] + ([xw] if has_next else []) + [w_mat, scale, bias]

    # ---- VMEM cap derived from the actual double-buffered tile footprint -----
    # (capped at 64 MiB so it is safe on v7x; tiles are small so this also
    #  leaves plenty of headroom on v5e/v6e's 128 MiB.)
    out_itemsize = jnp.dtype(x.dtype).itemsize
    x_bytes = bh * s * s * Wq * Cin * 2
    w_bytes = kh * kw * Cin * tn * 2
    o_bytes = bh * Wo * tn * out_itemsize
    footprint = 2 * ((2 if has_next else 1) * x_bytes + w_bytes + o_bytes + 2 * tn * 4)
    vmem_limit = int(min(max(4 * footprint, 32 * 1024 * 1024), 64 * 1024 * 1024))

    grid = (nj, N, nho)  # Cout tiles outermost so weights stay resident per tile
    out = pl.pallas_call(
        kernel,
        out_shape=jax.ShapeDtypeStruct((N, nho * bh, Wo, Coutp), x.dtype),
        grid_spec=pltpu.PrefetchScalarGridSpec(
            num_scalar_prefetch=0,
            grid=grid,
            in_specs=in_specs,
            out_specs=o_spec,
        ),
        compiler_params=pltpu.CompilerParams(
            dimension_semantics=("parallel", "parallel", "parallel"),
            vmem_limit_bytes=vmem_limit,
        ),
    )(*inputs)

    # Strip row/channel padding, back to NCHW at the module boundary.
    y = out[:, :Ho, :, :Cout]
    return jnp.transpose(y, (0, 3, 1, 2))


if __name__ == "__main__":
    key = jax.random.PRNGKey(0)
    N, Cin, H, W = 2, 4, 16, 16
    Cout, ksize, stride = 8, 3, 1
    eps = 1e-5

    k1, k2, k3, k4, k5, k6 = jax.random.split(key, 6)
    x = jax.random.normal(k1, (N, Cin, H, W), jnp.float32)
    weight = jax.random.normal(k2, (Cout, Cin, ksize, ksize), jnp.float32) * 0.1
    gamma = 1.0 + 0.1 * jax.random.normal(k3, (Cout,), jnp.float32)
    beta = 0.1 * jax.random.normal(k4, (Cout,), jnp.float32)
    running_mean = 0.1 * jax.random.normal(k5, (Cout,), jnp.float32)
    running_var = jax.nn.softplus(jax.random.normal(k6, (Cout,), jnp.float32)) + 0.5

    fwd = jax.jit(functools.partial(basic_conv, stride=stride, eps=eps))
    out = jax.block_until_ready(fwd(x, weight, gamma, beta, running_mean, running_var))

    # Pure-JAX f32 reference (conv -> folded BN -> SiLU) for correctness.
    pad = ksize // 2
    ref = jax.lax.conv_general_dilated(
        x, weight, window_strides=(stride, stride),
        padding=[(pad, pad), (pad, pad)],
        dimension_numbers=("NCHW", "OIHW", "NCHW"))
    scale = gamma / jnp.sqrt(running_var + eps)
    bias = beta - running_mean * scale
    ref = ref * scale[None, :, None, None] + bias[None, :, None, None]
    ref = ref * jax.nn.sigmoid(ref)

    err = float(jnp.max(jnp.abs(out - ref)))
    assert out.shape == (N, Cout, H, W), out.shape
    assert err < 5e-2, f"max abs err {err}"  # bf16 operands, f32 accumulation

    print("KERNEL_OK")
</pallas_src>

<mosaic_0001>
module attributes {stable_mosaic.version = 11 : i64} {
  func.func @kernel(%arg0: i32, %arg1: i32, %arg2: i32, %arg3: memref<1x8x18x4xbf16, #tpu.memory_space<vmem>>, %arg4: memref<1x8x18x4xbf16, #tpu.memory_space<vmem>>, %arg5: memref<9x4x128xbf16, #tpu.memory_space<vmem>>, %arg6: memref<1x128xf32, #tpu.memory_space<vmem>>, %arg7: memref<1x128xf32, #tpu.memory_space<vmem>>, %arg8: memref<1x8x16x128xf32, #tpu.memory_space<vmem>>) attributes {dimension_semantics = [#tpu.dimension_semantics<parallel>, #tpu.dimension_semantics<parallel>, #tpu.dimension_semantics<parallel>], iteration_bounds = array<i64: 1, 2, 2>, scalar_prefetch = 0 : i64, scratch_operands = 0 : i64, tpu.core_type = #tpu.core_type<tc>, window_params = [{transform_indices = @transform_0, window_bounds = array<i64: 1, 8, 18, 4>}, {transform_indices = @transform_1, window_bounds = array<i64: 1, 8, 18, 4>}, {transform_indices = @transform_2, window_bounds = array<i64: 9, 4, 128>}, {transform_indices = @transform_3, window_bounds = array<i64: 1, 128>}, {transform_indices = @transform_4, window_bounds = array<i64: 1, 128>}, {transform_indices = @transform_5, window_bounds = array<i64: 1, 8, 16, 128>}]} {
    %c0 = arith.constant 0 : index
    %c0_0 = arith.constant 0 : index
    %0 = vector.load %arg6[%c0, %c0_0] : memref<1x128xf32, #tpu.memory_space<vmem>>, vector<1x128xf32>
    %c0_1 = arith.constant 0 : index
    %c0_2 = arith.constant 0 : index
    %1 = vector.load %arg7[%c0_1, %c0_2] : memref<1x128xf32, #tpu.memory_space<vmem>>, vector<1x128xf32>
    %cst = arith.constant 0.000000e+00 : f32
    %2 = vector.broadcast %cst : f32 to vector<16x128xf32>
    %c0_3 = arith.constant 0 : index
    %c0_4 = arith.constant 0 : index
    %c0_5 = arith.constant 0 : index
    %c0_6 = arith.constant 0 : index
    %3 = vector.load %arg3[%c0_3, %c0_4, %c0_5, %c0_6] : memref<1x8x18x4xbf16, #tpu.memory_space<vmem>>, vector<1x1x16x4xbf16>
    %4 = vector.shape_cast %3 : vector<1x1x16x4xbf16> to vector<16x4xbf16>
    %c0_7 = arith.constant 0 : index
    %c0_8 = arith.constant 0 : index
    %c0_9 = arith.constant 0 : index
    %5 = vector.load %arg5[%c0_7, %c0_8, %c0_9] : memref<9x4x128xbf16, #tpu.memory_space<vmem>>, vector<1x4x128xbf16>
    %6 = vector.shape_cast %5 : vector<1x4x128xbf16> to vector<4x128xbf16>
    %cst_10 = arith.constant dense<0.000000e+00> : vector<16x128xf32>
    %7 = tpu.matmul %4, %6, %cst_10 {dimension_numbers = #tpu.dot_dimension_numbers<[1], [0], [0], [1], [0, 0, 1, 1], [], []>} : vector<16x4xbf16>, vector<4x128xbf16>, vector<16x128xf32> -> vector<16x128xf32>
    %8 = arith.addf %2, %7 : vector<16x128xf32>
    %c0_11 = arith.constant 0 : index
    %c0_12 = arith.constant 0 : index
    %c1 = arith.constant 1 : index
    %c0_13 = arith.constant 0 : index
    %9 = vector.load %arg3[%c0_11, %c0_12, %c1, %c0_13] : memref<1x8x18x4xbf16, #tpu.memory_space<vmem>>, vector<1x1x16x4xbf16>
    %10 = vector.shape_cast %9 : vector<1x1x16x4xbf16> to vector<16x4xbf16>
    %c1_14 = arith.constant 1 : index
    %c0_15 = arith.constant 0 : index
    %c0_16 = arith.constant 0 : index
    %11 = vector.load %arg5[%c1_14, %c0_15, %c0_16] : memref<9x4x128xbf16, #tpu.memory_space<vmem>>, vector<1x4x128xbf16>
    %12 = vector.shape_cast %11 : vector<1x4x128xbf16> to vector<4x128xbf16>
    %cst_17 = arith.constant dense<0.000000e+00> : vector<16x128xf32>
    %13 = tpu.matmul %10, %12, %cst_17 {dimension_numbers = #tpu.dot_dimension_numbers<[1], [0], [0], [1], [0, 0, 1, 1], [], []>} : vector<16x4xbf16>, vector<4x128xbf16>, vector<16x128xf32> -> vector<16x128xf32>
    %14 = arith.addf %8, %13 : vector<16x128xf32>
    %c0_18 = arith.constant 0 : index
    %c0_19 = arith.constant 0 : index
    %c2 = arith.constant 2 : index
    %c0_20 = arith.constant 0 : index
    %15 = vector.load %arg3[%c0_18, %c0_19, %c2, %c0_20] : memref<1x8x18x4xbf16, #tpu.memory_space<vmem>>, vector<1x1x16x4xbf16>
    %16 = vector.shape_cast %15 : vector<1x1x16x4xbf16> to vector<16x4xbf16>
    %c2_21 = arith.constant 2 : index
    %c0_22 = arith.constant 0 : index
    %c0_23 = arith.constant 0 : index
    %17 = vector.load %arg5[%c2_21, %c0_22, %c0_23] : memref<9x4x128xbf16, #tpu.memory_space<vmem>>, vector<1x4x128xbf16>
    %18 = vector.shape_cast %17 : vector<1x4x128xbf16> to vector<4x128xbf16>
    %cst_24 = arith.constant dense<0.000000e+00> : vector<16x128xf32>
    %19 = tpu.matmul %16, %18, %cst_24 {dimension_numbers = #tpu.dot_dimension_numbers<[1], [0], [0], [1], [0, 0, 1, 1], [], []>} : vector<16x4xbf16>, vector<4x128xbf16>, vector<16x128xf32> -> vector<16x128xf32>
    %20 = arith.addf %14, %19 : vector<16x128xf32>
    %c0_25 = arith.constant 0 : index
    %c1_26 = arith.constant 1 : index
    %c0_27 = arith.constant 0 : index
    %c0_28 = arith.constant 0 : index
    %21 = vector.load %arg3[%c0_25, %c1_26, %c0_27, %c0_28] : memref<1x8x18x4xbf16, #tpu.memory_space<vmem>>, vector<1x1x16x4xbf16>
    %22 = vector.shape_cast %21 : vector<1x1x16x4xbf16> to vector<16x4xbf16>
    %c3 = arith.constant 3 : index
    %c0_29 = arith.constant 0 : index
    %c0_30 = arith.constant 0 : index
    %23 = vector.load %arg5[%c3, %c0_29, %c0_30] : memref<9x4x128xbf16, #tpu.memory_space<vmem>>, vector<1x4x128xbf16>
    %24 = vector.shape_cast %23 : vector<1x4x128xbf16> to vector<4x128xbf16>
    %cst_31 = arith.constant dense<0.000000e+00> : vector<16x128xf32>
    %25 = tpu.matmul %22, %24, %cst_31 {dimension_numbers = #tpu.dot_dimension_numbers<[1], [0], [0], [1], [0, 0, 1, 1], [], []>} : vector<16x4xbf16>, vector<4x128xbf16>, vector<16x128xf32> -> vector<16x128xf32>
    %26 = arith.addf %20, %25 : vector<16x128xf32>
    %c0_32 = arith.constant 0 : index
    %c1_33 = arith.constant 1 : index
    %c1_34 = arith.constant 1 : index
    %c0_35 = arith.constant 0 : index
    %27 = vector.load %arg3[%c0_32, %c1_33, %c1_34, %c0_35] : memref<1x8x18x4xbf16, #tpu.memory_space<vmem>>, vector<1x1x16x4xbf16>
    %28 = vector.shape_cast %27 : vector<1x1x16x4xbf16> to vector<16x4xbf16>
    %c4 = arith.constant 4 : index
    %c0_36 = arith.constant 0 : index
    %c0_37 = arith.constant 0 : index
    %29 = vector.load %arg5[%c4, %c0_36, %c0_37] : memref<9x4x128xbf16, #tpu.memory_space<vmem>>, vector<1x4x128xbf16>
    %30 = vector.shape_cast %29 : vector<1x4x128xbf16> to vector<4x128xbf16>
    %cst_38 = arith.constant dense<0.000000e+00> : vector<16x128xf32>
    %31 = tpu.matmul %28, %30, %cst_38 {dimension_numbers = #tpu.dot_dimension_numbers<[1], [0], [0], [1], [0, 0, 1, 1], [], []>} : vector<16x4xbf16>, vector<4x128xbf16>, vector<16x128xf32> -> vector<16x128xf32>
    %32 = arith.addf %26, %31 : vector<16x128xf32>
    %c0_39 = arith.constant 0 : index
    %c1_40 = arith.constant 1 : index
    %c2_41 = arith.constant 2 : index
    %c0_42 = arith.constant 0 : index
    %33 = vector.load %arg3[%c0_39, %c1_40, %c2_41, %c0_42] : memref<1x8x18x4xbf16, #tpu.memory_space<vmem>>, vector<1x1x16x4xbf16>
    %34 = vector.shape_cast %33 : vector<1x1x16x4xbf16> to vector<16x4xbf16>
    %c5 = arith.constant 5 : index
    %c0_43 = arith.constant 0 : index
    %c0_44 = arith.constant 0 : index
    %35 = vector.load %arg5[%c5, %c0_43, %c0_44] : memref<9x4x128xbf16, #tpu.memory_space<vmem>>, vector<1x4x128xbf16>
    %36 = vector.shape_cast %35 : vector<1x4x128xbf16> to vector<4x128xbf16>
    %cst_45 = arith.constant dense<0.000000e+00> : vector<16x128xf32>
    %37 = tpu.matmul %34, %36, %cst_45 {dimension_numbers = #tpu.dot_dimension_numbers<[1], [0], [0], [1], [0, 0, 1, 1], [], []>} : vector<16x4xbf16>, vector<4x128xbf16>, vector<16x128xf32> -> vector<16x128xf32>
    %38 = arith.addf %32, %37 : vector<16x128xf32>
    %c0_46 = arith.constant 0 : index
    %c2_47 = arith.constant 2 : index
    %c0_48 = arith.constant 0 : index
    %c0_49 = arith.constant 0 : index
    %39 = vector.load %arg3[%c0_46, %c2_47, %c0_48, %c0_49] : memref<1x8x18x4xbf16, #tpu.memory_space<vmem>>, vector<1x1x16x4xbf16>
    %40 = vector.shape_cast %39 : vector<1x1x16x4xbf16> to vector<16x4xbf16>
    %c6 = arith.constant 6 : index
    %c0_50 = arith.constant 0 : index
    %c0_51 = arith.constant 0 : index
    %41 = vector.load %arg5[%c6, %c0_50, %c0_51] : memref<9x4x128xbf16, #tpu.memory_space<vmem>>, vector<1x4x128xbf16>
    %42 = vector.shape_cast %41 : vector<1x4x128xbf16> to vector<4x128xbf16>
    %cst_52 = arith.constant dense<0.000000e+00> : vector<16x128xf32>
    %43 = tpu.matmul %40, %42, %cst_52 {dimension_numbers = #tpu.dot_dimension_numbers<[1], [0], [0], [1], [0, 0, 1, 1], [], []>} : vector<16x4xbf16>, vector<4x128xbf16>, vector<16x128xf32> -> vector<16x128xf32>
    %44 = arith.addf %38, %43 : vector<16x128xf32>
    %c0_53 = arith.constant 0 : index
    %c2_54 = arith.constant 2 : index
    %c1_55 = arith.constant 1 : index
    %c0_56 = arith.constant 0 : index
    %45 = vector.load %arg3[%c0_53, %c2_54, %c1_55, %c0_56] : memref<1x8x18x4xbf16, #tpu.memory_space<vmem>>, vector<1x1x16x4xbf16>
    %46 = vector.shape_cast %45 : vector<1x1x16x4xbf16> to vector<16x4xbf16>
    %c7 = arith.constant 7 : index
    %c0_57 = arith.constant 0 : index
    %c0_58 = arith.constant 0 : index
    %47 = vector.load %arg5[%c7, %c0_57, %c0_58] : memref<9x4x128xbf16, #tpu.memory_space<vmem>>, vector<1x4x128xbf16>
    %48 = vector.shape_cast %47 : vector<1x4x128xbf16> to vector<4x128xbf16>
    %cst_59 = arith.constant dense<0.000000e+00> : vector<16x128xf32>
    %49 = tpu.matmul %46, %48, %cst_59 {dimension_numbers = #tpu.dot_dimension_numbers<[1], [0], [0], [1], [0, 0, 1, 1], [], []>} : vector<16x4xbf16>, vector<4x128xbf16>, vector<16x128xf32> -> vector<16x128xf32>
    %50 = arith.addf %44, %49 : vector<16x128xf32>
    %c0_60 = arith.constant 0 : index
    %c2_61 = arith.constant 2 : index
    %c2_62 = arith.constant 2 : index
    %c0_63 = arith.constant 0 : index
    %51 = vector.load %arg3[%c0_60, %c2_61, %c2_62, %c0_63] : memref<1x8x18x4xbf16, #tpu.memory_space<vmem>>, vector<1x1x16x4xbf16>
    %52 = vector.shape_cast %51 : vector<1x1x16x4xbf16> to vector<16x4xbf16>
    %c8 = arith.constant 8 : index
    %c0_64 = arith.constant 0 : index
    %c0_65 = arith.constant 0 : index
    %53 = vector.load %arg5[%c8, %c0_64, %c0_65] : memref<9x4x128xbf16, #tpu.memory_space<vmem>>, vector<1x4x128xbf16>
    %54 = vector.shape_cast %53 : vector<1x4x128xbf16> to vector<4x128xbf16>
    %cst_66 = arith.constant dense<0.000000e+00> : vector<16x128xf32>
    %55 = tpu.matmul %52, %54, %cst_66 {dimension_numbers = #tpu.dot_dimension_numbers<[1], [0], [0], [1], [0, 0, 1, 1], [], []>} : vector<16x4xbf16>, vector<4x128xbf16>, vector<16x128xf32> -> vector<16x128xf32>
    %56 = arith.addf %50, %55 : vector<16x128xf32>
    %57 = vector.broadcast %0 : vector<1x128xf32> to vector<16x128xf32>
    %58 = arith.mulf %56, %57 : vector<16x128xf32>
    %59 = vector.broadcast %1 : vector<1x128xf32> to vector<16x128xf32>
    %60 = arith.addf %58, %59 : vector<16x128xf32>
    %61 = arith.negf %60 : vector<16x128xf32>
    %62 = math.exp %61 : vector<16x128xf32>
    %cst_67 = arith.constant 1.000000e+00 : f32
    %63 = vector.broadcast %cst_67 : f32 to vector<16x128xf32>
    %64 = arith.addf %63, %62 : vector<16x128xf32>
    %65 = arith.divf %63, %64 : vector<16x128xf32>
    %66 = arith.mulf %60, %65 : vector<16x128xf32>
    %c0_68 = arith.constant 0 : index
    %c0_69 = arith.constant 0 : index
    %c0_70 = arith.constant 0 : index
    %c0_71 = arith.constant 0 : index
    %67 = vector.load %arg8[%c0_68, %c0_69, %c0_70, %c0_71] : memref<1x8x16x128xf32, #tpu.memory_space<vmem>>, vector<1x1x16x128xf32>
    %68 = vector.shape_cast %67 : vector<1x1x16x128xf32> to vector<16x128xf32>
    %69 = vector.shape_cast %66 : vector<16x128xf32> to vector<1x1x16x128xf32>
    tpu.vector_store %arg8[%c0_68, %c0_69, %c0_70, %c0_71], %69 {strides = array<i32>} : memref<1x8x16x128xf32, #tpu.memory_space<vmem>>, vector<1x1x16x128xf32>,
    %cst_72 = arith.constant 0.000000e+00 : f32
    %70 = vector.broadcast %cst_72 : f32 to vector<16x128xf32>
    %c0_73 = arith.constant 0 : index
    %c1_74 = arith.constant 1 : index
    %c0_75 = arith.constant 0 : index
    %c0_76 = arith.constant 0 : index
    %71 = vector.load %arg3[%c0_73, %c1_74, %c0_75, %c0_76] : memref<1x8x18x4xbf16, #tpu.memory_space<vmem>>, vector<1x1x16x4xbf16>
    %72 = vector.shape_cast %71 : vector<1x1x16x4xbf16> to vector<16x4xbf16>
    %c0_77 = arith.constant 0 : index
    %c0_78 = arith.constant 0 : index
    %c0_79 = arith.constant 0 : index
    %73 = vector.load %arg5[%c0_77, %c0_78, %c0_79] : memref<9x4x128xbf16, #tpu.memory_space<vmem>>, vector<1x4x128xbf16>
    %74 = vector.shape_cast %73 : vector<1x4x128xbf16> to vector<4x128xbf16>
    %cst_80 = arith.constant dense<0.000000e+00> : vector<16x128xf32>
    %75 = tpu.matmul %72, %74, %cst_80 {dimension_numbers = #tpu.dot_dimension_numbers<[1], [0], [0], [1], [0, 0, 1, 1], [], []>} : vector<16x4xbf16>, vector<4x128xbf16>, vector<16x128xf32> -> vector<16x128xf32>
    %76 = arith.addf %70, %75 : vector<16x128xf32>
    %c0_81 = arith.constant 0 : index
    %c1_82 = arith.constant 1 : index
    %c1_83 = arith.constant 1 : index
    %c0_84 = arith.constant 0 : index
    %77 = vector.load %arg3[%c0_81, %c1_82, %c1_83, %c0_84] : memref<1x8x18x4xbf16, #tpu.memory_space<vmem>>, vector<1x1x16x4xbf16>
    %78 = vector.shape_cast %77 : vector<1x1x16x4xbf16> to vector<16x4xbf16>
    %c1_85 = arith.constant 1 : index
    %c0_86 = arith.constant 0 : index
    %c0_87 = arith.constant 0 : index
    %79 = vector.load %arg5[%c1_85, %c0_86, %c0_87] : memref<9x4x128xbf16, #tpu.memory_space<vmem>>, vector<1x4x128xbf16>
    %80 = vector.shape_cast %79 : vector<1x4x128xbf16> to vector<4x128xbf16>
    %cst_88 = arith.constant dense<0.000000e+00> : vector<16x128xf32>
    %81 = tpu.matmul %78, %80, %cst_88 {dimension_numbers = #tpu.dot_dimension_numbers<[1], [0], [0], [1], [0, 0, 1, 1], [], []>} : vector<16x4xbf16>, vector<4x128xbf16>, vector<16x128xf32> -> vector<16x128xf32>
    %82 = arith.addf %76, %81 : vector<16x128xf32>
    %c0_89 = arith.constant 0 : index
    %c1_90 = arith.constant 1 : index
    %c2_91 = arith.constant 2 : index
    %c0_92 = arith.constant 0 : index
    %83 = vector.load %arg3[%c0_89, %c1_90, %c2_91, %c0_92] : memref<1x8x18x4xbf16, #tpu.memory_space<vmem>>, vector<1x1x16x4xbf16>
    %84 = vector.shape_cast %83 : vector<1x1x16x4xbf16> to vector<16x4xbf16>
    %c2_93 = arith.constant 2 : index
    %c0_94 = arith.constant 0 : index
    %c0_95 = arith.constant 0 : index
    %85 = vector.load %arg5[%c2_93, %c0_94, %c0_95] : memref<9x4x128xbf16, #tpu.memory_space<vmem>>, vector<1x4x128xbf16>
    %86 = vector.shape_cast %85 : vector<1x4x128xbf16> to vector<4x128xbf16>
    %cst_96 = arith.constant dense<0.000000e+00> : vector<16x128xf32>
    %87 = tpu.matmul %84, %86, %cst_96 {dimension_numbers = #tpu.dot_dimension_numbers<[1], [0], [0], [1], [0, 0, 1, 1], [], []>} : vector<16x4xbf16>, vector<4x128xbf16>, vector<16x128xf32> -> vector<16x128xf32>
    %88 = arith.addf %82, %87 : vector<16x128xf32>
    %c0_97 = arith.constant 0 : index
    %c2_98 = arith.constant 2 : index
    %c0_99 = arith.constant 0 : index
    %c0_100 = arith.constant 0 : index
    %89 = vector.load %arg3[%c0_97, %c2_98, %c0_99, %c0_100] : memref<1x8x18x4xbf16, #tpu.memory_space<vmem>>, vector<1x1x16x4xbf16>
    %90 = vector.shape_cast %89 : vector<1x1x16x4xbf16> to vector<16x4xbf16>
    %c3_101 = arith.constant 3 : index
    %c0_102 = arith.constant 0 : index
    %c0_103 = arith.constant 0 : index
    %91 = vector.load %arg5[%c3_101, %c0_102, %c0_103] : memref<9x4x128xbf16, #tpu.memory_space<vmem>>, vector<1x4x128xbf16>
    %92 = vector.shape_cast %91 : vector<1x4x128xbf16> to vector<4x128xbf16>
    %cst_104 = arith.constant dense<0.000000e+00> : vector<16x128xf32>
    %93 = tpu.matmul %90, %92, %cst_104 {dimension_numbers = #tpu.dot_dimension_numbers<[1], [0], [0], [1], [0, 0, 1, 1], [], []>} : vector<16x4xbf16>, vector<4x128xbf16>, vector<16x128xf32> -> vector<16x128xf32>
    %94 = arith.addf %88, %93 : vector<16x128xf32>
    %c0_105 = arith.constant 0 : index
    %c2_106 = arith.constant 2 : index
    %c1_107 = arith.constant 1 : index
    %c0_108 = arith.constant 0 : index
    %95 = vector.load %arg3[%c0_105, %c2_106, %c1_107, %c0_108] : memref<1x8x18x4xbf16, #tpu.memory_space<vmem>>, vector<1x1x16x4xbf16>
    %96 = vector.shape_cast %95 : vector<1x1x16x4xbf16> to vector<16x4xbf16>
    %c4_109 = arith.constant 4 : index
    %c0_110 = arith.constant 0 : index
    %c0_111 = arith.constant 0 : index
    %97 = vector.load %arg5[%c4_109, %c0_110, %c0_111] : memref<9x4x128xbf16, #tpu.memory_space<vmem>>, vector<1x4x128xbf16>
    %98 = vector.shape_cast %97 : vector<1x4x128xbf16> to vector<4x128xbf16>
    %cst_112 = arith.constant dense<0.000000e+00> : vector<16x128xf32>
    %99 = tpu.matmul %96, %98, %cst_112 {dimension_numbers = #tpu.dot_dimension_numbers<[1], [0], [0], [1], [0, 0, 1, 1], [], []>} : vector<16x4xbf16>, vector<4x128xbf16>, vector<16x128xf32> -> vector<16x128xf32>
    %100 = arith.addf %94, %99 : vector<16x128xf32>
    %c0_113 = arith.constant 0 : index
    %c2_114 = arith.constant 2 : index
    %c2_115 = arith.constant 2 : index
    %c0_116 = arith.constant 0 : index
    %101 = vector.load %arg3[%c0_113, %c2_114, %c2_115, %c0_116] : memref<1x8x18x4xbf16, #tpu.memory_space<vmem>>, vector<1x1x16x4xbf16>
    %102 = vector.shape_cast %101 : vector<1x1x16x4xbf16> to vector<16x4xbf16>
    %c5_117 = arith.constant 5 : index
    %c0_118 = arith.constant 0 : index
    %c0_119 = arith.constant 0 : index
    %103 = vector.load %arg5[%c5_117, %c0_118, %c0_119] : memref<9x4x128xbf16, #tpu.memory_space<vmem>>, vector<1x4x128xbf16>
    %104 = vector.shape_cast %103 : vector<1x4x128xbf16> to vector<4x128xbf16>
    %cst_120 = arith.constant dense<0.000000e+00> : vector<16x128xf32>
    %105 = tpu.matmul %102, %104, %cst_120 {dimension_numbers = #tpu.dot_dimension_numbers<[1], [0], [0], [1], [0, 0, 1, 1], [], []>} : vector<16x4xbf16>, vector<4x128xbf16>, vector<16x128xf32> -> vector<16x128xf32>
    %106 = arith.addf %100, %105 : vector<16x128xf32>
    %c0_121 = arith.constant 0 : index
    %c3_122 = arith.constant 3 : index
    %c0_123 = arith.constant 0 : index
    %c0_124 = arith.constant 0 : index
    %107 = vector.load %arg3[%c0_121, %c3_122, %c0_123, %c0_124] : memref<1x8x18x4xbf16, #tpu.memory_space<vmem>>, vector<1x1x16x4xbf16>
    %108 = vector.shape_cast %107 : vector<1x1x16x4xbf16> to vector<16x4xbf16>
    %c6_125 = arith.constant 6 : index
    %c0_126 = arith.constant 0 : index
    %c0_127 = arith.constant 0 : index
    %109 = vector.load %arg5[%c6_125, %c0_126, %c0_127] : memref<9x4x128xbf16, #tpu.memory_space<vmem>>, vector<1x4x128xbf16>
    %110 = vector.shape_cast %109 : vector<1x4x128xbf16> to vector<4x128xbf16>
    %cst_128 = arith.constant dense<0.000000e+00> : vector<16x128xf32>
    %111 = tpu.matmul %108, %110, %cst_128 {dimension_numbers = #tpu.dot_dimension_numbers<[1], [0], [0], [1], [0, 0, 1, 1], [], []>} : vector<16x4xbf16>, vector<4x128xbf16>, vector<16x128xf32> -> vector<16x128xf32>
    %112 = arith.addf %106, %111 : vector<16x128xf32>
    %c0_129 = arith.constant 0 : index
    %c3_130 = arith.constant 3 : index
    %c1_131 = arith.constant 1 : index
    %c0_132 = arith.constant 0 : index
    %113 = vector.load %arg3[%c0_129, %c3_130, %c1_131, %c0_132] : memref<1x8x18x4xbf16, #tpu.memory_space<vmem>>, vector<1x1x16x4xbf16>
    %114 = vector.shape_cast %113 : vector<1x1x16x4xbf16> to vector<16x4xbf16>
    %c7_133 = arith.constant 7 : index
    %c0_134 = arith.constant 0 : index
    %c0_135 = arith.constant 0 : index
    %115 = vector.load %arg5[%c7_133, %c0_134, %c0_135] : memref<9x4x128xbf16, #tpu.memory_space<vmem>>, vector<1x4x128xbf16>
    %116 = vector.shape_cast %115 : vector<1x4x128xbf16> to vector<4x128xbf16>
    %cst_136 = arith.constant dense<0.000000e+00> : vector<16x128xf32>
    %117 = tpu.matmul %114, %116, %cst_136 {dimension_numbers = #tpu.dot_dimension_numbers<[1], [0], [0], [1], [0, 0, 1, 1], [], []>} : vector<16x4xbf16>, vector<4x128xbf16>, vector<16x128xf32> -> vector<16x128xf32>
    %118 = arith.addf %112, %117 : vector<16x128xf32>
    %c0_137 = arith.constant 0 : index
    %c3_138 = arith.constant 3 : index
    %c2_139 = arith.constant 2 : index
    %c0_140 = arith.constant 0 : index
    %119 = vector.load %arg3[%c0_137, %c3_138, %c2_139, %c0_140] : memref<1x8x18x4xbf16, #tpu.memory_space<vmem>>, vector<1x1x16x4xbf16>
    %120 = vector.shape_cast %119 : vector<1x1x16x4xbf16> to vector<16x4xbf16>
    %c8_141 = arith.constant 8 : index
    %c0_142 = arith.constant 0 : index
    %c0_143 = arith.constant 0 : index
    %121 = vector.load %arg5[%c8_141, %c0_142, %c0_143] : memref<9x4x128xbf16, #tpu.memory_space<vmem>>, vector<1x4x128xbf16>
    %122 = vector.shape_cast %121 : vector<1x4x128xbf16> to vector<4x128xbf16>
    %cst_144 = arith.constant dense<0.000000e+00> : vector<16x128xf32>
    %123 = tpu.matmul %120, %122, %cst_144 {dimension_numbers = #tpu.dot_dimension_numbers<[1], [0], [0], [1], [0, 0, 1, 1], [], []>} : vector<16x4xbf16>, vector<4x128xbf16>, vector<16x128xf32> -> vector<16x128xf32>
    %124 = arith.addf %118, %123 : vector<16x128xf32>
    %125 = vector.broadcast %0 : vector<1x128xf32> to vector<16x128xf32>
    %126 = arith.mulf %124, %125 : vector<16x128xf32>
    %127 = vector.broadcast %1 : vector<1x128xf32> to vector<16x128xf32>
    %128 = arith.addf %126, %127 : vector<16x128xf32>
    %129 = arith.negf %128 : vector<16x128xf32>
    %130 = math.exp %129 : vector<16x128xf32>
    %cst_145 = arith.constant 1.000000e+00 : f32
    %131 = vector.broadcast %cst_145 : f32 to vector<16x128xf32>
    %132 = arith.addf %131, %130 : vector<16x128xf32>
    %133 = arith.divf %131, %132 : vector<16x128xf32>
    %134 = arith.mulf %128, %133 : vector<16x128xf32>
    %c0_146 = arith.constant 0 : index
    %c1_147 = arith.constant 1 : index
    %c0_148 = arith.constant 0 : index
    %c0_149 = arith.constant 0 : index
    %135 = vector.load %arg8[%c0_146, %c1_147, %c0_148, %c0_149] : memref<1x8x16x128xf32, #tpu.memory_space<vmem>>, vector<1x1x16x128xf32>
    %136 = vector.shape_cast %135 : vector<1x1x16x128xf32> to vector<16x128xf32>
    %137 = vector.shape_cast %134 : vector<16x128xf32> to vector<1x1x16x128xf32>
    tpu.vector_store %arg8[%c0_146, %c1_147, %c0_148, %c0_149], %137 {strides = array<i32>} : memref<1x8x16x128xf32, #tpu.memory_space<vmem>>, vector<1x1x16x128xf32>,
    %cst_150 = arith.constant 0.000000e+00 : f32
    %138 = vector.broadcast %cst_150 : f32 to vector<16x128xf32>
    %c0_151 = arith.constant 0 : index
    %c2_152 = arith.constant 2 : index
    %c0_153 = arith.constant 0 : index
    %c0_154 = arith.constant 0 : index
    %139 = vector.load %arg3[%c0_151, %c2_152, %c0_153, %c0_154] : memref<1x8x18x4xbf16, #tpu.memory_space<vmem>>, vector<1x1x16x4xbf16>
    %140 = vector.shape_cast %139 : vector<1x1x16x4xbf16> to vector<16x4xbf16>
    %c0_155 = arith.constant 0 : index
    %c0_156 = arith.constant 0 : index
    %c0_157 = arith.constant 0 : index
    %141 = vector.load %arg5[%c0_155, %c0_156, %c0_157] : memref<9x4x128xbf16, #tpu.memory_space<vmem>>, vector<1x4x128xbf16>
    %142 = vector.shape_cast %141 : vector<1x4x128xbf16> to vector<4x128xbf16>
    %cst_158 = arith.constant dense<0.000000e+00> : vector<16x128xf32>
    %143 = tpu.matmul %140, %142, %cst_158 {dimension_numbers = #tpu.dot_dimension_numbers<[1], [0], [0], [1], [0, 0, 1, 1], [], []>} : vector<16x4xbf16>, vector<4x128xbf16>, vector<16x128xf32> -> vector<16x128xf32>
    %144 = arith.addf %138, %143 : vector<16x128xf32>
    %c0_159 = arith.constant 0 : index
    %c2_160 = arith.constant 2 : index
    %c1_161 = arith.constant 1 : index
    %c0_162 = arith.constant 0 : index
    %145 = vector.load %arg3[%c0_159, %c2_160, %c1_161, %c0_162] : memref<1x8x18x4xbf16, #tpu.memory_space<vmem>>, vector<1x1x16x4xbf16>
    %146 = vector.shape_cast %145 : vector<1x1x16x4xbf16> to vector<16x4xbf16>
    %c1_163 = arith.constant 1 : index
    %c0_164 = arith.constant 0 : index
    %c0_165 = arith.constant 0 : index
    %147 = vector.load %arg5[%c1_163, %c0_164, %c0_165] : memref<9x4x128xbf16, #tpu.memory_space<vmem>>, vector<1x4x128xbf16>
    %148 = vector.shape_cast %147 : vector<1x4x128xbf16> to vector<4x128xbf16>
    %cst_166 = arith.constant dense<0.000000e+00> : vector<16x128xf32>
    %149 = tpu.matmul %146, %148, %cst_166 {dimension_numbers = #tpu.dot_dimension_numbers<[1], [0], [0], [1], [0, 0, 1, 1], [], []>} : vector<16x4xbf16>, vector<4x128xbf16>, vector<16x128xf32> -> vector<16x128xf32>
    %150 = arith.addf %144, %149 : vector<16x128xf32>
    %c0_167 = arith.constant 0 : index
    %c2_168 = arith.constant 2 : index
    %c2_169 = arith.constant 2 : index
    %c0_170 = arith.constant 0 : index
    %151 = vector.load %arg3[%c0_167, %c2_168, %c2_169, %c0_170] : memref<1x8x18x4xbf16, #tpu.memory_space<vmem>>, vector<1x1x16x4xbf16>
    %152 = vector.shape_cast %151 : vector<1x1x16x4xbf16> to vector<16x4xbf16>
    %c2_171 = arith.constant 2 : index
    %c0_172 = arith.constant 0 : index
    %c0_173 = arith.constant 0 : index
    %153 = vector.load %arg5[%c2_171, %c0_172, %c0_173] : memref<9x4x128xbf16, #tpu.memory_space<vmem>>, vector<1x4x128xbf16>
    %154 = vector.shape_cast %153 : vector<1x4x128xbf16> to vector<4x128xbf16>
    %cst_174 = arith.constant dense<0.000000e+00> : vector<16x128xf32>
    %155 = tpu.matmul %152, %154, %cst_174 {dimension_numbers = #tpu.dot_dimension_numbers<[1], [0], [0], [1], [0, 0, 1, 1], [], []>} : vector<16x4xbf16>, vector<4x128xbf16>, vector<16x128xf32> -> vector<16x128xf32>
    %156 = arith.addf %150, %155 : vector<16x128xf32>
    %c0_175 = arith.constant 0 : index
    %c3_176 = arith.constant 3 : index
    %c0_177 = arith.constant 0 : index
    %c0_178 = arith.constant 0 : index
    %157 = vector.load %arg3[%c0_175, %c3_176, %c0_177, %c0_178] : memref<1x8x18x4xbf16, #tpu.memory_space<vmem>>, vector<1x1x16x4xbf16>
    %158 = vector.shape_cast %157 : vector<1x1x16x4xbf16> to vector<16x4xbf16>
    %c3_179 = arith.constant 3 : index
    %c0_180 = arith.constant 0 : index
    %c0_181 = arith.constant 0 : index
    %159 = vector.load %arg5[%c3_179, %c0_180, %c0_181] : memref<9x4x128xbf16, #tpu.memory_space<vmem>>, vector<1x4x128xbf16>
    %160 = vector.shape_cast %159 : vector<1x4x128xbf16> to vector<4x128xbf16>
    %cst_182 = arith.constant dense<0.000000e+00> : vector<16x128xf32>
    %161 = tpu.matmul %158, %160, %cst_182 {dimension_numbers = #tpu.dot_dimension_numbers<[1], [0], [0], [1], [0, 0, 1, 1], [], []>} : vector<16x4xbf16>, vector<4x128xbf16>, vector<16x128xf32> -> vector<16x128xf32>
    %162 = arith.addf %156, %161 : vector<16x128xf32>
    %c0_183 = arith.constant 0 : index
    %c3_184 = arith.constant 3 : index
    %c1_185 = arith.constant 1 : index
    %c0_186 = arith.constant 0 : index
    %163 = vector.load %arg3[%c0_183, %c3_184, %c1_185, %c0_186] : memref<1x8x18x4xbf16, #tpu.memory_space<vmem>>, vector<1x1x16x4xbf16>
    %164 = vector.shape_cast %163 : vector<1x1x16x4xbf16> to vector<16x4xbf16>
    %c4_187 = arith.constant 4 : index
    %c0_188 = arith.constant 0 : index
    %c0_189 = arith.constant 0 : index
    %165 = vector.load %arg5[%c4_187, %c0_188, %c0_189] : memref<9x4x128xbf16, #tpu.memory_space<vmem>>, vector<1x4x128xbf16>
    %166 = vector.shape_cast %165 : vector<1x4x128xbf16> to vector<4x128xbf16>
    %cst_190 = arith.constant dense<0.000000e+00> : vector<16x128xf32>
    %167 = tpu.matmul %164, %166, %cst_190 {dimension_numbers = #tpu.dot_dimension_numbers<[1], [0], [0], [1], [0, 0, 1, 1], [], []>} : vector<16x4xbf16>, vector<4x128xbf16>, vector<16x128xf32> -> vector<16x128xf32>
    %168 = arith.addf %162, %167 : vector<16x128xf32>
    %c0_191 = arith.constant 0 : index
    %c3_192 = arith.constant 3 : index
    %c2_193 = arith.constant 2 : index
    %c0_194 = arith.constant 0 : index
    %169 = vector.load %arg3[%c0_191, %c3_192, %c2_193, %c0_194] : memref<1x8x18x4xbf16, #tpu.memory_space<vmem>>, vector<1x1x16x4xbf16>
    %170 = vector.shape_cast %169 : vector<1x1x16x4xbf16> to vector<16x4xbf16>
    %c5_195 = arith.constant 5 : index
    %c0_196 = arith.constant 0 : index
    %c0_197 = arith.constant 0 : index
    %171 = vector.load %arg5[%c5_195, %c0_196, %c0_197] : memref<9x4x128xbf16, #tpu.memory_space<vmem>>, vector<1x4x128xbf16>
    %172 = vector.shape_cast %171 : vector<1x4x128xbf16> to vector<4x128xbf16>
    %cst_198 = arith.constant dense<0.000000e+00> : vector<16x128xf32>
    %173 = tpu.matmul %170, %172, %cst_198 {dimension_numbers = #tpu.dot_dimension_numbers<[1], [0], [0], [1], [0, 0, 1, 1], [], []>} : vector<16x4xbf16>, vector<4x128xbf16>, vector<16x128xf32> -> vector<16x128xf32>
    %174 = arith.addf %168, %173 : vector<16x128xf32>
    %c0_199 = arith.constant 0 : index
    %c4_200 = arith.constant 4 : index
    %c0_201 = arith.constant 0 : index
    %c0_202 = arith.constant 0 : index
    %175 = vector.load %arg3[%c0_199, %c4_200, %c0_201, %c0_202] : memref<1x8x18x4xbf16, #tpu.memory_space<vmem>>, vector<1x1x16x4xbf16>
    %176 = vector.shape_cast %175 : vector<1x1x16x4xbf16> to vector<16x4xbf16>
    %c6_203 = arith.constant 6 : index
    %c0_204 = arith.constant 0 : index
    %c0_205 = arith.constant 0 : index
    %177 = vector.load %arg5[%c6_203, %c0_204, %c0_205] : memref<9x4x128xbf16, #tpu.memory_space<vmem>>, vector<1x4x128xbf16>
    %178 = vector.shape_cast %177 : vector<1x4x128xbf16> to vector<4x128xbf16>
    %cst_206 = arith.constant dense<0.000000e+00> : vector<16x128xf32>
    %179 = tpu.matmul %176, %178, %cst_206 {dimension_numbers = #tpu.dot_dimension_numbers<[1], [0], [0], [1], [0, 0, 1, 1], [], []>} : vector<16x4xbf16>, vector<4x128xbf16>, vector<16x128xf32> -> vector<16x128xf32>
    %180 = arith.addf %174, %179 : vector<16x128xf32>
    %c0_207 = arith.constant 0 : index
    %c4_208 = arith.constant 4 : index
    %c1_209 = arith.constant 1 : index
    %c0_210 = arith.constant 0 : index
    %181 = vector.load %arg3[%c0_207, %c4_208, %c1_209, %c0_210] : memref<1x8x18x4xbf16, #tpu.memory_space<vmem>>, vector<1x1x16x4xbf16>
    %182 = vector.shape_cast %181 : vector<1x1x16x4xbf16> to vector<16x4xbf16>
    %c7_211 = arith.constant 7 : index
    %c0_212 = arith.constant 0 : index
    %c0_213 = arith.constant 0 : index
    %183 = vector.load %arg5[%c7_211, %c0_212, %c0_213] : memref<9x4x128xbf16, #tpu.memory_space<vmem>>, vector<1x4x128xbf16>
    %184 = vector.shape_cast %183 : vector<1x4x128xbf16> to vector<4x128xbf16>
    %cst_214 = arith.constant dense<0.000000e+00> : vector<16x128xf32>
    %185 = tpu.matmul %182, %184, %cst_214 {dimension_numbers = #tpu.dot_dimension_numbers<[1], [0], [0], [1], [0, 0, 1, 1], [], []>} : vector<16x4xbf16>, vector<4x128xbf16>, vector<16x128xf32> -> vector<16x128xf32>
    %186 = arith.addf %180, %185 : vector<16x128xf32>
    %c0_215 = arith.constant 0 : index
    %c4_216 = arith.constant 4 : index
    %c2_217 = arith.constant 2 : index
    %c0_218 = arith.constant 0 : index
    %187 = vector.load %arg3[%c0_215, %c4_216, %c2_217, %c0_218] : memref<1x8x18x4xbf16, #tpu.memory_space<vmem>>, vector<1x1x16x4xbf16>
    %188 = vector.shape_cast %187 : vector<1x1x16x4xbf16> to vector<16x4xbf16>
    %c8_219 = arith.constant 8 : index
    %c0_220 = arith.constant 0 : index
    %c0_221 = arith.constant 0 : index
    %189 = vector.load %arg5[%c8_219, %c0_220, %c0_221] : memref<9x4x128xbf16, #tpu.memory_space<vmem>>, vector<1x4x128xbf16>
    %190 = vector.shape_cast %189 : vector<1x4x128xbf16> to vector<4x128xbf16>
    %cst_222 = arith.constant dense<0.000000e+00> : vector<16x128xf32>
    %191 = tpu.matmul %188, %190, %cst_222 {dimension_numbers = #tpu.dot_dimension_numbers<[1], [0], [0], [1], [0, 0, 1, 1], [], []>} : vector<16x4xbf16>, vector<4x128xbf16>, vector<16x128xf32> -> vector<16x128xf32>
    %192 = arith.addf %186, %191 : vector<16x128xf32>
    %193 = vector.broadcast %0 : vector<1x128xf32> to vector<16x128xf32>
    %194 = arith.mulf %192, %193 : vector<16x128xf32>
    %195 = vector.broadcast %1 : vector<1x128xf32> to vector<16x128xf32>
    %196 = arith.addf %194, %195 : vector<16x128xf32>
    %197 = arith.negf %196 : vector<16x128xf32>
    %198 = math.exp %197 : vector<16x128xf32>
    %cst_223 = arith.constant 1.000000e+00 : f32
    %199 = vector.broadcast %cst_223 : f32 to vector<16x128xf32>
    %200 = arith.addf %199, %198 : vector<16x128xf32>
    %201 = arith.divf %199, %200 : vector<16x128xf32>
    %202 = arith.mulf %196, %201 : vector<16x128xf32>
    %c0_224 = arith.constant 0 : index
    %c2_225 = arith.constant 2 : index
    %c0_226 = arith.constant 0 : index
    %c0_227 = arith.constant 0 : index
    %203 = vector.load %arg8[%c0_224, %c2_225, %c0_226, %c0_227] : memref<1x8x16x128xf32, #tpu.memory_space<vmem>>, vector<1x1x16x128xf32>
    %204 = vector.shape_cast %203 : vector<1x1x16x128xf32> to vector<16x128xf32>
    %205 = vector.shape_cast %202 : vector<16x128xf32> to vector<1x1x16x128xf32>
    tpu.vector_store %arg8[%c0_224, %c2_225, %c0_226, %c0_227], %205 {strides = array<i32>} : memref<1x8x16x128xf32, #tpu.memory_space<vmem>>, vector<1x1x16x128xf32>,
    %cst_228 = arith.constant 0.000000e+00 : f32
    %206 = vector.broadcast %cst_228 : f32 to vector<16x128xf32>
    %c0_229 = arith.constant 0 : index
    %c3_230 = arith.constant 3 : index
    %c0_231 = arith.constant 0 : index
    %c0_232 = arith.constant 0 : index
    %207 = vector.load %arg3[%c0_229, %c3_230, %c0_231, %c0_232] : memref<1x8x18x4xbf16, #tpu.memory_space<vmem>>, vector<1x1x16x4xbf16>
    %208 = vector.shape_cast %207 : vector<1x1x16x4xbf16> to vector<16x4xbf16>
    %c0_233 = arith.constant 0 : index
    %c0_234 = arith.constant 0 : index
    %c0_235 = arith.constant 0 : index
    %209 = vector.load %arg5[%c0_233, %c0_234, %c0_235] : memref<9x4x128xbf16, #tpu.memory_space<vmem>>, vector<1x4x128xbf16>
    %210 = vector.shape_cast %209 : vector<1x4x128xbf16> to vector<4x128xbf16>
    %cst_236 = arith.constant dense<0.000000e+00> : vector<16x128xf32>
    %211 = tpu.matmul %208, %210, %cst_236 {dimension_numbers = #tpu.dot_dimension_numbers<[1], [0], [0], [1], [0, 0, 1, 1], [], []>} : vector<16x4xbf16>, vector<4x128xbf16>, vector<16x128xf32> -> vector<16x128xf32>
    %212 = arith.addf %206, %211 : vector<16x128xf32>
    %c0_237 = arith.constant 0 : index
    %c3_238 = arith.constant 3 : index
    %c1_239 = arith.constant 1 : index
    %c0_240 = arith.constant 0 : index
    %213 = vector.load %arg3[%c0_237, %c3_238, %c1_239, %c0_240] : memref<1x8x18x4xbf16, #tpu.memory_space<vmem>>, vector<1x1x16x4xbf16>
    %214 = vector.shape_cast %213 : vector<1x1x16x4xbf16> to vector<16x4xbf16>
    %c1_241 = arith.constant 1 : index
    %c0_242 = arith.constant 0 : index
    %c0_243 = arith.constant 0 : index
    %215 = vector.load %arg5[%c1_241, %c0_242, %c0_243] : memref<9x4x128xbf16, #tpu.memory_space<vmem>>, vector<1x4x128xbf16>
    %216 = vector.shape_cast %215 : vector<1x4x128xbf16> to vector<4x128xbf16>
    %cst_244 = arith.constant dense<0.000000e+00> : vector<16x128xf32>
    %217 = tpu.matmul %214, %216, %cst_244 {dimension_numbers = #tpu.dot_dimension_numbers<[1], [0], [0], [1], [0, 0, 1, 1], [], []>} : vector<16x4xbf16>, vector<4x128xbf16>, vector<16x128xf32> -> vector<16x128xf32>
    %218 = arith.addf %212, %217 : vector<16x128xf32>
    %c0_245 = arith.constant 0 : index
    %c3_246 = arith.constant 3 : index
    %c2_247 = arith.constant 2 : index
    %c0_248 = arith.constant 0 : index
    %219 = vector.load %arg3[%c0_245, %c3_246, %c2_247, %c0_248] : memref<1x8x18x4xbf16, #tpu.memory_space<vmem>>, vector<1x1x16x4xbf16>
    %220 = vector.shape_cast %219 : vector<1x1x16x4xbf16> to vector<16x4xbf16>
    %c2_249 = arith.constant 2 : index
    %c0_250 = arith.constant 0 : index
    %c0_251 = arith.constant 0 : index
    %221 = vector.load %arg5[%c2_249, %c0_250, %c0_251] : memref<9x4x128xbf16, #tpu.memory_space<vmem>>, vector<1x4x128xbf16>
    %222 = vector.shape_cast %221 : vector<1x4x128xbf16> to vector<4x128xbf16>
    %cst_252 = arith.constant dense<0.000000e+00> : vector<16x128xf32>
    %223 = tpu.matmul %220, %222, %cst_252 {dimension_numbers = #tpu.dot_dimension_numbers<[1], [0], [0], [1], [0, 0, 1, 1], [], []>} : vector<16x4xbf16>, vector<4x128xbf16>, vector<16x128xf32> -> vector<16x128xf32>
    %224 = arith.addf %218, %223 : vector<16x128xf32>
    %c0_253 = arith.constant 0 : index
    %c4_254 = arith.constant 4 : index
    %c0_255 = arith.constant 0 : index
    %c0_256 = arith.constant 0 : index
    %225 = vector.load %arg3[%c0_253, %c4_254, %c0_255, %c0_256] : memref<1x8x18x4xbf16, #tpu.memory_space<vmem>>, vector<1x1x16x4xbf16>
    %226 = vector.shape_cast %225 : vector<1x1x16x4xbf16> to vector<16x4xbf16>
    %c3_257 = arith.constant 3 : index
    %c0_258 = arith.constant 0 : index
    %c0_259 = arith.constant 0 : index
    %227 = vector.load %arg5[%c3_257, %c0_258, %c0_259] : memref<9x4x128xbf16, #tpu.memory_space<vmem>>, vector<1x4x128xbf16>
    %228 = vector.shape_cast %227 : vector<1x4x128xbf16> to vector<4x128xbf16>
    %cst_260 = arith.constant dense<0.000000e+00> : vector<16x128xf32>
    %229 = tpu.matmul %226, %228, %cst_260 {dimension_numbers = #tpu.dot_dimension_numbers<[1], [0], [0], [1], [0, 0, 1, 1], [], []>} : vector<16x4xbf16>, vector<4x128xbf16>, vector<16x128xf32> -> vector<16x128xf32>
    %230 = arith.addf %224, %229 : vector<16x128xf32>
    %c0_261 = arith.constant 0 : index
    %c4_262 = arith.constant 4 : index
    %c1_263 = arith.constant 1 : index
    %c0_264 = arith.constant 0 : index
    %231 = vector.load %arg3[%c0_261, %c4_262, %c1_263, %c0_264] : memref<1x8x18x4xbf16, #tpu.memory_space<vmem>>, vector<1x1x16x4xbf16>
    %232 = vector.shape_cast %231 : vector<1x1x16x4xbf16> to vector<16x4xbf16>
    %c4_265 = arith.constant 4 : index
    %c0_266 = arith.constant 0 : index
    %c0_267 = arith.constant 0 : index
    %233 = vector.load %arg5[%c4_265, %c0_266, %c0_267] : memref<9x4x128xbf16, #tpu.memory_space<vmem>>, vector<1x4x128xbf16>
    %234 = vector.shape_cast %233 : vector<1x4x128xbf16> to vector<4x128xbf16>
    %cst_268 = arith.constant dense<0.000000e+00> : vector<16x128xf32>
    %235 = tpu.matmul %232, %234, %cst_268 {dimension_numbers = #tpu.dot_dimension_numbers<[1], [0], [0], [1], [0, 0, 1, 1], [], []>} : vector<16x4xbf16>, vector<4x128xbf16>, vector<16x128xf32> -> vector<16x128xf32>
    %236 = arith.addf %230, %235 : vector<16x128xf32>
    %c0_269 = arith.constant 0 : index
    %c4_270 = arith.constant 4 : index
    %c2_271 = arith.constant 2 : index
    %c0_272 = arith.constant 0 : index
    %237 = vector.load %arg3[%c0_269, %c4_270, %c2_271, %c0_272] : memref<1x8x18x4xbf16, #tpu.memory_space<vmem>>, vector<1x1x16x4xbf16>
    %238 = vector.shape_cast %237 : vector<1x1x16x4xbf16> to vector<16x4xbf16>
    %c5_273 = arith.constant 5 : index
    %c0_274 = arith.constant 0 : index
    %c0_275 = arith.constant 0 : index
    %239 = vector.load %arg5[%c5_273, %c0_274, %c0_275] : memref<9x4x128xbf16, #tpu.memory_space<vmem>>, vector<1x4x128xbf16>
    %240 = vector.shape_cast %239 : vector<1x4x128xbf16> to vector<4x128xbf16>
    %cst_276 = arith.constant dense<0.000000e+00> : vector<16x128xf32>
    %241 = tpu.matmul %238, %240, %cst_276 {dimension_numbers = #tpu.dot_dimension_numbers<[1], [0], [0], [1], [0, 0, 1, 1], [], []>} : vector<16x4xbf16>, vector<4x128xbf16>, vector<16x128xf32> -> vector<16x128xf32>
    %242 = arith.addf %236, %241 : vector<16x128xf32>
    %c0_277 = arith.constant 0 : index
    %c5_278 = arith.constant 5 : index
    %c0_279 = arith.constant 0 : index
    %c0_280 = arith.constant 0 : index
    %243 = vector.load %arg3[%c0_277, %c5_278, %c0_279, %c0_280] : memref<1x8x18x4xbf16, #tpu.memory_space<vmem>>, vector<1x1x16x4xbf16>
    %244 = vector.shape_cast %243 : vector<1x1x16x4xbf16> to vector<16x4xbf16>
    %c6_281 = arith.constant 6 : index
    %c0_282 = arith.constant 0 : index
    %c0_283 = arith.constant 0 : index
    %245 = vector.load %arg5[%c6_281, %c0_282, %c0_283] : memref<9x4x128xbf16, #tpu.memory_space<vmem>>, vector<1x4x128xbf16>
    %246 = vector.shape_cast %245 : vector<1x4x128xbf16> to vector<4x128xbf16>
    %cst_284 = arith.constant dense<0.000000e+00> : vector<16x128xf32>
    %247 = tpu.matmul %244, %246, %cst_284 {dimension_numbers = #tpu.dot_dimension_numbers<[1], [0], [0], [1], [0, 0, 1, 1], [], []>} : vector<16x4xbf16>, vector<4x128xbf16>, vector<16x128xf32> -> vector<16x128xf32>
    %248 = arith.addf %242, %247 : vector<16x128xf32>
    %c0_285 = arith.constant 0 : index
    %c5_286 = arith.constant 5 : index
    %c1_287 = arith.constant 1 : index
    %c0_288 = arith.constant 0 : index
    %249 = vector.load %arg3[%c0_285, %c5_286, %c1_287, %c0_288] : memref<1x8x18x4xbf16, #tpu.memory_space<vmem>>, vector<1x1x16x4xbf16>
    %250 = vector.shape_cast %249 : vector<1x1x16x4xbf16> to vector<16x4xbf16>
    %c7_289 = arith.constant 7 : index
    %c0_290 = arith.constant 0 : index
    %c0_291 = arith.constant 0 : index
    %251 = vector.load %arg5[%c7_289, %c0_290, %c0_291] : memref<9x4x128xbf16, #tpu.memory_space<vmem>>, vector<1x4x128xbf16>
    %252 = vector.shape_cast %251 : vector<1x4x128xbf16> to vector<4x128xbf16>
    %cst_292 = arith.constant dense<0.000000e+00> : vector<16x128xf32>
    %253 = tpu.matmul %250, %252, %cst_292 {dimension_numbers = #tpu.dot_dimension_numbers<[1], [0], [0], [1], [0, 0, 1, 1], [], []>} : vector<16x4xbf16>, vector<4x128xbf16>, vector<16x128xf32> -> vector<16x128xf32>
    %254 = arith.addf %248, %253 : vector<16x128xf32>
    %c0_293 = arith.constant 0 : index
    %c5_294 = arith.constant 5 : index
    %c2_295 = arith.constant 2 : index
    %c0_296 = arith.constant 0 : index
    %255 = vector.load %arg3[%c0_293, %c5_294, %c2_295, %c0_296] : memref<1x8x18x4xbf16, #tpu.memory_space<vmem>>, vector<1x1x16x4xbf16>
    %256 = vector.shape_cast %255 : vector<1x1x16x4xbf16> to vector<16x4xbf16>
    %c8_297 = arith.constant 8 : index
    %c0_298 = arith.constant 0 : index
    %c0_299 = arith.constant 0 : index
    %257 = vector.load %arg5[%c8_297, %c0_298, %c0_299] : memref<9x4x128xbf16, #tpu.memory_space<vmem>>, vector<1x4x128xbf16>
    %258 = vector.shape_cast %257 : vector<1x4x128xbf16> to vector<4x128xbf16>
    %cst_300 = arith.constant dense<0.000000e+00> : vector<16x128xf32>
    %259 = tpu.matmul %256, %258, %cst_300 {dimension_numbers = #tpu.dot_dimension_numbers<[1], [0], [0], [1], [0, 0, 1, 1], [], []>} : vector<16x4xbf16>, vector<4x128xbf16>, vector<16x128xf32> -> vector<16x128xf32>
    %260 = arith.addf %254, %259 : vector<16x128xf32>
    %261 = vector.broadcast %0 : vector<1x128xf32> to vector<16x128xf32>
    %262 = arith.mulf %260, %261 : vector<16x128xf32>
    %263 = vector.broadcast %1 : vector<1x128xf32> to vector<16x128xf32>
    %264 = arith.addf %262, %263 : vector<16x128xf32>
    %265 = arith.negf %264 : vector<16x128xf32>
    %266 = math.exp %265 : vector<16x128xf32>
    %cst_301 = arith.constant 1.000000e+00 : f32
    %267 = vector.broadcast %cst_301 : f32 to vector<16x128xf32>
    %268 = arith.addf %267, %266 : vector<16x128xf32>
    %269 = arith.divf %267, %268 : vector<16x128xf32>
    %270 = arith.mulf %264, %269 : vector<16x128xf32>
    %c0_302 = arith.constant 0 : index
    %c3_303 = arith.constant 3 : index
    %c0_304 = arith.constant 0 : index
    %c0_305 = arith.constant 0 : index
    %271 = vector.load %arg8[%c0_302, %c3_303, %c0_304, %c0_305] : memref<1x8x16x128xf32, #tpu.memory_space<vmem>>, vector<1x1x16x128xf32>
    %272 = vector.shape_cast %271 : vector<1x1x16x128xf32> to vector<16x128xf32>
    %273 = vector.shape_cast %270 : vector<16x128xf32> to vector<1x1x16x128xf32>
    tpu.vector_store %arg8[%c0_302, %c3_303, %c0_304, %c0_305], %273 {strides = array<i32>} : memref<1x8x16x128xf32, #tpu.memory_space<vmem>>, vector<1x1x16x128xf32>,
    %cst_306 = arith.constant 0.000000e+00 : f32
    %274 = vector.broadcast %cst_306 : f32 to vector<16x128xf32>
    %c0_307 = arith.constant 0 : index
    %c4_308 = arith.constant 4 : index
    %c0_309 = arith.constant 0 : index
    %c0_310 = arith.constant 0 : index
    %275 = vector.load %arg3[%c0_307, %c4_308, %c0_309, %c0_310] : memref<1x8x18x4xbf16, #tpu.memory_space<vmem>>, vector<1x1x16x4xbf16>
    %276 = vector.shape_cast %275 : vector<1x1x16x4xbf16> to vector<16x4xbf16>
    %c0_311 = arith.constant 0 : index
    %c0_312 = arith.constant 0 : index
    %c0_313 = arith.constant 0 : index
    %277 = vector.load %arg5[%c0_311, %c0_312, %c0_313] : memref<9x4x128xbf16, #tpu.memory_space<vmem>>, vector<1x4x128xbf16>
    %278 = vector.shape_cast %277 : vector<1x4x128xbf16> to vector<4x128xbf16>
    %cst_314 = arith.constant dense<0.000000e+00> : vector<16x128xf32>
    %279 = tpu.matmul %276, %278, %cst_314 {dimension_numbers = #tpu.dot_dimension_numbers<[1], [0], [0], [1], [0, 0, 1, 1], [], []>} : vector<16x4xbf16>, vector<4x128xbf16>, vector<16x128xf32> -> vector<16x128xf32>
    %280 = arith.addf %274, %279 : vector<16x128xf32>
    %c0_315 = arith.constant 0 : index
    %c4_316 = arith.constant 4 : index
    %c1_317 = arith.constant 1 : index
    %c0_318 = arith.constant 0 : index
    %281 = vector.load %arg3[%c0_315, %c4_316, %c1_317, %c0_318] : memref<1x8x18x4xbf16, #tpu.memory_space<vmem>>, vector<1x1x16x4xbf16>
    %282 = vector.shape_cast %281 : vector<1x1x16x4xbf16> to vector<16x4xbf16>
    %c1_319 = arith.constant 1 : index
    %c0_320 = arith.constant 0 : index
    %c0_321 = arith.constant 0 : index
    %283 = vector.load %arg5[%c1_319, %c0_320, %c0_321] : memref<9x4x128xbf16, #tpu.memory_space<vmem>>, vector<1x4x128xbf16>
    %284 = vector.shape_cast %283 : vector<1x4x128xbf16> to vector<4x128xbf16>
    %cst_322 = arith.constant dense<0.000000e+00> : vector<16x128xf32>
    %285 = tpu.matmul %282, %284, %cst_322 {dimension_numbers = #tpu.dot_dimension_numbers<[1], [0], [0], [1], [0, 0, 1, 1], [], []>} : vector<16x4xbf16>, vector<4x128xbf16>, vector<16x128xf32> -> vector<16x128xf32>
    %286 = arith.addf %280, %285 : vector<16x128xf32>
    %c0_323 = arith.constant 0 : index
    %c4_324 = arith.constant 4 : index
    %c2_325 = arith.constant 2 : index
    %c0_326 = arith.constant 0 : index
    %287 = vector.load %arg3[%c0_323, %c4_324, %c2_325, %c0_326] : memref<1x8x18x4xbf16, #tpu.memory_space<vmem>>, vector<1x1x16x4xbf16>
    %288 = vector.shape_cast %287 : vector<1x1x16x4xbf16> to vector<16x4xbf16>
    %c2_327 = arith.constant 2 : index
    %c0_328 = arith.constant 0 : index
    %c0_329 = arith.constant 0 : index
    %289 = vector.load %arg5[%c2_327, %c0_328, %c0_329] : memref<9x4x128xbf16, #tpu.memory_space<vmem>>, vector<1x4x128xbf16>
    %290 = vector.shape_cast %289 : vector<1x4x128xbf16> to vector<4x128xbf16>
    %cst_330 = arith.constant dense<0.000000e+00> : vector<16x128xf32>
    %291 = tpu.matmul %288, %290, %cst_330 {dimension_numbers = #tpu.dot_dimension_numbers<[1], [0], [0], [1], [0, 0, 1, 1], [], []>} : vector<16x4xbf16>, vector<4x128xbf16>, vector<16x128xf32> -> vector<16x128xf32>
    %292 = arith.addf %286, %291 : vector<16x128xf32>
    %c0_331 = arith.constant 0 : index
    %c5_332 = arith.constant 5 : index
    %c0_333 = arith.constant 0 : index
    %c0_334 = arith.constant 0 : index
    %293 = vector.load %arg3[%c0_331, %c5_332, %c0_333, %c0_334] : memref<1x8x18x4xbf16, #tpu.memory_space<vmem>>, vector<1x1x16x4xbf16>
    %294 = vector.shape_cast %293 : vector<1x1x16x4xbf16> to vector<16x4xbf16>
    %c3_335 = arith.constant 3 : index
    %c0_336 = arith.constant 0 : index
    %c0_337 = arith.constant 0 : index
    %295 = vector.load %arg5[%c3_335, %c0_336, %c0_337] : memref<9x4x128xbf16, #tpu.memory_space<vmem>>, vector<1x4x128xbf16>
    %296 = vector.shape_cast %295 : vector<1x4x128xbf16> to vector<4x128xbf16>
    %cst_338 = arith.constant dense<0.000000e+00> : vector<16x128xf32>
    %297 = tpu.matmul %294, %296, %cst_338 {dimension_numbers = #tpu.dot_dimension_numbers<[1], [0], [0], [1], [0, 0, 1, 1], [], []>} : vector<16x4xbf16>, vector<4x128xbf16>, vector<16x128xf32> -> vector<16x128xf32>
    %298 = arith.addf %292, %297 : vector<16x128xf32>
    %c0_339 = arith.constant 0 : index
    %c5_340 = arith.constant 5 : index
    %c1_341 = arith.constant 1 : index
    %c0_342 = arith.constant 0 : index
    %299 = vector.load %arg3[%c0_339, %c5_340, %c1_341, %c0_342] : memref<1x8x18x4xbf16, #tpu.memory_space<vmem>>, vector<1x1x16x4xbf16>
    %300 = vector.shape_cast %299 : vector<1x1x16x4xbf16> to vector<16x4xbf16>
    %c4_343 = arith.constant 4 : index
    %c0_344 = arith.constant 0 : index
    %c0_345 = arith.constant 0 : index
    %301 = vector.load %arg5[%c4_343, %c0_344, %c0_345] : memref<9x4x128xbf16, #tpu.memory_space<vmem>>, vector<1x4x128xbf16>
    %302 = vector.shape_cast %301 : vector<1x4x128xbf16> to vector<4x128xbf16>
    %cst_346 = arith.constant dense<0.000000e+00> : vector<16x128xf32>
    %303 = tpu.matmul %300, %302, %cst_346 {dimension_numbers = #tpu.dot_dimension_numbers<[1], [0], [0], [1], [0, 0, 1, 1], [], []>} : vector<16x4xbf16>, vector<4x128xbf16>, vector<16x128xf32> -> vector<16x128xf32>
    %304 = arith.addf %298, %303 : vector<16x128xf32>
    %c0_347 = arith.constant 0 : index
    %c5_348 = arith.constant 5 : index
    %c2_349 = arith.constant 2 : index
    %c0_350 = arith.constant 0 : index
    %305 = vector.load %arg3[%c0_347, %c5_348, %c2_349, %c0_350] : memref<1x8x18x4xbf16, #tpu.memory_space<vmem>>, vector<1x1x16x4xbf16>
    %306 = vector.shape_cast %305 : vector<1x1x16x4xbf16> to vector<16x4xbf16>
    %c5_351 = arith.constant 5 : index
    %c0_352 = arith.constant 0 : index
    %c0_353 = arith.constant 0 : index
    %307 = vector.load %arg5[%c5_351, %c0_352, %c0_353] : memref<9x4x128xbf16, #tpu.memory_space<vmem>>, vector<1x4x128xbf16>
    %308 = vector.shape_cast %307 : vector<1x4x128xbf16> to vector<4x128xbf16>
    %cst_354 = arith.constant dense<0.000000e+00> : vector<16x128xf32>
    %309 = tpu.matmul %306, %308, %cst_354 {dimension_numbers = #tpu.dot_dimension_numbers<[1], [0], [0], [1], [0, 0, 1, 1], [], []>} : vector<16x4xbf16>, vector<4x128xbf16>, vector<16x128xf32> -> vector<16x128xf32>
    %310 = arith.addf %304, %309 : vector<16x128xf32>
    %c0_355 = arith.constant 0 : index
    %c6_356 = arith.constant 6 : index
    %c0_357 = arith.constant 0 : index
    %c0_358 = arith.constant 0 : index
    %311 = vector.load %arg3[%c0_355, %c6_356, %c0_357, %c0_358] : memref<1x8x18x4xbf16, #tpu.memory_space<vmem>>, vector<1x1x16x4xbf16>
    %312 = vector.shape_cast %311 : vector<1x1x16x4xbf16> to vector<16x4xbf16>
    %c6_359 = arith.constant 6 : index
    %c0_360 = arith.constant 0 : index
    %c0_361 = arith.constant 0 : index
    %313 = vector.load %arg5[%c6_359, %c0_360, %c0_361] : memref<9x4x128xbf16, #tpu.memory_space<vmem>>, vector<1x4x128xbf16>
    %314 = vector.shape_cast %313 : vector<1x4x128xbf16> to vector<4x128xbf16>
    %cst_362 = arith.constant dense<0.000000e+00> : vector<16x128xf32>
    %315 = tpu.matmul %312, %314, %cst_362 {dimension_numbers = #tpu.dot_dimension_numbers<[1], [0], [0], [1], [0, 0, 1, 1], [], []>} : vector<16x4xbf16>, vector<4x128xbf16>, vector<16x128xf32> -> vector<16x128xf32>
    %316 = arith.addf %310, %315 : vector<16x128xf32>
    %c0_363 = arith.constant 0 : index
    %c6_364 = arith.constant 6 : index
    %c1_365 = arith.constant 1 : index
    %c0_366 = arith.constant 0 : index
    %317 = vector.load %arg3[%c0_363, %c6_364, %c1_365, %c0_366] : memref<1x8x18x4xbf16, #tpu.memory_space<vmem>>, vector<1x1x16x4xbf16>
    %318 = vector.shape_cast %317 : vector<1x1x16x4xbf16> to vector<16x4xbf16>
    %c7_367 = arith.constant 7 : index
    %c0_368 = arith.constant 0 : index
    %c0_369 = arith.constant 0 : index
    %319 = vector.load %arg5[%c7_367, %c0_368, %c0_369] : memref<9x4x128xbf16, #tpu.memory_space<vmem>>, vector<1x4x128xbf16>
    %320 = vector.shape_cast %319 : vector<1x4x128xbf16> to vector<4x128xbf16>
    %cst_370 = arith.constant dense<0.000000e+00> : vector<16x128xf32>
    %321 = tpu.matmul %318, %320, %cst_370 {dimension_numbers = #tpu.dot_dimension_numbers<[1], [0], [0], [1], [0, 0, 1, 1], [], []>} : vector<16x4xbf16>, vector<4x128xbf16>, vector<16x128xf32> -> vector<16x128xf32>
    %322 = arith.addf %316, %321 : vector<16x128xf32>
    %c0_371 = arith.constant 0 : index
    %c6_372 = arith.constant 6 : index
    %c2_373 = arith.constant 2 : index
    %c0_374 = arith.constant 0 : index
    %323 = vector.load %arg3[%c0_371, %c6_372, %c2_373, %c0_374] : memref<1x8x18x4xbf16, #tpu.memory_space<vmem>>, vector<1x1x16x4xbf16>
    %324 = vector.shape_cast %323 : vector<1x1x16x4xbf16> to vector<16x4xbf16>
    %c8_375 = arith.constant 8 : index
    %c0_376 = arith.constant 0 : index
    %c0_377 = arith.constant 0 : index
    %325 = vector.load %arg5[%c8_375, %c0_376, %c0_377] : memref<9x4x128xbf16, #tpu.memory_space<vmem>>, vector<1x4x128xbf16>
    %326 = vector.shape_cast %325 : vector<1x4x128xbf16> to vector<4x128xbf16>
    %cst_378 = arith.constant dense<0.000000e+00> : vector<16x128xf32>
    %327 = tpu.matmul %324, %326, %cst_378 {dimension_numbers = #tpu.dot_dimension_numbers<[1], [0], [0], [1], [0, 0, 1, 1], [], []>} : vector<16x4xbf16>, vector<4x128xbf16>, vector<16x128xf32> -> vector<16x128xf32>
    %328 = arith.addf %322, %327 : vector<16x128xf32>
    %329 = vector.broadcast %0 : vector<1x128xf32> to vector<16x128xf32>
    %330 = arith.mulf %328, %329 : vector<16x128xf32>
    %331 = vector.broadcast %1 : vector<1x128xf32> to vector<16x128xf32>
    %332 = arith.addf %330, %331 : vector<16x128xf32>
    %333 = arith.negf %332 : vector<16x128xf32>
    %334 = math.exp %333 : vector<16x128xf32>
    %cst_379 = arith.constant 1.000000e+00 : f32
    %335 = vector.broadcast %cst_379 : f32 to vector<16x128xf32>
    %336 = arith.addf %335, %334 : vector<16x128xf32>
    %337 = arith.divf %335, %336 : vector<16x128xf32>
    %338 = arith.mulf %332, %337 : vector<16x128xf32>
    %c0_380 = arith.constant 0 : index
    %c4_381 = arith.constant 4 : index
    %c0_382 = arith.constant 0 : index
    %c0_383 = arith.constant 0 : index
    %339 = vector.load %arg8[%c0_380, %c4_381, %c0_382, %c0_383] : memref<1x8x16x128xf32, #tpu.memory_space<vmem>>, vector<1x1x16x128xf32>
    %340 = vector.shape_cast %339 : vector<1x1x16x128xf32> to vector<16x128xf32>
    %341 = vector.shape_cast %338 : vector<16x128xf32> to vector<1x1x16x128xf32>
    tpu.vector_store %arg8[%c0_380, %c4_381, %c0_382, %c0_383], %341 {strides = array<i32>} : memref<1x8x16x128xf32, #tpu.memory_space<vmem>>, vector<1x1x16x128xf32>,
    %cst_384 = arith.constant 0.000000e+00 : f32
    %342 = vector.broadcast %cst_384 : f32 to vector<16x128xf32>
    %c0_385 = arith.constant 0 : index
    %c5_386 = arith.constant 5 : index
    %c0_387 = arith.constant 0 : index
    %c0_388 = arith.constant 0 : index
    %343 = vector.load %arg3[%c0_385, %c5_386, %c0_387, %c0_388] : memref<1x8x18x4xbf16, #tpu.memory_space<vmem>>, vector<1x1x16x4xbf16>
    %344 = vector.shape_cast %343 : vector<1x1x16x4xbf16> to vector<16x4xbf16>
    %c0_389 = arith.constant 0 : index
    %c0_390 = arith.constant 0 : index
    %c0_391 = arith.constant 0 : index
    %345 = vector.load %arg5[%c0_389, %c0_390, %c0_391] : memref<9x4x128xbf16, #tpu.memory_space<vmem>>, vector<1x4x128xbf16>
    %346 = vector.shape_cast %345 : vector<1x4x128xbf16> to vector<4x128xbf16>
    %cst_392 = arith.constant dense<0.000000e+00> : vector<16x128xf32>
    %347 = tpu.matmul %344, %346, %cst_392 {dimension_numbers = #tpu.dot_dimension_numbers<[1], [0], [0], [1], [0, 0, 1, 1], [], []>} : vector<16x4xbf16>, vector<4x128xbf16>, vector<16x128xf32> -> vector<16x128xf32>
    %348 = arith.addf %342, %347 : vector<16x128xf32>
    %c0_393 = arith.constant 0 : index
    %c5_394 = arith.constant 5 : index
    %c1_395 = arith.constant 1 : index
    %c0_396 = arith.constant 0 : index
    %349 = vector.load %arg3[%c0_393, %c5_394, %c1_395, %c0_396] : memref<1x8x18x4xbf16, #tpu.memory_space<vmem>>, vector<1x1x16x4xbf16>
    %350 = vector.shape_cast %349 : vector<1x1x16x4xbf16> to vector<16x4xbf16>
    %c1_397 = arith.constant 1 : index
    %c0_398 = arith.constant 0 : index
    %c0_399 = arith.constant 0 : index
    %351 = vector.load %arg5[%c1_397, %c0_398, %c0_399] : memref<9x4x128xbf16, #tpu.memory_space<vmem>>, vector<1x4x128xbf16>
    %352 = vector.shape_cast %351 : vector<1x4x128xbf16> to vector<4x128xbf16>
    %cst_400 = arith.constant dense<0.000000e+00> : vector<16x128xf32>
    %353 = tpu.matmul %350, %352, %cst_400 {dimension_numbers = #tpu.dot_dimension_numbers<[1], [0], [0], [1], [0, 0, 1, 1], [], []>} : vector<16x4xbf16>, vector<4x128xbf16>, vector<16x128xf32> -> vector<16x128xf32>
    %354 = arith.addf %348, %353 : vector<16x128xf32>
    %c0_401 = arith.constant 0 : index
    %c5_402 = arith.constant 5 : index
    %c2_403 = arith.constant 2 : index
    %c0_404 = arith.constant 0 : index
    %355 = vector.load %arg3[%c0_401, %c5_402, %c2_403, %c0_404] : memref<1x8x18x4xbf16, #tpu.memory_space<vmem>>, vector<1x1x16x4xbf16>
    %356 = vector.shape_cast %355 : vector<1x1x16x4xbf16> to vector<16x4xbf16>
    %c2_405 = arith.constant 2 : index
    %c0_406 = arith.constant 0 : index
    %c0_407 = arith.constant 0 : index
    %357 = vector.load %arg5[%c2_405, %c0_406, %c0_407] : memref<9x4x128xbf16, #tpu.memory_space<vmem>>, vector<1x4x128xbf16>
    %358 = vector.shape_cast %357 : vector<1x4x128xbf16> to vector<4x128xbf16>
    %cst_408 = arith.constant dense<0.000000e+00> : vector<16x128xf32>
    %359 = tpu.matmul %356, %358, %cst_408 {dimension_numbers = #tpu.dot_dimension_numbers<[1], [0], [0], [1], [0, 0, 1, 1], [], []>} : vector<16x4xbf16>, vector<4x128xbf16>, vector<16x128xf32> -> vector<16x128xf32>
    %360 = arith.addf %354, %359 : vector<16x128xf32>
    %c0_409 = arith.constant 0 : index
    %c6_410 = arith.constant 6 : index
    %c0_411 = arith.constant 0 : index
    %c0_412 = arith.constant 0 : index
    %361 = vector.load %arg3[%c0_409, %c6_410, %c0_411, %c0_412] : memref<1x8x18x4xbf16, #tpu.memory_space<vmem>>, vector<1x1x16x4xbf16>
    %362 = vector.shape_cast %361 : vector<1x1x16x4xbf16> to vector<16x4xbf16>
    %c3_413 = arith.constant 3 : index
    %c0_414 = arith.constant 0 : index
    %c0_415 = arith.constant 0 : index
    %363 = vector.load %arg5[%c3_413, %c0_414, %c0_415] : memref<9x4x128xbf16, #tpu.memory_space<vmem>>, vector<1x4x128xbf16>
    %364 = vector.shape_cast %363 : vector<1x4x128xbf16> to vector<4x128xbf16>
    %cst_416 = arith.constant dense<0.000000e+00> : vector<16x128xf32>
    %365 = tpu.matmul %362, %364, %cst_416 {dimension_numbers = #tpu.dot_dimension_numbers<[1], [0], [0], [1], [0, 0, 1, 1], [], []>} : vector<16x4xbf16>, vector<4x128xbf16>, vector<16x128xf32> -> vector<16x128xf32>
    %366 = arith.addf %360, %365 : vector<16x128xf32>
    %c0_417 = arith.constant 0 : index
    %c6_418 = arith.constant 6 : index
    %c1_419 = arith.constant 1 : index
    %c0_420 = arith.constant 0 : index
    %367 = vector.load %arg3[%c0_417, %c6_418, %c1_419, %c0_420] : memref<1x8x18x4xbf16, #tpu.memory_space<vmem>>, vector<1x1x16x4xbf16>
    %368 = vector.shape_cast %367 : vector<1x1x16x4xbf16> to vector<16x4xbf16>
    %c4_421 = arith.constant 4 : index
    %c0_422 = arith.constant 0 : index
    %c0_423 = arith.constant 0 : index
    %369 = vector.load %arg5[%c4_421, %c0_422, %c0_423] : memref<9x4x128xbf16, #tpu.memory_space<vmem>>, vector<1x4x128xbf16>
    %370 = vector.shape_cast %369 : vector<1x4x128xbf16> to vector<4x128xbf16>
    %cst_424 = arith.constant dense<0.000000e+00> : vector<16x128xf32>
    %371 = tpu.matmul %368, %370, %cst_424 {dimension_numbers = #tpu.dot_dimension_numbers<[1], [0], [0], [1], [0, 0, 1, 1], [], []>} : vector<16x4xbf16>, vector<4x128xbf16>, vector<16x128xf32> -> vector<16x128xf32>
    %372 = arith.addf %366, %371 : vector<16x128xf32>
    %c0_425 = arith.constant 0 : index
    %c6_426 = arith.constant 6 : index
    %c2_427 = arith.constant 2 : index
    %c0_428 = arith.constant 0 : index
    %373 = vector.load %arg3[%c0_425, %c6_426, %c2_427, %c0_428] : memref<1x8x18x4xbf16, #tpu.memory_space<vmem>>, vector<1x1x16x4xbf16>
    %374 = vector.shape_cast %373 : vector<1x1x16x4xbf16> to vector<16x4xbf16>
    %c5_429 = arith.constant 5 : index
    %c0_430 = arith.constant 0 : index
    %c0_431 = arith.constant 0 : index
    %375 = vector.load %arg5[%c5_429, %c0_430, %c0_431] : memref<9x4x128xbf16, #tpu.memory_space<vmem>>, vector<1x4x128xbf16>
    %376 = vector.shape_cast %375 : vector<1x4x128xbf16> to vector<4x128xbf16>
    %cst_432 = arith.constant dense<0.000000e+00> : vector<16x128xf32>
    %377 = tpu.matmul %374, %376, %cst_432 {dimension_numbers = #tpu.dot_dimension_numbers<[1], [0], [0], [1], [0, 0, 1, 1], [], []>} : vector<16x4xbf16>, vector<4x128xbf16>, vector<16x128xf32> -> vector<16x128xf32>
    %378 = arith.addf %372, %377 : vector<16x128xf32>
    %c0_433 = arith.constant 0 : index
    %c7_434 = arith.constant 7 : index
    %c0_435 = arith.constant 0 : index
    %c0_436 = arith.constant 0 : index
    %379 = vector.load %arg3[%c0_433, %c7_434, %c0_435, %c0_436] : memref<1x8x18x4xbf16, #tpu.memory_space<vmem>>, vector<1x1x16x4xbf16>
    %380 = vector.shape_cast %379 : vector<1x1x16x4xbf16> to vector<16x4xbf16>
    %c6_437 = arith.constant 6 : index
    %c0_438 = arith.constant 0 : index
    %c0_439 = arith.constant 0 : index
    %381 = vector.load %arg5[%c6_437, %c0_438, %c0_439] : memref<9x4x128xbf16, #tpu.memory_space<vmem>>, vector<1x4x128xbf16>
    %382 = vector.shape_cast %381 : vector<1x4x128xbf16> to vector<4x128xbf16>
    %cst_440 = arith.constant dense<0.000000e+00> : vector<16x128xf32>
    %383 = tpu.matmul %380, %382, %cst_440 {dimension_numbers = #tpu.dot_dimension_numbers<[1], [0], [0], [1], [0, 0, 1, 1], [], []>} : vector<16x4xbf16>, vector<4x128xbf16>, vector<16x128xf32> -> vector<16x128xf32>
    %384 = arith.addf %378, %383 : vector<16x128xf32>
    %c0_441 = arith.constant 0 : index
    %c7_442 = arith.constant 7 : index
    %c1_443 = arith.constant 1 : index
    %c0_444 = arith.constant 0 : index
    %385 = vector.load %arg3[%c0_441, %c7_442, %c1_443, %c0_444] : memref<1x8x18x4xbf16, #tpu.memory_space<vmem>>, vector<1x1x16x4xbf16>
    %386 = vector.shape_cast %385 : vector<1x1x16x4xbf16> to vector<16x4xbf16>
    %c7_445 = arith.constant 7 : index
    %c0_446 = arith.constant 0 : index
    %c0_447 = arith.constant 0 : index
    %387 = vector.load %arg5[%c7_445, %c0_446, %c0_447] : memref<9x4x128xbf16, #tpu.memory_space<vmem>>, vector<1x4x128xbf16>
    %388 = vector.shape_cast %387 : vector<1x4x128xbf16> to vector<4x128xbf16>
    %cst_448 = arith.constant dense<0.000000e+00> : vector<16x128xf32>
    %389 = tpu.matmul %386, %388, %cst_448 {dimension_numbers = #tpu.dot_dimension_numbers<[1], [0], [0], [1], [0, 0, 1, 1], [], []>} : vector<16x4xbf16>, vector<4x128xbf16>, vector<16x128xf32> -> vector<16x128xf32>
    %390 = arith.addf %384, %389 : vector<16x128xf32>
    %c0_449 = arith.constant 0 : index
    %c7_450 = arith.constant 7 : index
    %c2_451 = arith.constant 2 : index
    %c0_452 = arith.constant 0 : index
    %391 = vector.load %arg3[%c0_449, %c7_450, %c2_451, %c0_452] : memref<1x8x18x4xbf16, #tpu.memory_space<vmem>>, vector<1x1x16x4xbf16>
    %392 = vector.shape_cast %391 : vector<1x1x16x4xbf16> to vector<16x4xbf16>
    %c8_453 = arith.constant 8 : index
    %c0_454 = arith.constant 0 : index
    %c0_455 = arith.constant 0 : index
    %393 = vector.load %arg5[%c8_453, %c0_454, %c0_455] : memref<9x4x128xbf16, #tpu.memory_space<vmem>>, vector<1x4x128xbf16>
    %394 = vector.shape_cast %393 : vector<1x4x128xbf16> to vector<4x128xbf16>
    %cst_456 = arith.constant dense<0.000000e+00> : vector<16x128xf32>
    %395 = tpu.matmul %392, %394, %cst_456 {dimension_numbers = #tpu.dot_dimension_numbers<[1], [0], [0], [1], [0, 0, 1, 1], [], []>} : vector<16x4xbf16>, vector<4x128xbf16>, vector<16x128xf32> -> vector<16x128xf32>
    %396 = arith.addf %390, %395 : vector<16x128xf32>
    %397 = vector.broadcast %0 : vector<1x128xf32> to vector<16x128xf32>
    %398 = arith.mulf %396, %397 : vector<16x128xf32>
    %399 = vector.broadcast %1 : vector<1x128xf32> to vector<16x128xf32>
    %400 = arith.addf %398, %399 : vector<16x128xf32>
    %401 = arith.negf %400 : vector<16x128xf32>
    %402 = math.exp %401 : vector<16x128xf32>
    %cst_457 = arith.constant 1.000000e+00 : f32
    %403 = vector.broadcast %cst_457 : f32 to vector<16x128xf32>
    %404 = arith.addf %403, %402 : vector<16x128xf32>
    %405 = arith.divf %403, %404 : vector<16x128xf32>
    %406 = arith.mulf %400, %405 : vector<16x128xf32>
    %c0_458 = arith.constant 0 : index
    %c5_459 = arith.constant 5 : index
    %c0_460 = arith.constant 0 : index
    %c0_461 = arith.constant 0 : index
    %407 = vector.load %arg8[%c0_458, %c5_459, %c0_460, %c0_461] : memref<1x8x16x128xf32, #tpu.memory_space<vmem>>, vector<1x1x16x128xf32>
    %408 = vector.shape_cast %407 : vector<1x1x16x128xf32> to vector<16x128xf32>
    %409 = vector.shape_cast %406 : vector<16x128xf32> to vector<1x1x16x128xf32>
    tpu.vector_store %arg8[%c0_458, %c5_459, %c0_460, %c0_461], %409 {strides = array<i32>} : memref<1x8x16x128xf32, #tpu.memory_space<vmem>>, vector<1x1x16x128xf32>,
    %cst_462 = arith.constant 0.000000e+00 : f32
    %410 = vector.broadcast %cst_462 : f32 to vector<16x128xf32>
    %c0_463 = arith.constant 0 : index
    %c6_464 = arith.constant 6 : index
    %c0_465 = arith.constant 0 : index
    %c0_466 = arith.constant 0 : index
    %411 = vector.load %arg3[%c0_463, %c6_464, %c0_465, %c0_466] : memref<1x8x18x4xbf16, #tpu.memory_space<vmem>>, vector<1x1x16x4xbf16>
    %412 = vector.shape_cast %411 : vector<1x1x16x4xbf16> to vector<16x4xbf16>
    %c0_467 = arith.constant 0 : index
    %c0_468 = arith.constant 0 : index
    %c0_469 = arith.constant 0 : index
    %413 = vector.load %arg5[%c0_467, %c0_468, %c0_469] : memref<9x4x128xbf16, #tpu.memory_space<vmem>>, vector<1x4x128xbf16>
    %414 = vector.shape_cast %413 : vector<1x4x128xbf16> to vector<4x128xbf16>
    %cst_470 = arith.constant dense<0.000000e+00> : vector<16x128xf32>
    %415 = tpu.matmul %412, %414, %cst_470 {dimension_numbers = #tpu.dot_dimension_numbers<[1], [0], [0], [1], [0, 0, 1, 1], [], []>} : vector<16x4xbf16>, vector<4x128xbf16>, vector<16x128xf32> -> vector<16x128xf32>
    %416 = arith.addf %410, %415 : vector<16x128xf32>
    %c0_471 = arith.constant 0 : index
    %c6_472 = arith.constant 6 : index
    %c1_473 = arith.constant 1 : index
    %c0_474 = arith.constant 0 : index
    %417 = vector.load %arg3[%c0_471, %c6_472, %c1_473, %c0_474] : memref<1x8x18x4xbf16, #tpu.memory_space<vmem>>, vector<1x1x16x4xbf16>
    %418 = vector.shape_cast %417 : vector<1x1x16x4xbf16> to vector<16x4xbf16>
    %c1_475 = arith.constant 1 : index
    %c0_476 = arith.constant 0 : index
    %c0_477 = arith.constant 0 : index
    %419 = vector.load %arg5[%c1_475, %c0_476, %c0_477] : memref<9x4x128xbf16, #tpu.memory_space<vmem>>, vector<1x4x128xbf16>
    %420 = vector.shape_cast %419 : vector<1x4x128xbf16> to vector<4x128xbf16>
    %cst_478 = arith.constant dense<0.000000e+00> : vector<16x128xf32>
    %421 = tpu.matmul %418, %420, %cst_478 {dimension_numbers = #tpu.dot_dimension_numbers<[1], [0], [0], [1], [0, 0, 1, 1], [], []>} : vector<16x4xbf16>, vector<4x128xbf16>, vector<16x128xf32> -> vector<16x128xf32>
    %422 = arith.addf %416, %421 : vector<16x128xf32>
    %c0_479 = arith.constant 0 : index
    %c6_480 = arith.constant 6 : index
    %c2_481 = arith.constant 2 : index
    %c0_482 = arith.constant 0 : index
    %423 = vector.load %arg3[%c0_479, %c6_480, %c2_481, %c0_482] : memref<1x8x18x4xbf16, #tpu.memory_space<vmem>>, vector<1x1x16x4xbf16>
    %424 = vector.shape_cast %423 : vector<1x1x16x4xbf16> to vector<16x4xbf16>
    %c2_483 = arith.constant 2 : index
    %c0_484 = arith.constant 0 : index
    %c0_485 = arith.constant 0 : index
    %425 = vector.load %arg5[%c2_483, %c0_484, %c0_485] : memref<9x4x128xbf16, #tpu.memory_space<vmem>>, vector<1x4x128xbf16>
    %426 = vector.shape_cast %425 : vector<1x4x128xbf16> to vector<4x128xbf16>
    %cst_486 = arith.constant dense<0.000000e+00> : vector<16x128xf32>
    %427 = tpu.matmul %424, %426, %cst_486 {dimension_numbers = #tpu.dot_dimension_numbers<[1], [0], [0], [1], [0, 0, 1, 1], [], []>} : vector<16x4xbf16>, vector<4x128xbf16>, vector<16x128xf32> -> vector<16x128xf32>
    %428 = arith.addf %422, %427 : vector<16x128xf32>
    %c0_487 = arith.constant 0 : index
    %c7_488 = arith.constant 7 : index
    %c0_489 = arith.constant 0 : index
    %c0_490 = arith.constant 0 : index
    %429 = vector.load %arg3[%c0_487, %c7_488, %c0_489, %c0_490] : memref<1x8x18x4xbf16, #tpu.memory_space<vmem>>, vector<1x1x16x4xbf16>
    %430 = vector.shape_cast %429 : vector<1x1x16x4xbf16> to vector<16x4xbf16>
    %c3_491 = arith.constant 3 : index
    %c0_492 = arith.constant 0 : index
    %c0_493 = arith.constant 0 : index
    %431 = vector.load %arg5[%c3_491, %c0_492, %c0_493] : memref<9x4x128xbf16, #tpu.memory_space<vmem>>, vector<1x4x128xbf16>
    %432 = vector.shape_cast %431 : vector<1x4x128xbf16> to vector<4x128xbf16>
    %cst_494 = arith.constant dense<0.000000e+00> : vector<16x128xf32>
    %433 = tpu.matmul %430, %432, %cst_494 {dimension_numbers = #tpu.dot_dimension_numbers<[1], [0], [0], [1], [0, 0, 1, 1], [], []>} : vector<16x4xbf16>, vector<4x128xbf16>, vector<16x128xf32> -> vector<16x128xf32>
    %434 = arith.addf %428, %433 : vector<16x128xf32>
    %c0_495 = arith.constant 0 : index
    %c7_496 = arith.constant 7 : index
    %c1_497 = arith.constant 1 : index
    %c0_498 = arith.constant 0 : index
    %435 = vector.load %arg3[%c0_495, %c7_496, %c1_497, %c0_498] : memref<1x8x18x4xbf16, #tpu.memory_space<vmem>>, vector<1x1x16x4xbf16>
    %436 = vector.shape_cast %435 : vector<1x1x16x4xbf16> to vector<16x4xbf16>
    %c4_499 = arith.constant 4 : index
    %c0_500 = arith.constant 0 : index
    %c0_501 = arith.constant 0 : index
    %437 = vector.load %arg5[%c4_499, %c0_500, %c0_501] : memref<9x4x128xbf16, #tpu.memory_space<vmem>>, vector<1x4x128xbf16>
    %438 = vector.shape_cast %437 : vector<1x4x128xbf16> to vector<4x128xbf16>
    %cst_502 = arith.constant dense<0.000000e+00> : vector<16x128xf32>
    %439 = tpu.matmul %436, %438, %cst_502 {dimension_numbers = #tpu.dot_dimension_numbers<[1], [0], [0], [1], [0, 0, 1, 1], [], []>} : vector<16x4xbf16>, vector<4x128xbf16>, vector<16x128xf32> -> vector<16x128xf32>
    %440 = arith.addf %434, %439 : vector<16x128xf32>
    %c0_503 = arith.constant 0 : index
    %c7_504 = arith.constant 7 : index
    %c2_505 = arith.constant 2 : index
    %c0_506 = arith.constant 0 : index
    %441 = vector.load %arg3[%c0_503, %c7_504, %c2_505, %c0_506] : memref<1x8x18x4xbf16, #tpu.memory_space<vmem>>, vector<1x1x16x4xbf16>
    %442 = vector.shape_cast %441 : vector<1x1x16x4xbf16> to vector<16x4xbf16>
    %c5_507 = arith.constant 5 : index
    %c0_508 = arith.constant 0 : index
    %c0_509 = arith.constant 0 : index
    %443 = vector.load %arg5[%c5_507, %c0_508, %c0_509] : memref<9x4x128xbf16, #tpu.memory_space<vmem>>, vector<1x4x128xbf16>
    %444 = vector.shape_cast %443 : vector<1x4x128xbf16> to vector<4x128xbf16>
    %cst_510 = arith.constant dense<0.000000e+00> : vector<16x128xf32>
    %445 = tpu.matmul %442, %444, %cst_510 {dimension_numbers = #tpu.dot_dimension_numbers<[1], [0], [0], [1], [0, 0, 1, 1], [], []>} : vector<16x4xbf16>, vector<4x128xbf16>, vector<16x128xf32> -> vector<16x128xf32>
    %446 = arith.addf %440, %445 : vector<16x128xf32>
    %c0_511 = arith.constant 0 : index
    %c0_512 = arith.constant 0 : index
    %c0_513 = arith.constant 0 : index
    %c0_514 = arith.constant 0 : index
    %447 = vector.load %arg4[%c0_511, %c0_512, %c0_513, %c0_514] : memref<1x8x18x4xbf16, #tpu.memory_space<vmem>>, vector<1x1x16x4xbf16>
    %448 = vector.shape_cast %447 : vector<1x1x16x4xbf16> to vector<16x4xbf16>
    %c6_515 = arith.constant 6 : index
    %c0_516 = arith.constant 0 : index
    %c0_517 = arith.constant 0 : index
    %449 = vector.load %arg5[%c6_515, %c0_516, %c0_517] : memref<9x4x128xbf16, #tpu.memory_space<vmem>>, vector<1x4x128xbf16>
    %450 = vector.shape_cast %449 : vector<1x4x128xbf16> to vector<4x128xbf16>
    %cst_518 = arith.constant dense<0.000000e+00> : vector<16x128xf32>
    %451 = tpu.matmul %448, %450, %cst_518 {dimension_numbers = #tpu.dot_dimension_numbers<[1], [0], [0], [1], [0, 0, 1, 1], [], []>} : vector<16x4xbf16>, vector<4x128xbf16>, vector<16x128xf32> -> vector<16x128xf32>
    %452 = arith.addf %446, %451 : vector<16x128xf32>
    %c0_519 = arith.constant 0 : index
    %c0_520 = arith.constant 0 : index
    %c1_521 = arith.constant 1 : index
    %c0_522 = arith.constant 0 : index
    %453 = vector.load %arg4[%c0_519, %c0_520, %c1_521, %c0_522] : memref<1x8x18x4xbf16, #tpu.memory_space<vmem>>, vector<1x1x16x4xbf16>
    %454 = vector.shape_cast %453 : vector<1x1x16x4xbf16> to vector<16x4xbf16>
    %c7_523 = arith.constant 7 : index
    %c0_524 = arith.constant 0 : index
    %c0_525 = arith.constant 0 : index
    %455 = vector.load %arg5[%c7_523, %c0_524, %c0_525] : memref<9x4x128xbf16, #tpu.memory_space<vmem>>, vector<1x4x128xbf16>
    %456 = vector.shape_cast %455 : vector<1x4x128xbf16> to vector<4x128xbf16>
    %cst_526 = arith.constant dense<0.000000e+00> : vector<16x128xf32>
    %457 = tpu.matmul %454, %456, %cst_526 {dimension_numbers = #tpu.dot_dimension_numbers<[1], [0], [0], [1], [0, 0, 1, 1], [], []>} : vector<16x4xbf16>, vector<4x128xbf16>, vector<16x128xf32> -> vector<16x128xf32>
    %458 = arith.addf %452, %457 : vector<16x128xf32>
    %c0_527 = arith.constant 0 : index
    %c0_528 = arith.constant 0 : index
    %c2_529 = arith.constant 2 : index
    %c0_530 = arith.constant 0 : index
    %459 = vector.load %arg4[%c0_527, %c0_528, %c2_529, %c0_530] : memref<1x8x18x4xbf16, #tpu.memory_space<vmem>>, vector<1x1x16x4xbf16>
    %460 = vector.shape_cast %459 : vector<1x1x16x4xbf16> to vector<16x4xbf16>
    %c8_531 = arith.constant 8 : index
    %c0_532 = arith.constant 0 : index
    %c0_533 = arith.constant 0 : index
    %461 = vector.load %arg5[%c8_531, %c0_532, %c0_533] : memref<9x4x128xbf16, #tpu.memory_space<vmem>>, vector<1x4x128xbf16>
    %462 = vector.shape_cast %461 : vector<1x4x128xbf16> to vector<4x128xbf16>
    %cst_534 = arith.constant dense<0.000000e+00> : vector<16x128xf32>
    %463 = tpu.matmul %460, %462, %cst_534 {dimension_numbers = #tpu.dot_dimension_numbers<[1], [0], [0], [1], [0, 0, 1, 1], [], []>} : vector<16x4xbf16>, vector<4x128xbf16>, vector<16x128xf32> -> vector<16x128xf32>
    %464 = arith.addf %458, %463 : vector<16x128xf32>
    %465 = vector.broadcast %0 : vector<1x128xf32> to vector<16x128xf32>
    %466 = arith.mulf %464, %465 : vector<16x128xf32>
    %467 = vector.broadcast %1 : vector<1x128xf32> to vector<16x128xf32>
    %468 = arith.addf %466, %467 : vector<16x128xf32>
    %469 = arith.negf %468 : vector<16x128xf32>
    %470 = math.exp %469 : vector<16x128xf32>
    %cst_535 = arith.constant 1.000000e+00 : f32
    %471 = vector.broadcast %cst_535 : f32 to vector<16x128xf32>
    %472 = arith.addf %471, %470 : vector<16x128xf32>
    %473 = arith.divf %471, %472 : vector<16x128xf32>
    %474 = arith.mulf %468, %473 : vector<16x128xf32>
    %c0_536 = arith.constant 0 : index
    %c6_537 = arith.constant 6 : index
    %c0_538 = arith.constant 0 : index
    %c0_539 = arith.constant 0 : index
    %475 = vector.load %arg8[%c0_536, %c6_537, %c0_538, %c0_539] : memref<1x8x16x128xf32, #tpu.memory_space<vmem>>, vector<1x1x16x128xf32>
    %476 = vector.shape_cast %475 : vector<1x1x16x128xf32> to vector<16x128xf32>
    %477 = vector.shape_cast %474 : vector<16x128xf32> to vector<1x1x16x128xf32>
    tpu.vector_store %arg8[%c0_536, %c6_537, %c0_538, %c0_539], %477 {strides = array<i32>} : memref<1x8x16x128xf32, #tpu.memory_space<vmem>>, vector<1x1x16x128xf32>,
    %cst_540 = arith.constant 0.000000e+00 : f32
    %478 = vector.broadcast %cst_540 : f32 to vector<16x128xf32>
    %c0_541 = arith.constant 0 : index
    %c7_542 = arith.constant 7 : index
    %c0_543 = arith.constant 0 : index
    %c0_544 = arith.constant 0 : index
    %479 = vector.load %arg3[%c0_541, %c7_542, %c0_543, %c0_544] : memref<1x8x18x4xbf16, #tpu.memory_space<vmem>>, vector<1x1x16x4xbf16>
    %480 = vector.shape_cast %479 : vector<1x1x16x4xbf16> to vector<16x4xbf16>
    %c0_545 = arith.constant 0 : index
    %c0_546 = arith.constant 0 : index
    %c0_547 = arith.constant 0 : index
    %481 = vector.load %arg5[%c0_545, %c0_546, %c0_547] : memref<9x4x128xbf16, #tpu.memory_space<vmem>>, vector<1x4x128xbf16>
    %482 = vector.shape_cast %481 : vector<1x4x128xbf16> to vector<4x128xbf16>
    %cst_548 = arith.constant dense<0.000000e+00> : vector<16x128xf32>
    %483 = tpu.matmul %480, %482, %cst_548 {dimension_numbers = #tpu.dot_dimension_numbers<[1], [0], [0], [1], [0, 0, 1, 1], [], []>} : vector<16x4xbf16>, vector<4x128xbf16>, vector<16x128xf32> -> vector<16x128xf32>
    %484 = arith.addf %478, %483 : vector<16x128xf32>
    %c0_549 = arith.constant 0 : index
    %c7_550 = arith.constant 7 : index
    %c1_551 = arith.constant 1 : index
    %c0_552 = arith.constant 0 : index
    %485 = vector.load %arg3[%c0_549, %c7_550, %c1_551, %c0_552] : memref<1x8x18x4xbf16, #tpu.memory_space<vmem>>, vector<1x1x16x4xbf16>
    %486 = vector.shape_cast %485 : vector<1x1x16x4xbf16> to vector<16x4xbf16>
    %c1_553 = arith.constant 1 : index
    %c0_554 = arith.constant 0 : index
    %c0_555 = arith.constant 0 : index
    %487 = vector.load %arg5[%c1_553, %c0_554, %c0_555] : memref<9x4x128xbf16, #tpu.memory_space<vmem>>, vector<1x4x128xbf16>
    %488 = vector.shape_cast %487 : vector<1x4x128xbf16> to vector<4x128xbf16>
    %cst_556 = arith.constant dense<0.000000e+00> : vector<16x128xf32>
    %489 = tpu.matmul %486, %488, %cst_556 {dimension_numbers = #tpu.dot_dimension_numbers<[1], [0], [0], [1], [0, 0, 1, 1], [], []>} : vector<16x4xbf16>, vector<4x128xbf16>, vector<16x128xf32> -> vector<16x128xf32>
    %490 = arith.addf %484, %489 : vector<16x128xf32>
    %c0_557 = arith.constant 0 : index
    %c7_558 = arith.constant 7 : index
    %c2_559 = arith.constant 2 : index
    %c0_560 = arith.constant 0 : index
    %491 = vector.load %arg3[%c0_557, %c7_558, %c2_559, %c0_560] : memref<1x8x18x4xbf16, #tpu.memory_space<vmem>>, vector<1x1x16x4xbf16>
    %492 = vector.shape_cast %491 : vector<1x1x16x4xbf16> to vector<16x4xbf16>
    %c2_561 = arith.constant 2 : index
    %c0_562 = arith.constant 0 : index
    %c0_563 = arith.constant 0 : index
    %493 = vector.load %arg5[%c2_561, %c0_562, %c0_563] : memref<9x4x128xbf16, #tpu.memory_space<vmem>>, vector<1x4x128xbf16>
    %494 = vector.shape_cast %493 : vector<1x4x128xbf16> to vector<4x128xbf16>
    %cst_564 = arith.constant dense<0.000000e+00> : vector<16x128xf32>
    %495 = tpu.matmul %492, %494, %cst_564 {dimension_numbers = #tpu.dot_dimension_numbers<[1], [0], [0], [1], [0, 0, 1, 1], [], []>} : vector<16x4xbf16>, vector<4x128xbf16>, vector<16x128xf32> -> vector<16x128xf32>
    %496 = arith.addf %490, %495 : vector<16x128xf32>
    %c0_565 = arith.constant 0 : index
    %c0_566 = arith.constant 0 : index
    %c0_567 = arith.constant 0 : index
    %c0_568 = arith.constant 0 : index
    %497 = vector.load %arg4[%c0_565, %c0_566, %c0_567, %c0_568] : memref<1x8x18x4xbf16, #tpu.memory_space<vmem>>, vector<1x1x16x4xbf16>
    %498 = vector.shape_cast %497 : vector<1x1x16x4xbf16> to vector<16x4xbf16>
    %c3_569 = arith.constant 3 : index
    %c0_570 = arith.constant 0 : index
    %c0_571 = arith.constant 0 : index
    %499 = vector.load %arg5[%c3_569, %c0_570, %c0_571] : memref<9x4x128xbf16, #tpu.memory_space<vmem>>, vector<1x4x128xbf16>
    %500 = vector.shape_cast %499 : vector<1x4x128xbf16> to vector<4x128xbf16>
    %cst_572 = arith.constant dense<0.000000e+00> : vector<16x128xf32>
    %501 = tpu.matmul %498, %500, %cst_572 {dimension_numbers = #tpu.dot_dimension_numbers<[1], [0], [0], [1], [0, 0, 1, 1], [], []>} : vector<16x4xbf16>, vector<4x128xbf16>, vector<16x128xf32> -> vector<16x128xf32>
    %502 = arith.addf %496, %501 : vector<16x128xf32>
    %c0_573 = arith.constant 0 : index
    %c0_574 = arith.constant 0 : index
    %c1_575 = arith.constant 1 : index
    %c0_576 = arith.constant 0 : index
    %503 = vector.load %arg4[%c0_573, %c0_574, %c1_575, %c0_576] : memref<1x8x18x4xbf16, #tpu.memory_space<vmem>>, vector<1x1x16x4xbf16>
    %504 = vector.shape_cast %503 : vector<1x1x16x4xbf16> to vector<16x4xbf16>
    %c4_577 = arith.constant 4 : index
    %c0_578 = arith.constant 0 : index
    %c0_579 = arith.constant 0 : index
    %505 = vector.load %arg5[%c4_577, %c0_578, %c0_579] : memref<9x4x128xbf16, #tpu.memory_space<vmem>>, vector<1x4x128xbf16>
    %506 = vector.shape_cast %505 : vector<1x4x128xbf16> to vector<4x128xbf16>
    %cst_580 = arith.constant dense<0.000000e+00> : vector<16x128xf32>
    %507 = tpu.matmul %504, %506, %cst_580 {dimension_numbers = #tpu.dot_dimension_numbers<[1], [0], [0], [1], [0, 0, 1, 1], [], []>} : vector<16x4xbf16>, vector<4x128xbf16>, vector<16x128xf32> -> vector<16x128xf32>
    %508 = arith.addf %502, %507 : vector<16x128xf32>
    %c0_581 = arith.constant 0 : index
    %c0_582 = arith.constant 0 : index
    %c2_583 = arith.constant 2 : index
    %c0_584 = arith.constant 0 : index
    %509 = vector.load %arg4[%c0_581, %c0_582, %c2_583, %c0_584] : memref<1x8x18x4xbf16, #tpu.memory_space<vmem>>, vector<1x1x16x4xbf16>
    %510 = vector.shape_cast %509 : vector<1x1x16x4xbf16> to vector<16x4xbf16>
    %c5_585 = arith.constant 5 : index
    %c0_586 = arith.constant 0 : index
    %c0_587 = arith.constant 0 : index
    %511 = vector.load %arg5[%c5_585, %c0_586, %c0_587] : memref<9x4x128xbf16, #tpu.memory_space<vmem>>, vector<1x4x128xbf16>
    %512 = vector.shape_cast %511 : vector<1x4x128xbf16> to vector<4x128xbf16>
    %cst_588 = arith.constant dense<0.000000e+00> : vector<16x128xf32>
    %513 = tpu.matmul %510, %512, %cst_588 {dimension_numbers = #tpu.dot_dimension_numbers<[1], [0], [0], [1], [0, 0, 1, 1], [], []>} : vector<16x4xbf16>, vector<4x128xbf16>, vector<16x128xf32> -> vector<16x128xf32>
    %514 = arith.addf %508, %513 : vector<16x128xf32>
    %c0_589 = arith.constant 0 : index
    %c1_590 = arith.constant 1 : index
    %c0_591 = arith.constant 0 : index
    %c0_592 = arith.constant 0 : index
    %515 = vector.load %arg4[%c0_589, %c1_590, %c0_591, %c0_592] : memref<1x8x18x4xbf16, #tpu.memory_space<vmem>>, vector<1x1x16x4xbf16>
    %516 = vector.shape_cast %515 : vector<1x1x16x4xbf16> to vector<16x4xbf16>
    %c6_593 = arith.constant 6 : index
    %c0_594 = arith.constant 0 : index
    %c0_595 = arith.constant 0 : index
    %517 = vector.load %arg5[%c6_593, %c0_594, %c0_595] : memref<9x4x128xbf16, #tpu.memory_space<vmem>>, vector<1x4x128xbf16>
    %518 = vector.shape_cast %517 : vector<1x4x128xbf16> to vector<4x128xbf16>
    %cst_596 = arith.constant dense<0.000000e+00> : vector<16x128xf32>
    %519 = tpu.matmul %516, %518, %cst_596 {dimension_numbers = #tpu.dot_dimension_numbers<[1], [0], [0], [1], [0, 0, 1, 1], [], []>} : vector<16x4xbf16>, vector<4x128xbf16>, vector<16x128xf32> -> vector<16x128xf32>
    %520 = arith.addf %514, %519 : vector<16x128xf32>
    %c0_597 = arith.constant 0 : index
    %c1_598 = arith.constant 1 : index
    %c1_599 = arith.constant 1 : index
    %c0_600 = arith.constant 0 : index
    %521 = vector.load %arg4[%c0_597, %c1_598, %c1_599, %c0_600] : memref<1x8x18x4xbf16, #tpu.memory_space<vmem>>, vector<1x1x16x4xbf16>
    %522 = vector.shape_cast %521 : vector<1x1x16x4xbf16> to vector<16x4xbf16>
    %c7_601 = arith.constant 7 : index
    %c0_602 = arith.constant 0 : index
    %c0_603 = arith.constant 0 : index
    %523 = vector.load %arg5[%c7_601, %c0_602, %c0_603] : memref<9x4x128xbf16, #tpu.memory_space<vmem>>, vector<1x4x128xbf16>
    %524 = vector.shape_cast %523 : vector<1x4x128xbf16> to vector<4x128xbf16>
    %cst_604 = arith.constant dense<0.000000e+00> : vector<16x128xf32>
    %525 = tpu.matmul %522, %524, %cst_604 {dimension_numbers = #tpu.dot_dimension_numbers<[1], [0], [0], [1], [0, 0, 1, 1], [], []>} : vector<16x4xbf16>, vector<4x128xbf16>, vector<16x128xf32> -> vector<16x128xf32>
    %526 = arith.addf %520, %525 : vector<16x128xf32>
    %c0_605 = arith.constant 0 : index
    %c1_606 = arith.constant 1 : index
    %c2_607 = arith.constant 2 : index
    %c0_608 = arith.constant 0 : index
    %527 = vector.load %arg4[%c0_605, %c1_606, %c2_607, %c0_608] : memref<1x8x18x4xbf16, #tpu.memory_space<vmem>>, vector<1x1x16x4xbf16>
    %528 = vector.shape_cast %527 : vector<1x1x16x4xbf16> to vector<16x4xbf16>
    %c8_609 = arith.constant 8 : index
    %c0_610 = arith.constant 0 : index
    %c0_611 = arith.constant 0 : index
    %529 = vector.load %arg5[%c8_609, %c0_610, %c0_611] : memref<9x4x128xbf16, #tpu.memory_space<vmem>>, vector<1x4x128xbf16>
    %530 = vector.shape_cast %529 : vector<1x4x128xbf16> to vector<4x128xbf16>
    %cst_612 = arith.constant dense<0.000000e+00> : vector<16x128xf32>
    %531 = tpu.matmul %528, %530, %cst_612 {dimension_numbers = #tpu.dot_dimension_numbers<[1], [0], [0], [1], [0, 0, 1, 1], [], []>} : vector<16x4xbf16>, vector<4x128xbf16>, vector<16x128xf32> -> vector<16x128xf32>
    %532 = arith.addf %526, %531 : vector<16x128xf32>
    %533 = vector.broadcast %0 : vector<1x128xf32> to vector<16x128xf32>
    %534 = arith.mulf %532, %533 : vector<16x128xf32>
    %535 = vector.broadcast %1 : vector<1x128xf32> to vector<16x128xf32>
    %536 = arith.addf %534, %535 : vector<16x128xf32>
    %537 = arith.negf %536 : vector<16x128xf32>
    %538 = math.exp %537 : vector<16x128xf32>
    %cst_613 = arith.constant 1.000000e+00 : f32
    %539 = vector.broadcast %cst_613 : f32 to vector<16x128xf32>
    %540 = arith.addf %539, %538 : vector<16x128xf32>
    %541 = arith.divf %539, %540 : vector<16x128xf32>
    %542 = arith.mulf %536, %541 : vector<16x128xf32>
    %c0_614 = arith.constant 0 : index
    %c7_615 = arith.constant 7 : index
    %c0_616 = arith.constant 0 : index
    %c0_617 = arith.constant 0 : index
    %543 = vector.load %arg8[%c0_614, %c7_615, %c0_616, %c0_617] : memref<1x8x16x128xf32, #tpu.memory_space<vmem>>, vector<1x1x16x128xf32>
    %544 = vector.shape_cast %543 : vector<1x1x16x128xf32> to vector<16x128xf32>
    %545 = vector.shape_cast %542 : vector<16x128xf32> to vector<1x1x16x128xf32>
    tpu.vector_store %arg8[%c0_614, %c7_615, %c0_616, %c0_617], %545 {strides = array<i32>} : memref<1x8x16x128xf32, #tpu.memory_space<vmem>>, vector<1x1x16x128xf32>,
    return
  }
  func.func @transform_0(%arg0: i32, %arg1: i32, %arg2: i32) -> (i32, i32, i32, i32) {
    %c0_i32 = arith.constant 0 : i32
    %c0_i32_0 = arith.constant 0 : i32
    %c0_i32_1 = arith.constant 0 : i32
    return %arg1, %arg2, %c0_i32, %c0_i32_0 : i32, i32, i32, i32
  }
  func.func @transform_1(%arg0: i32, %arg1: i32, %arg2: i32) -> (i32, i32, i32, i32) {
    %c1_i32 = arith.constant 1 : i32
    %0 = arith.addi %arg2, %c1_i32 : i32
    %c0_i32 = arith.constant 0 : i32
    %c0_i32_0 = arith.constant 0 : i32
    %c0_i32_1 = arith.constant 0 : i32
    return %arg1, %0, %c0_i32, %c0_i32_0 : i32, i32, i32, i32
  }
  func.func @transform_2(%arg0: i32, %arg1: i32, %arg2: i32) -> (i32, i32, i32) {
    %c0_i32 = arith.constant 0 : i32
    %c0_i32_0 = arith.constant 0 : i32
    %c0_i32_1 = arith.constant 0 : i32
    return %c0_i32, %c0_i32_0, %arg0 : i32, i32, i32
  }
  func.func @transform_3(%arg0: i32, %arg1: i32, %arg2: i32) -> (i32, i32) {
    %c0_i32 = arith.constant 0 : i32
    %c0_i32_0 = arith.constant 0 : i32
    return %c0_i32, %arg0 : i32, i32
  }
  func.func @transform_4(%arg0: i32, %arg1: i32, %arg2: i32) -> (i32, i32) {
    %c0_i32 = arith.constant 0 : i32
    %c0_i32_0 = arith.constant 0 : i32
    return %c0_i32, %arg0 : i32, i32
  }
  func.func @transform_5(%arg0: i32, %arg1: i32, %arg2: i32) -> (i32, i32, i32, i32) {
    %c0_i32 = arith.constant 0 : i32
    %c0_i32_0 = arith.constant 0 : i32
    return %arg1, %arg2, %c0_i32, %arg0 : i32, i32, i32, i32
  }
}

</mosaic_0001>

<llo_original>
// kernel: basic_conv.1
$region0: #{basic_conv.1}
  #allocation0 [shape = 'u32[]', space=smem, size = 0x4, offset = 0x4, fixed_abs, tag = 'smem constant byte address 0x4 - core index']
  #allocation1 [shape = 'u32[72,128]{1,0:T(1,128)}', space=vmem, size = 0x9000, scoped, tag = 'internal scratch']
  %s0 = inlined_call_operand.vmem [shape: bf16[2,24,18,4], index: 0, kind: input, shape index: {}, may-alias: {0,1}]
  %s1 = inlined_call_operand.vmem [shape: bf16[2,24,18,4], index: 1, kind: input, shape index: {}, may-alias: {0,1}]
  %s2 = inlined_call_operand.vmem [shape: bf16[9,4,128], index: 2, kind: input, shape index: {}]
  %s3 = inlined_call_operand.vmem [shape: f32[1,128], index: 3, kind: input, shape index: {}]
  %s4 = inlined_call_operand.vmem [shape: f32[1,128], index: 4, kind: input, shape index: {}]
  %s5 = inlined_call_operand.vmem [shape: f32[2,16,16,128], index: 5, kind: output, shape index: {}]
  %s6 = sld [smem:[#allocation0]]
  $region53: #{basic_conv.1} parent=0
    _
  %s8 = ssub.s32 1, %s6
  %s9 = scalar_select 0, %s8, %s6
  loop: start=0, step=1, limit=6
  $region2: #{basic_conv.1} parent=0 // loop_pre_header
    _
  $region3: #{basic_conv.1} parent=0 // loop_header
    %s11 = sphi 0, %s15
    %p12 = scmp.ge.s32.totalorder %s11, 6
    %s18 = sphi 0, %s37
    %s19 = sphi 0, %s33
    %s20 = sphi 0, %s29
    %s21 = sphi 0, %s18
    %s22 = sphi 0, %s19
    %s23 = sphi 0, %s20
    %s24 = sphi 0, %s21
    %s25 = sphi 0, %s22
    %s26 = sphi 0, %s23
    %s42 = sphi 0, %s44
    %s45 = sphi 0, %s42
    %s46 = sphi 0, %s45
    %s62 = sphi 0, %s46
    %s72 = sphi 0, %s74
    %s75 = sphi 0, %s72
    %s76 = sphi 0, %s75
    %s92 = sphi 0, %s76
    %s98 = sphi 0, %s100
    %s101 = sphi 0, %s98
    %s102 = sphi 0, %s101
    %s118 = sphi 0, %s102
    %s124 = sphi 0, %s126
    %s127 = sphi 0, %s124
    %s128 = sphi 0, %s127
    %s144 = sphi 0, %s128
    %s150 = sphi 0, %s152
    %s153 = sphi 0, %s150
    %s154 = sphi 0, %s153
    %s170 = sphi 0, %s154
    %s180 = sphi 0, %s182
    %s183 = sphi 0, %s180
    %s184 = sphi 0, %s183
    %s200 = sphi 0, %s184
  $region4: #{basic_conv.1} parent=0 // loop_header_branch
    %14 = sbr.rel (%p12) target = $region8
  $region5: #{basic_conv.1} parent=0 // loop_body
    %s16 = ssub.s32 %s11, 1
    %s17 = ssub.s32 %s11, 2
    %s27 = sadd.s32 1, %s20
    %p28 = scmp.ge.s32.totalorder %s27, 2
    %s29 = scalar_select %p28, 0, %s27
    %s30 = sadd.s32 1, %s19
    %s31 = scalar_select %p28, %s30, %s19
    %p32 = scmp.ge.s32.totalorder %s31, 2
    %s33 = scalar_select %p32, 0, %s31
    %s34 = sadd.s32 1, %s18
    %s35 = scalar_select %p32, %s34, %s18
    %p36 = scmp.ge.s32.totalorder %s35, 1
    %s37 = scalar_select %p36, 0, %s35
    %s38 = ssub.s32 %s19, %s33
    %s39 = ssub.s32 %s20, %s29
    %s40 = sor.u32 %s38, %s39
    %p41 = scmp.eq.s32.totalorder %s40, 0
    %s43 = sadd.s32 %s42, 1
    %s44 = scalar_select %p41, %s42, %s43
    %p47 = pneg %p41
    %p48 = scmp.eq.s32.totalorder %s11, 3
    %p49 = por %p47, %p48
    %p50 = scmp.ne.s32.totalorder %s42, %s45
    %p51 = scmp.eq.s32.totalorder %s11, 0
    %p52 = por %p50, %p51
    %p53 = scmp.ne.s32.totalorder %s42, %s45
    %p54 = scmp.eq.s32.totalorder %s16, 3
    %p55 = por %p53, %p54
    %p56 = scmp.ne.s32.totalorder %s45, %s46
    %p57 = scmp.eq.s32.totalorder %s16, 0
    %p58 = por %p56, %p57
    %p59 = scmp.ne.s32.totalorder %s45, %s46
    %p60 = scmp.eq.s32.totalorder %s17, 3
    %p61 = por %p59, %p60
    %p63 = scmp.ne.s32.totalorder %s46, %s62
    %p64 = scmp.eq.s32.totalorder %s17, 0
    %p65 = por %p63, %p64
    %s66 = sadd.s32 %s20, 1
    %s67 = sadd.s32 %s29, 1
    %s68 = ssub.s32 %s19, %s33
    %s69 = ssub.s32 %s66, %s67
    %s70 = sor.u32 %s68, %s69
    %p71 = scmp.eq.s32.totalorder %s70, 0
    %s73 = sadd.s32 %s72, 1
    %s74 = scalar_select %p71, %s72, %s73
    %p77 = pneg %p71
    %p78 = scmp.eq.s32.totalorder %s11, 3
    %p79 = por %p77, %p78
    %p80 = scmp.ne.s32.totalorder %s72, %s75
    %p81 = scmp.eq.s32.totalorder %s11, 0
    %p82 = por %p80, %p81
    %p83 = scmp.ne.s32.totalorder %s72, %s75
    %p84 = scmp.eq.s32.totalorder %s16, 3
    %p85 = por %p83, %p84
    %p86 = scmp.ne.s32.totalorder %s75, %s76
    %p87 = scmp.eq.s32.totalorder %s16, 0
    %p88 = por %p86, %p87
    %p89 = scmp.ne.s32.totalorder %s75, %s76
    %p90 = scmp.eq.s32.totalorder %s17, 3
    %p91 = por %p89, %p90
    %p93 = scmp.ne.s32.totalorder %s76, %s92
    %p94 = scmp.eq.s32.totalorder %s17, 0
    %p95 = por %p93, %p94
    %s96 = ssub.s32 %s18, %s37
    %p97 = scmp.eq.s32.totalorder %s96, 0
    %s99 = sadd.s32 %s98, 1
    %s100 = scalar_select %p97, %s98, %s99
    %p103 = pneg %p97
    %p104 = scmp.eq.s32.totalorder %s11, 3
    %p105 = por %p103, %p104
    %p106 = scmp.ne.s32.totalorder %s98, %s101
    %p107 = scmp.eq.s32.totalorder %s11, 0
    %p108 = por %p106, %p107
    %p109 = scmp.ne.s32.totalorder %s98, %s101
    %p110 = scmp.eq.s32.totalorder %s16, 3
    %p111 = por %p109, %p110
    %p112 = scmp.ne.s32.totalorder %s101, %s102
    %p113 = scmp.eq.s32.totalorder %s16, 0
    %p114 = por %p112, %p113
    %p115 = scmp.ne.s32.totalorder %s101, %s102
    %p116 = scmp.eq.s32.totalorder %s17, 3
    %p117 = por %p115, %p116
    %p119 = scmp.ne.s32.totalorder %s102, %s118
    %p120 = scmp.eq.s32.totalorder %s17, 0
    %p121 = por %p119, %p120
    %s122 = ssub.s32 %s18, %s37
    %p123 = scmp.eq.s32.totalorder %s122, 0
    %s125 = sadd.s32 %s124, 1
    %s126 = scalar_select %p123, %s124, %s125
    %p129 = pneg %p123
    %p130 = scmp.eq.s32.totalorder %s11, 3
    %p131 = por %p129, %p130
    %p132 = scmp.ne.s32.totalorder %s124, %s127
    %p133 = scmp.eq.s32.totalorder %s11, 0
    %p134 = por %p132, %p133
    %p135 = scmp.ne.s32.totalorder %s124, %s127
    %p136 = scmp.eq.s32.totalorder %s16, 3
    %p137 = por %p135, %p136
    %p138 = scmp.ne.s32.totalorder %s127, %s128
    %p139 = scmp.eq.s32.totalorder %s16, 0
    %p140 = por %p138, %p139
    %p141 = scmp.ne.s32.totalorder %s127, %s128
    %p142 = scmp.eq.s32.totalorder %s17, 3
    %p143 = por %p141, %p142
    %p145 = scmp.ne.s32.totalorder %s128, %s144
    %p146 = scmp.eq.s32.totalorder %s17, 0
    %p147 = por %p145, %p146
    %s148 = ssub.s32 %s18, %s37
    %p149 = scmp.eq.s32.totalorder %s148, 0
    %s151 = sadd.s32 %s150, 1
    %s152 = scalar_select %p149, %s150, %s151
    %p155 = pneg %p149
    %p156 = scmp.eq.s32.totalorder %s11, 3
    %p157 = por %p155, %p156
    %p158 = scmp.ne.s32.totalorder %s150, %s153
    %p159 = scmp.eq.s32.totalorder %s11, 0
    %p160 = por %p158, %p159
    %p161 = scmp.ne.s32.totalorder %s150, %s153
    %p162 = scmp.eq.s32.totalorder %s16, 3
    %p163 = por %p161, %p162
    %p164 = scmp.ne.s32.totalorder %s153, %s154
    %p165 = scmp.eq.s32.totalorder %s16, 0
    %p166 = por %p164, %p165
    %p167 = scmp.ne.s32.totalorder %s153, %s154
    %p168 = scmp.eq.s32.totalorder %s17, 3
    %p169 = por %p167, %p168
    %p171 = scmp.ne.s32.totalorder %s154, %s170
    %p172 = scmp.eq.s32.totalorder %s17, 0
    %p173 = por %p171, %p172
    %s174 = ssub.s32 %s19, %s33
    %s175 = ssub.s32 %s20, %s29
    %s176 = sor.u32 %s174, %s175
    %s177 = ssub.s32 %s18, %s37
    %s178 = sor.u32 %s176, %s177
    %p179 = scmp.eq.s32.totalorder %s178, 0
    %s181 = sadd.s32 %s180, 1
    %s182 = scalar_select %p179, %s180, %s181
    %p185 = pneg %p179
    %p186 = scmp.eq.s32.totalorder %s11, 3
    %p187 = por %p185, %p186
    %p188 = scmp.ne.s32.totalorder %s180, %s183
    %p189 = scmp.eq.s32.totalorder %s11, 0
    %p190 = por %p188, %p189
    %p191 = scmp.ne.s32.totalorder %s180, %s183
    %p192 = scmp.eq.s32.totalorder %s16, 3
    %p193 = por %p191, %p192
    %p194 = scmp.ne.s32.totalorder %s183, %s184
    %p195 = scmp.eq.s32.totalorder %s16, 0
    %p196 = por %p194, %p195
    %p197 = scmp.ne.s32.totalorder %s183, %s184
    %p198 = scmp.eq.s32.totalorder %s17, 3
    %p199 = por %p197, %p198
    %p201 = scmp.ne.s32.totalorder %s184, %s200
    %p202 = scmp.eq.s32.totalorder %s17, 0
    %p203 = por %p201, %p202
    %p204 = scmp.le.s32.totalorder 1, %s11
    %p205 = scmp.lt.s32.totalorder %s11, 5
    %p206 = pnand %p204, %p205
    %p207 = pneg %p206
    // Predicated region
    $region9: #{basic_conv.1} parent=5 // pred_check
      _
    $region10: #{basic_conv.1} parent=5 // pred_check_branch
      %209 = sbr.rel (%p206) target = $region12
    $region11: #{basic_conv.1} parent=5 // pred_region
      %s210 = ssub.s32 %s11, 1
      // Predicated region
      $region13: #{basic_conv.1} parent=11 // pred_check
        %p211 = pneg %p114
      $region14: #{basic_conv.1} parent=11 // pred_check_branch
        %213 = sbr.rel (%p211) target = $region16
      $region15: #{basic_conv.1} parent=11 // pred_region
        %p214 = scmp.lt.s32.totalorder %s21, 0
        %s215 = scalar_select %p214, %s21, 0
        %s216 = smul.addr %s215, 2
        %s217 = scalar_lea.vmem %s2, %s216
      $region16: #{basic_conv.1} parent=11 // pred_fallthru
        _
      // Predicated region
      $region17: #{basic_conv.1} parent=11 // pred_check
        %p218 = pneg %p140
      $region18: #{basic_conv.1} parent=11 // pred_check_branch
        %220 = sbr.rel (%p218) target = $region20
      $region19: #{basic_conv.1} parent=11 // pred_region
        %p221 = scmp.lt.s32.totalorder %s21, 0
        %s222 = scalar_select %p221, %s21, 0
        %s223 = scalar_lea.vmem %s3, %s222
      $region20: #{basic_conv.1} parent=11 // pred_fallthru
        _
      // Predicated region
      $region21: #{basic_conv.1} parent=11 // pred_check
        %p224 = pneg %p166
      $region22: #{basic_conv.1} parent=11 // pred_check_branch
        %226 = sbr.rel (%p224) target = $region24
      $region23: #{basic_conv.1} parent=11 // pred_region
        %p227 = scmp.lt.s32.totalorder %s21, 0
        %s228 = scalar_select %p227, %s21, 0
        %s229 = scalar_lea.vmem %s4, %s228
      $region24: #{basic_conv.1} parent=11 // pred_fallthru
        _
    $region12: #{basic_conv.1} parent=5 // pred_fallthru
      _
    %p230 = scmp.lt.s32.totalorder %s11, 4
    // Predicated region
    $region25: #{basic_conv.1} parent=5 // pred_check
      %p231 = pneg %p230
    $region26: #{basic_conv.1} parent=5 // pred_check_branch
      %233 = sbr.rel (%p231) target = $region28
    $region27: #{basic_conv.1} parent=5 // pred_region
      // Predicated region
      $region29: #{basic_conv.1} parent=27 // pred_check
        %p234 = pneg %p52
      $region30: #{basic_conv.1} parent=27 // pred_check_branch
        %236 = sbr.rel (%p234) target = $region32
      $region31: #{basic_conv.1} parent=27 // pred_region
        %s237 = smul.u32 8, %s20
        %p238 = scmp.lt.s32.totalorder %s19, 1
        %s239 = scalar_select %p238, %s19, 1
        %p240 = scmp.lt.s32.totalorder %s237, 23
        %s241 = scalar_select %p240, %s237, 23
        %s242 = smul.addr %s241, 3
        %s243 = smul.addr %s239, 72
        %s244 = sadd.s32 %s242, %s243
        %s245 = smul.addr %s244, 4
        %s246 = scalar_lea.vmem %s0, %s245
        %s247 = smul.u32 8, %s20
      $region32: #{basic_conv.1} parent=27 // pred_fallthru
        _
      // Predicated region
      $region33: #{basic_conv.1} parent=27 // pred_check
        %p248 = pneg %p82
      $region34: #{basic_conv.1} parent=27 // pred_check_branch
        %250 = sbr.rel (%p248) target = $region36
      $region35: #{basic_conv.1} parent=27 // pred_region
        %s251 = sadd.s32 %s20, 1
        %s252 = smul.u32 8, %s251
        %p253 = scmp.lt.s32.totalorder %s19, 1
        %s254 = scalar_select %p253, %s19, 1
        %p255 = scmp.lt.s32.totalorder %s252, 23
        %s256 = scalar_select %p255, %s252, 23
        %s257 = smul.addr %s256, 3
        %s258 = smul.addr %s254, 72
        %s259 = sadd.s32 %s257, %s258
        %s260 = smul.addr %s259, 4
        %s261 = scalar_lea.vmem %s1, %s260
        %s262 = sadd.s32 %s20, 1
        %s263 = smul.u32 8, %s262
      $region36: #{basic_conv.1} parent=27 // pred_fallthru
        _
    $region28: #{basic_conv.1} parent=5 // pred_fallthru
      _
    %p264 = scmp.le.s32.totalorder 1, %s11
    %p265 = scmp.lt.s32.totalorder %s11, 5
    %p266 = pnand %p264, %p265
    %p267 = pneg %p266
    // Predicated region
    $region37: #{basic_conv.1} parent=5 // pred_check
      _
    $region38: #{basic_conv.1} parent=5 // pred_check_branch
      %269 = sbr.rel (%p266) target = $region40
    $region39: #{basic_conv.1} parent=5 // pred_region
      %s270 = ssub.s32 %s11, 1
      %s271 = smul.u32 8, %s23
      %p272 = scmp.lt.s32.totalorder %s22, 1
      %s273 = scalar_select %p272, %s22, 1
      %p274 = scmp.lt.s32.totalorder %s271, 23
      %s275 = scalar_select %p274, %s271, 23
      %s276 = smul.addr %s275, 3
      %s277 = smul.addr %s273, 72
      %s278 = sadd.s32 %s276, %s277
      %s279 = smul.addr %s278, 4
      %s280 = scalar_lea.vmem %s0, %s279
      %p281 = pneg %p58
      %p282 = pneg %p55
      %s283 = sadd.s32 %s23, 1
      %s284 = smul.u32 8, %s283
      %p285 = scmp.lt.s32.totalorder %s22, 1
      %s286 = scalar_select %p285, %s22, 1
      %p287 = scmp.lt.s32.totalorder %s284, 23
      %s288 = scalar_select %p287, %s284, 23
      %s289 = smul.addr %s288, 3
      %s290 = smul.addr %s286, 72
      %s291 = sadd.s32 %s289, %s290
      %s292 = smul.addr %s291, 4
      %s293 = scalar_lea.vmem %s1, %s292
      %p294 = pneg %p88
      %p295 = pneg %p85
      %p296 = scmp.lt.s32.totalorder %s21, 0
      %s297 = scalar_select %p296, %s21, 0
      %s298 = smul.addr %s297, 2
      %s299 = scalar_lea.vmem %s2, %s298
      %p300 = pneg %p114
      %p301 = pneg %p111
      %p302 = scmp.lt.s32.totalorder %s21, 0
      %s303 = scalar_select %p302, %s21, 0
      %s304 = scalar_lea.vmem %s3, %s303
      %p305 = pneg %p140
      %p306 = pneg %p137
      %p307 = scmp.lt.s32.totalorder %s21, 0
      %s308 = scalar_select %p307, %s21, 0
      %s309 = scalar_lea.vmem %s4, %s308
      %p310 = pneg %p166
      %p311 = pneg %p163
      %p312 = pneg %p196
      %p313 = pneg %p193
      %s314 = smul.u32 8, %s23
      %p315 = scmp.lt.s32.totalorder %s22, 1
      %s316 = scalar_select %p315, %s22, 1
      %p317 = scmp.lt.s32.totalorder %s314, 15
      %s318 = scalar_select %p317, %s314, 15
      %p319 = scmp.lt.s32.totalorder %s21, 0
      %s320 = scalar_select %p319, %s21, 0
      %s321 = smul.addr %s318, 2
      %s322 = sadd.s32 %s320, %s321
      %s323 = smul.addr %s316, 32
      %s324 = sadd.s32 %s322, %s323
      %s325 = smul.addr %s324, 8
      %s326 = scalar_lea.vmem %s5, %s325
      %s327 = smul.u32 8, %s23
      %p328 = scmp.lt.s32.totalorder %s22, 1
      %s329 = scalar_select %p328, %s22, 1
      %p330 = scmp.lt.s32.totalorder %s327, 23
      %s331 = scalar_select %p330, %s327, 23
      %s332 = smul.addr %s331, 3
      %s333 = smul.addr %s329, 72
      %s334 = sadd.s32 %s332, %s333
      %s335 = smul.addr %s334, 4
      %s336 = scalar_lea.vmem %s0, %s335
      %s337 = smul.u32 8, %s23
      %s338 = sadd.s32 %s23, 1
      %s339 = smul.u32 8, %s338
      %p340 = scmp.lt.s32.totalorder %s22, 1
      %s341 = scalar_select %p340, %s22, 1
      %p342 = scmp.lt.s32.totalorder %s339, 23
      %s343 = scalar_select %p342, %s339, 23
      %s344 = smul.addr %s343, 3
      %s345 = smul.addr %s341, 72
      %s346 = sadd.s32 %s344, %s345
      %s347 = smul.addr %s346, 4
      %s348 = scalar_lea.vmem %s1, %s347
      %s349 = sadd.s32 %s23, 1
      %s350 = smul.u32 8, %s349
      %p351 = scmp.lt.s32.totalorder %s21, 0
      %s352 = scalar_select %p351, %s21, 0
      %s353 = smul.addr %s352, 2
      %s354 = scalar_lea.vmem %s2, %s353
      %p355 = scmp.lt.s32.totalorder %s21, 0
      %s356 = scalar_select %p355, %s21, 0
      %s357 = scalar_lea.vmem %s3, %s356
      %p358 = scmp.lt.s32.totalorder %s21, 0
      %s359 = scalar_select %p358, %s21, 0
      %s360 = scalar_lea.vmem %s4, %s359
      %s361 = smul.u32 8, %s23
      %p362 = scmp.lt.s32.totalorder %s22, 1
      %s363 = scalar_select %p362, %s22, 1
      %p364 = scmp.lt.s32.totalorder %s361, 15
      %s365 = scalar_select %p364, %s361, 15
      %p366 = scmp.lt.s32.totalorder %s21, 0
      %s367 = scalar_select %p366, %s21, 0
      %s368 = smul.addr %s365, 2
      %s369 = sadd.s32 %s367, %s368
      %s370 = smul.addr %s363, 32
      %s371 = sadd.s32 %s369, %s370
      %s372 = smul.addr %s371, 8
      %s373 = scalar_lea.vmem %s5, %s372
      %s374 = smul.u32 8, %s23
      %v376 = vld [vmem:[%s357] sm:$0x1]
      %v377 = vld [vmem:[%s360] sm:$0x1]
      %v378 = vld [vmem:[%s336] sm:$0xf]
      %v379 = vld [vmem:[%s336 + $0x4] sm:$0xf]
      %v380 = vld [vmem:[%s354] sm:$0x3]
      %v381 = vld [vmem:[%s336 + $0x8] sm:$0x1]
      %s382 = scalar_lea.vmem %s354, 2
      %v383 = vld [vmem:[%s382] sm:$0x3]
      %v387 = vunpack.c.l.b16 %v378
      %v388 = vunpack.c.l.b16 %v379
      %v389 = vunpack.c.l.b16 %v381
      %v390 = vpack.c.b16 %v388, %v387
      %v391 = vpack.c.b16 %v389, %v389
      %vm392 = vsmask.f32 7424
      %v394 = vshrl.u32 %v390, 16
      %v396 = vshll.u32 %v390, 16
      %v398 = vrot.slane %v396, 1
      %v399 = vor.u32 %v394, %v398
      %v401 = vshll.u32 %v391, 16
      %v403 = vrot.slane %v401, 1
      %v404 = vsel %vm392, %v399, %v403
      %vm405 = vcmask 31744
      %v407 = vsel %vm405, %v404, 0
      %vm409 = vcmask 1041408
      %v411 = vsel %vm409, %v383, 0
      %413 = vmatpush.bf16.msra.mxu0 0
      %414 = vmatpush.bf16.msra.mxu0 0
      %415 = vmatpush.bf16.msra.mxu0 0
      %416 = vmatpush.bf16.msra.mxu0 0
      %417 = vmatpush.bf16.msra.mxu0 0
      %418 = vmatpush.bf16.msra.mxu0 0
      %419 = vmatpush.bf16.msra.mxu0 0
      %420 = vmatpush.bf16.msra.mxu0 %v411
      %421 = vmatmul.bf16.gmra.mxu0 %v407
      %v422 = vpop.f32.mrf.mxu0
      %v423 = vadd.f32 0.0, %v422
      %v424 = vpop.f32.mrf.mxu0
      %v425 = vadd.f32 0.0, %v424
      %426 = vdwg.mxu0
      %v427 = vsel %vm405, %v390, 0
      %v430 = vsel %vm409, %v380, 0
      %432 = vmatpush.bf16.msra.mxu0 0
      %433 = vmatpush.bf16.msra.mxu0 0
      %434 = vmatpush.bf16.msra.mxu0 0
      %435 = vmatpush.bf16.msra.mxu0 0
      %436 = vmatpush.bf16.msra.mxu0 0
      %437 = vmatpush.bf16.msra.mxu0 0
      %438 = vmatpush.bf16.msra.mxu0 0
      %439 = vmatpush.bf16.msra.mxu0 %v430
      %440 = vmatmul.bf16.gmra.mxu0 %v427
      %v441 = vpop.f32.mrf.mxu0
      %v442 = vadd.f32 %v423, %v441
      %v443 = vpop.f32.mrf.mxu0
      %v444 = vadd.f32 %v425, %v443
      %445 = vdwg.mxu0
      %v446 = vld [vmem:[%s336] sm:$0xe]
      %s447 = scalar_lea.vmem %s354, 4
      %v448 = vld [vmem:[%s447] sm:$0x3]
      %v450 = vunpack.c.l.b16 %v446
      %v451 = vpack.c.b16 %v388, %v450
      %vm452 = vcmask 1046528
      %v453 = vrot.slane %v451, 1
      %v454 = vrot.slane %v391, 1
      %v455 = vsel %vm452, %v453, %v454
      %v457 = vsel %vm405, %v455, 0
      %v460 = vsel %vm409, %v448, 0
      %462 = vmatpush.bf16.msra.mxu0 0
      %463 = vmatpush.bf16.msra.mxu0 0
      %464 = vmatpush.bf16.msra.mxu0 0
      %465 = vmatpush.bf16.msra.mxu0 0
      %466 = vmatpush.bf16.msra.mxu0 0
      %467 = vmatpush.bf16.msra.mxu0 0
      %468 = vmatpush.bf16.msra.mxu0 0
      %469 = vmatpush.bf16.msra.mxu0 %v460
      %470 = vmatmul.bf16.gmra.mxu0 %v457
      %v471 = vpop.f32.mrf.mxu0
      %v472 = vadd.f32 0.0, %v471
      %v473 = vpop.f32.mrf.mxu0
      %v474 = vadd.f32 0.0, %v473
      %475 = vdwg.mxu0
      %v476 = vadd.f32 %v442, %v472
      %v477 = vadd.f32 %v444, %v474
      %s478 = scalar_lea.vmem %s336, 12
      %v479 = vld [vmem:[%s478] sm:$0xf]
      %v480 = vld [vmem:[%s478 + $0x4] sm:$0xf]
      %s481 = scalar_lea.vmem %s354, 6
      %v482 = vld [vmem:[%s481] sm:$0x3]
      %v485 = vunpack.c.l.b16 %v479
      %v486 = vunpack.c.l.b16 %v480
      %v487 = vpack.c.b16 %v486, %v485
      %v489 = vsel %vm405, %v487, 0
      %v492 = vsel %vm409, %v482, 0
      %494 = vmatpush.bf16.msra.mxu0 0
      %495 = vmatpush.bf16.msra.mxu0 0
      %496 = vmatpush.bf16.msra.mxu0 0
      %497 = vmatpush.bf16.msra.mxu0 0
      %498 = vmatpush.bf16.msra.mxu0 0
      %499 = vmatpush.bf16.msra.mxu0 0
      %500 = vmatpush.bf16.msra.mxu0 0
      %501 = vmatpush.bf16.msra.mxu0 %v492
      %502 = vmatmul.bf16.gmra.mxu0 %v489
      %v503 = vpop.f32.mrf.mxu0
      %v504 = vadd.f32 0.0, %v503
      %v505 = vpop.f32.mrf.mxu0
      %v506 = vadd.f32 0.0, %v505
      %507 = vdwg.mxu0
      %v508 = vadd.f32 %v476, %v504
      %v509 = vadd.f32 %v477, %v506
      %v510 = vld [vmem:[%s478] sm:$0xf]
      %v511 = vld [vmem:[%s478 + $0x4] sm:$0xf]
      %v512 = vld [vmem:[%s478 + $0x8] sm:$0x1]
      %s513 = scalar_lea.vmem %s354, 8
      %v514 = vld [vmem:[%s513] sm:$0x3]
      %v518 = vunpack.c.l.b16 %v510
      %v519 = vunpack.c.l.b16 %v511
      %v520 = vunpack.c.l.b16 %v512
      %v521 = vpack.c.b16 %v519, %v518
      %v522 = vpack.c.b16 %v520, %v520
      %v524 = vshrl.u32 %v521, 16
      %v526 = vshll.u32 %v521, 16
      %v528 = vrot.slane %v526, 1
      %v529 = vor.u32 %v524, %v528
      %v531 = vshll.u32 %v522, 16
      %v533 = vrot.slane %v531, 1
      %v534 = vsel %vm392, %v529, %v533
      %v536 = vsel %vm405, %v534, 0
      %v539 = vsel %vm409, %v514, 0
      %541 = vmatpush.bf16.msra.mxu0 0
      %542 = vmatpush.bf16.msra.mxu0 0
      %543 = vmatpush.bf16.msra.mxu0 0
      %544 = vmatpush.bf16.msra.mxu0 0
      %545 = vmatpush.bf16.msra.mxu0 0
      %546 = vmatpush.bf16.msra.mxu0 0
      %547 = vmatpush.bf16.msra.mxu0 0
      %548 = vmatpush.bf16.msra.mxu0 %v539
      %549 = vmatmul.bf16.gmra.mxu0 %v536
      %v550 = vpop.f32.mrf.mxu0
      %v551 = vadd.f32 0.0, %v550
      %v552 = vpop.f32.mrf.mxu0
      %v553 = vadd.f32 0.0, %v552
      %554 = vdwg.mxu0
      %v555 = vadd.f32 %v508, %v551
      %v556 = vadd.f32 %v509, %v553
      %v557 = vld [vmem:[%s478] sm:$0xe]
      %s558 = scalar_lea.vmem %s354, 10
      %v559 = vld [vmem:[%s558] sm:$0x3]
      %v561 = vunpack.c.l.b16 %v557
      %v562 = vpack.c.b16 %v519, %v561
      %v563 = vrot.slane %v562, 1
      %v564 = vrot.slane %v522, 1
      %v565 = vsel %vm452, %v563, %v564
      %v567 = vsel %vm405, %v565, 0
      %v570 = vsel %vm409, %v559, 0
      %572 = vmatpush.bf16.msra.mxu0 0
      %573 = vmatpush.bf16.msra.mxu0 0
      %574 = vmatpush.bf16.msra.mxu0 0
      %575 = vmatpush.bf16.msra.mxu0 0
      %576 = vmatpush.bf16.msra.mxu0 0
      %577 = vmatpush.bf16.msra.mxu0 0
      %578 = vmatpush.bf16.msra.mxu0 0
      %579 = vmatpush.bf16.msra.mxu0 %v570
      %580 = vmatmul.bf16.gmra.mxu0 %v567
      %v581 = vpop.f32.mrf.mxu0
      %v582 = vadd.f32 0.0, %v581
      %v583 = vpop.f32.mrf.mxu0
      %v584 = vadd.f32 0.0, %v583
      %585 = vdwg.mxu0
      %v586 = vadd.f32 %v555, %v582
      %v587 = vadd.f32 %v556, %v584
      %s588 = scalar_lea.vmem %s336, 24
      %v589 = vld [vmem:[%s588] sm:$0xf]
      %v590 = vld [vmem:[%s588 + $0x4] sm:$0xf]
      %s591 = scalar_lea.vmem %s354, 12
      %v592 = vld [vmem:[%s591] sm:$0x3]
      %v595 = vunpack.c.l.b16 %v589
      %v596 = vunpack.c.l.b16 %v590
      %v597 = vpack.c.b16 %v596, %v595
      %v599 = vsel %vm405, %v597, 0
      %v602 = vsel %vm409, %v592, 0
      %604 = vmatpush.bf16.msra.mxu0 0
      %605 = vmatpush.bf16.msra.mxu0 0
      %606 = vmatpush.bf16.msra.mxu0 0
      %607 = vmatpush.bf16.msra.mxu0 0
      %608 = vmatpush.bf16.msra.mxu0 0
      %609 = vmatpush.bf16.msra.mxu0 0
      %610 = vmatpush.bf16.msra.mxu0 0
      %611 = vmatpush.bf16.msra.mxu0 %v602
      %612 = vmatmul.bf16.gmra.mxu0 %v599
      %v613 = vpop.f32.mrf.mxu0
      %v614 = vadd.f32 0.0, %v613
      %v615 = vpop.f32.mrf.mxu0
      %v616 = vadd.f32 0.0, %v615
      %617 = vdwg.mxu0
      %v618 = vadd.f32 %v586, %v614
      %v619 = vadd.f32 %v587, %v616
      %v620 = vld [vmem:[%s588] sm:$0xf]
      %v621 = vld [vmem:[%s588 + $0x4] sm:$0xf]
      %v622 = vld [vmem:[%s588 + $0x8] sm:$0x1]
      %s623 = scalar_lea.vmem %s354, 14
      %v624 = vld [vmem:[%s623] sm:$0x3]
      %v628 = vunpack.c.l.b16 %v620
      %v629 = vunpack.c.l.b16 %v621
      %v630 = vunpack.c.l.b16 %v622
      %v631 = vpack.c.b16 %v629, %v628
      %v632 = vpack.c.b16 %v630, %v630
      %v634 = vshrl.u32 %v631, 16
      %v636 = vshll.u32 %v631, 16
      %v638 = vrot.slane %v636, 1
      %v639 = vor.u32 %v634, %v638
      %v641 = vshll.u32 %v632, 16
      %v643 = vrot.slane %v641, 1
      %v644 = vsel %vm392, %v639, %v643
      %v646 = vsel %vm405, %v644, 0
      %v649 = vsel %vm409, %v624, 0
      %651 = vmatpush.bf16.msra.mxu0 0
      %652 = vmatpush.bf16.msra.mxu0 0
      %653 = vmatpush.bf16.msra.mxu0 0
      %654 = vmatpush.bf16.msra.mxu0 0
      %655 = vmatpush.bf16.msra.mxu0 0
      %656 = vmatpush.bf16.msra.mxu0 0
      %657 = vmatpush.bf16.msra.mxu0 0
      %658 = vmatpush.bf16.msra.mxu0 %v649
      %659 = vmatmul.bf16.gmra.mxu0 %v646
      %v660 = vpop.f32.mrf.mxu0
      %v661 = vadd.f32 0.0, %v660
      %v662 = vpop.f32.mrf.mxu0
      %v663 = vadd.f32 0.0, %v662
      %664 = vdwg.mxu0
      %v665 = vadd.f32 %v618, %v661
      %v666 = vadd.f32 %v619, %v663
      %v667 = vld [vmem:[%s588] sm:$0xe]
      %s668 = scalar_lea.vmem %s354, 16
      %v669 = vld [vmem:[%s668] sm:$0x3]
      %v671 = vunpack.c.l.b16 %v667
      %v672 = vpack.c.b16 %v629, %v671
      %v673 = vrot.slane %v672, 1
      %v674 = vrot.slane %v632, 1
      %v675 = vsel %vm452, %v673, %v674
      %v677 = vsel %vm405, %v675, 0
      %v680 = vsel %vm409, %v669, 0
      %682 = vmatpush.bf16.msra.mxu0 0
      %683 = vmatpush.bf16.msra.mxu0 0
      %684 = vmatpush.bf16.msra.mxu0 0
      %685 = vmatpush.bf16.msra.mxu0 0
      %686 = vmatpush.bf16.msra.mxu0 0
      %687 = vmatpush.bf16.msra.mxu0 0
      %688 = vmatpush.bf16.msra.mxu0 0
      %689 = vmatpush.bf16.msra.mxu0 %v680
      %690 = vmatmul.bf16.gmra.mxu0 %v677
      %v691 = vpop.f32.mrf.mxu0
      %v692 = vadd.f32 0.0, %v691
      %v693 = vpop.f32.mrf.mxu0
      %v694 = vadd.f32 0.0, %v693
      %695 = vdwg.mxu0
      %v696 = vadd.f32 %v665, %v692
      %v697 = vadd.f32 %v666, %v694
      %v699 = vperm.slane %v376, 0
      %v701 = vmul.f32 %v696, %v699
      %v702 = vmul.f32 %v697, %v699
      %v704 = vperm.slane %v377, 0
      %v706 = vadd.f32 %v701, %v704
      %v707 = vadd.f32 %v702, %v704
      %v708 = vxor.u32 %v706, 2147483648
      %v709 = vxor.u32 %v707, 2147483648
      %v710 = vmul.f32 %v708, 1.442695
      %v711 = vpow.pop %v710
      %v712 = vmul.f32 %v709, 1.442695
      %v713 = vpow.pop %v712
      %v714 = vadd.f32 %v711, 1.0
      %v715 = vadd.f32 %v713, 1.0
      %v716 = vrcp.pop %v714
      %v717 = vmul.f32 %v714, %v716
      %v718 = vsub.f32 1.0, %v717
      %v719 = vmul.f32 %v716, %v718
      %v720 = vadd.f32 %v716, %v719
      %vm721 = vweird.f32 %v714
      %vm722 = vweird.f32 %v716
      %vm723 = vmor %vm721, %vm722
      %v724 = vsel %vm723, %v716, %v720
      %v725 = vand.u32 2147483647, %v714
      %vm726 = vcmp.eq.f32.partialorder %v725, 8.507059e+37
      %v727 = vand.u32 %v714, 2147483648
      %v728 = vor.u32 1.1754944e-38, %v727
      %v729 = vsel %vm726, %v728, %v724
      %v730 = vmul.f32 1.0, %v729
      %v731 = vrcp.pop %v715
      %v732 = vmul.f32 %v715, %v731
      %v733 = vsub.f32 1.0, %v732
      %v734 = vmul.f32 %v731, %v733
      %v735 = vadd.f32 %v731, %v734
      %vm736 = vweird.f32 %v715
      %vm737 = vweird.f32 %v731
      %vm738 = vmor %vm736, %vm737
      %v739 = vsel %vm738, %v731, %v735
      %v740 = vand.u32 2147483647, %v715
      %vm741 = vcmp.eq.f32.partialorder %v740, 8.507059e+37
      %v742 = vand.u32 %v715, 2147483648
      %v743 = vor.u32 1.1754944e-38, %v742
      %v744 = vsel %vm741, %v743, %v739
      %v745 = vmul.f32 1.0, %v744
      %v746 = vmul.f32 %v706, %v730
      %v747 = vmul.f32 %v707, %v745
      %748 = vst [vmem:[%s373] sm:$0xff] %v746
      %749 = vst [vmem:[%s373 + $0x8] sm:$0xff] %v747
      %v750 = vld [vmem:[%s478] sm:$0xf]
      %v751 = vld [vmem:[%s478 + $0x4] sm:$0xf]
      %v752 = vld [vmem:[%s354] sm:$0x3]
      %v753 = vld [vmem:[%s478 + $0x8] sm:$0x1]
      %v754 = vld [vmem:[%s382] sm:$0x3]
      %v758 = vunpack.c.l.b16 %v750
      %v759 = vunpack.c.l.b16 %v751
      %v760 = vunpack.c.l.b16 %v753
      %v761 = vpack.c.b16 %v759, %v758
      %v762 = vpack.c.b16 %v760, %v760
      %v764 = vshrl.u32 %v761, 16
      %v766 = vshll.u32 %v761, 16
      %v768 = vrot.slane %v766, 1
      %v769 = vor.u32 %v764, %v768
      %v771 = vshll.u32 %v762, 16
      %v773 = vrot.slane %v771, 1
      %v774 = vsel %vm392, %v769, %v773
      %v776 = vsel %vm405, %v774, 0
      %v779 = vsel %vm409, %v754, 0
      %781 = vmatpush.bf16.msra.mxu0 0
      %782 = vmatpush.bf16.msra.mxu0 0
      %783 = vmatpush.bf16.msra.mxu0 0
      %784 = vmatpush.bf16.msra.mxu0 0
      %785 = vmatpush.bf16.msra.mxu0 0
      %786 = vmatpush.bf16.msra.mxu0 0
      %787 = vmatpush.bf16.msra.mxu0 0
      %788 = vmatpush.bf16.msra.mxu0 %v779
      %789 = vmatmul.bf16.gmra.mxu0 %v776
      %v790 = vpop.f32.mrf.mxu0
      %v791 = vadd.f32 0.0, %v790
      %v792 = vpop.f32.mrf.mxu0
      %v793 = vadd.f32 0.0, %v792
      %794 = vdwg.mxu0
      %v795 = vsel %vm405, %v761, 0
      %v798 = vsel %vm409, %v752, 0
      %800 = vmatpush.bf16.msra.mxu0 0
      %801 = vmatpush.bf16.msra.mxu0 0
      %802 = vmatpush.bf16.msra.mxu0 0
      %803 = vmatpush.bf16.msra.mxu0 0
      %804 = vmatpush.bf16.msra.mxu0 0
      %805 = vmatpush.bf16.msra.mxu0 0
      %806 = vmatpush.bf16.msra.mxu0 0
      %807 = vmatpush.bf16.msra.mxu0 %v798
      %808 = vmatmul.bf16.gmra.mxu0 %v795
      %v809 = vpop.f32.mrf.mxu0
      %v810 = vadd.f32 %v791, %v809
      %v811 = vpop.f32.mrf.mxu0
      %v812 = vadd.f32 %v793, %v811
      %813 = vdwg.mxu0
      %v814 = vld [vmem:[%s478] sm:$0xe]
      %v815 = vld [vmem:[%s447] sm:$0x3]
      %v817 = vunpack.c.l.b16 %v814
      %v818 = vpack.c.b16 %v759, %v817
      %v819 = vrot.slane %v818, 1
      %v820 = vrot.slane %v762, 1
      %v821 = vsel %vm452, %v819, %v820
      %v823 = vsel %vm405, %v821, 0
      %v826 = vsel %vm409, %v815, 0
      %828 = vmatpush.bf16.msra.mxu0 0
      %829 = vmatpush.bf16.msra.mxu0 0
      %830 = vmatpush.bf16.msra.mxu0 0
      %831 = vmatpush.bf16.msra.mxu0 0
      %832 = vmatpush.bf16.msra.mxu0 0
      %833 = vmatpush.bf16.msra.mxu0 0
      %834 = vmatpush.bf16.msra.mxu0 0
      %835 = vmatpush.bf16.msra.mxu0 %v826
      %836 = vmatmul.bf16.gmra.mxu0 %v823
      %v837 = vpop.f32.mrf.mxu0
      %v838 = vadd.f32 0.0, %v837
      %v839 = vpop.f32.mrf.mxu0
      %v840 = vadd.f32 0.0, %v839
      %841 = vdwg.mxu0
      %v842 = vadd.f32 %v810, %v838
      %v843 = vadd.f32 %v812, %v840
      %v844 = vld [vmem:[%s588] sm:$0xf]
      %v845 = vld [vmem:[%s588 + $0x4] sm:$0xf]
      %v846 = vld [vmem:[%s481] sm:$0x3]
      %v849 = vunpack.c.l.b16 %v844
      %v850 = vunpack.c.l.b16 %v845
      %v851 = vpack.c.b16 %v850, %v849
      %v853 = vsel %vm405, %v851, 0
      %v856 = vsel %vm409, %v846, 0
      %858 = vmatpush.bf16.msra.mxu0 0
      %859 = vmatpush.bf16.msra.mxu0 0
      %860 = vmatpush.bf16.msra.mxu0 0
      %861 = vmatpush.bf16.msra.mxu0 0
      %862 = vmatpush.bf16.msra.mxu0 0
      %863 = vmatpush.bf16.msra.mxu0 0
      %864 = vmatpush.bf16.msra.mxu0 0
      %865 = vmatpush.bf16.msra.mxu0 %v856
      %866 = vmatmul.bf16.gmra.mxu0 %v853
      %v867 = vpop.f32.mrf.mxu0
      %v868 = vadd.f32 0.0, %v867
      %v869 = vpop.f32.mrf.mxu0
      %v870 = vadd.f32 0.0, %v869
      %871 = vdwg.mxu0
      %v872 = vadd.f32 %v842, %v868
      %v873 = vadd.f32 %v843, %v870
      %v874 = vld [vmem:[%s588] sm:$0xf]
      %v875 = vld [vmem:[%s588 + $0x4] sm:$0xf]
      %v876 = vld [vmem:[%s588 + $0x8] sm:$0x1]
      %v877 = vld [vmem:[%s513] sm:$0x3]
      %v881 = vunpack.c.l.b16 %v874
      %v882 = vunpack.c.l.b16 %v875
      %v883 = vunpack.c.l.b16 %v876
      %v884 = vpack.c.b16 %v882, %v881
      %v885 = vpack.c.b16 %v883, %v883
      %v887 = vshrl.u32 %v884, 16
      %v889 = vshll.u32 %v884, 16
      %v891 = vrot.slane %v889, 1
      %v892 = vor.u32 %v887, %v891
      %v894 = vshll.u32 %v885, 16
      %v896 = vrot.slane %v894, 1
      %v897 = vsel %vm392, %v892, %v896
      %v899 = vsel %vm405, %v897, 0
      %v902 = vsel %vm409, %v877, 0
      %904 = vmatpush.bf16.msra.mxu0 0
      %905 = vmatpush.bf16.msra.mxu0 0
      %906 = vmatpush.bf16.msra.mxu0 0
      %907 = vmatpush.bf16.msra.mxu0 0
      %908 = vmatpush.bf16.msra.mxu0 0
      %909 = vmatpush.bf16.msra.mxu0 0
      %910 = vmatpush.bf16.msra.mxu0 0
      %911 = vmatpush.bf16.msra.mxu0 %v902
      %912 = vmatmul.bf16.gmra.mxu0 %v899
      %v913 = vpop.f32.mrf.mxu0
      %v914 = vadd.f32 0.0, %v913
      %v915 = vpop.f32.mrf.mxu0
      %v916 = vadd.f32 0.0, %v915
      %917 = vdwg.mxu0
      %v918 = vadd.f32 %v872, %v914
      %v919 = vadd.f32 %v873, %v916
      %v920 = vld [vmem:[%s588] sm:$0xe]
      %v921 = vld [vmem:[%s558] sm:$0x3]
      %v923 = vunpack.c.l.b16 %v920
      %v924 = vpack.c.b16 %v882, %v923
      %v925 = vrot.slane %v924, 1
      %v926 = vrot.slane %v885, 1
      %v927 = vsel %vm452, %v925, %v926
      %v929 = vsel %vm405, %v927, 0
      %v932 = vsel %vm409, %v921, 0
      %934 = vmatpush.bf16.msra.mxu0 0
      %935 = vmatpush.bf16.msra.mxu0 0
      %936 = vmatpush.bf16.msra.mxu0 0
      %937 = vmatpush.bf16.msra.mxu0 0
      %938 = vmatpush.bf16.msra.mxu0 0
      %939 = vmatpush.bf16.msra.mxu0 0
      %940 = vmatpush.bf16.msra.mxu0 0
      %941 = vmatpush.bf16.msra.mxu0 %v932
      %942 = vmatmul.bf16.gmra.mxu0 %v929
      %v943 = vpop.f32.mrf.mxu0
      %v944 = vadd.f32 0.0, %v943
      %v945 = vpop.f32.mrf.mxu0
      %v946 = vadd.f32 0.0, %v945
      %947 = vdwg.mxu0
      %v948 = vadd.f32 %v918, %v944
      %v949 = vadd.f32 %v919, %v946
      %s950 = scalar_lea.vmem %s336, 36
      %v951 = vld [vmem:[%s950] sm:$0xf]
      %v952 = vld [vmem:[%s950 + $0x4] sm:$0xf]
      %v953 = vld [vmem:[%s591] sm:$0x3]
      %v956 = vunpack.c.l.b16 %v951
      %v957 = vunpack.c.l.b16 %v952
      %v958 = vpack.c.b16 %v957, %v956
      %v960 = vsel %vm405, %v958, 0
      %v963 = vsel %vm409, %v953, 0
      %965 = vmatpush.bf16.msra.mxu0 0
      %966 = vmatpush.bf16.msra.mxu0 0
      %967 = vmatpush.bf16.msra.mxu0 0
      %968 = vmatpush.bf16.msra.mxu0 0
      %969 = vmatpush.bf16.msra.mxu0 0
      %970 = vmatpush.bf16.msra.mxu0 0
      %971 = vmatpush.bf16.msra.mxu0 0
      %972 = vmatpush.bf16.msra.mxu0 %v963
      %973 = vmatmul.bf16.gmra.mxu0 %v960
      %v974 = vpop.f32.mrf.mxu0
      %v975 = vadd.f32 0.0, %v974
      %v976 = vpop.f32.mrf.mxu0
      %v977 = vadd.f32 0.0, %v976
      %978 = vdwg.mxu0
      %v979 = vadd.f32 %v948, %v975
      %v980 = vadd.f32 %v949, %v977
      %v981 = vld [vmem:[%s950] sm:$0xf]
      %v982 = vld [vmem:[%s950 + $0x4] sm:$0xf]
      %v983 = vld [vmem:[%s950 + $0x8] sm:$0x1]
      %v984 = vld [vmem:[%s623] sm:$0x3]
      %v988 = vunpack.c.l.b16 %v981
      %v989 = vunpack.c.l.b16 %v982
      %v990 = vunpack.c.l.b16 %v983
      %v991 = vpack.c.b16 %v989, %v988
      %v992 = vpack.c.b16 %v990, %v990
      %v994 = vshrl.u32 %v991, 16
      %v996 = vshll.u32 %v991, 16
      %v998 = vrot.slane %v996, 1
      %v999 = vor.u32 %v994, %v998
      %v1001 = vshll.u32 %v992, 16
      %v1003 = vrot.slane %v1001, 1
      %v1004 = vsel %vm392, %v999, %v1003
      %v1006 = vsel %vm405, %v1004, 0
      %v1009 = vsel %vm409, %v984, 0
      %1011 = vmatpush.bf16.msra.mxu0 0
      %1012 = vmatpush.bf16.msra.mxu0 0
      %1013 = vmatpush.bf16.msra.mxu0 0
      %1014 = vmatpush.bf16.msra.mxu0 0
      %1015 = vmatpush.bf16.msra.mxu0 0
      %1016 = vmatpush.bf16.msra.mxu0 0
      %1017 = vmatpush.bf16.msra.mxu0 0
      %1018 = vmatpush.bf16.msra.mxu0 %v1009
      %1019 = vmatmul.bf16.gmra.mxu0 %v1006
      %v1020 = vpop.f32.mrf.mxu0
      %v1021 = vadd.f32 0.0, %v1020
      %v1022 = vpop.f32.mrf.mxu0
      %v1023 = vadd.f32 0.0, %v1022
      %1024 = vdwg.mxu0
      %v1025 = vadd.f32 %v979, %v1021
      %v1026 = vadd.f32 %v980, %v1023
      %v1027 = vld [vmem:[%s950] sm:$0xe]
      %v1028 = vld [vmem:[%s668] sm:$0x3]
      %v1030 = vunpack.c.l.b16 %v1027
      %v1031 = vpack.c.b16 %v989, %v1030
      %v1032 = vrot.slane %v1031, 1
      %v1033 = vrot.slane %v992, 1
      %v1034 = vsel %vm452, %v1032, %v1033
      %v1036 = vsel %vm405, %v1034, 0
      %v1039 = vsel %vm409, %v1028, 0
      %1041 = vmatpush.bf16.msra.mxu0 0
      %1042 = vmatpush.bf16.msra.mxu0 0
      %1043 = vmatpush.bf16.msra.mxu0 0
      %1044 = vmatpush.bf16.msra.mxu0 0
      %1045 = vmatpush.bf16.msra.mxu0 0
      %1046 = vmatpush.bf16.msra.mxu0 0
      %1047 = vmatpush.bf16.msra.mxu0 0
      %1048 = vmatpush.bf16.msra.mxu0 %v1039
      %1049 = vmatmul.bf16.gmra.mxu0 %v1036
      %v1050 = vpop.f32.mrf.mxu0
      %v1051 = vadd.f32 0.0, %v1050
      %v1052 = vpop.f32.mrf.mxu0
      %v1053 = vadd.f32 0.0, %v1052
      %1054 = vdwg.mxu0
      %v1055 = vadd.f32 %v1025, %v1051
      %v1056 = vadd.f32 %v1026, %v1053
      %v1057 = vmul.f32 %v1055, %v699
      %v1058 = vmul.f32 %v1056, %v699
      %v1059 = vadd.f32 %v1057, %v704
      %v1060 = vadd.f32 %v1058, %v704
      %v1061 = vxor.u32 %v1059, 2147483648
      %v1062 = vxor.u32 %v1060, 2147483648
      %v1063 = vmul.f32 %v1061, 1.442695
      %v1064 = vpow.pop %v1063
      %v1065 = vmul.f32 %v1062, 1.442695
      %v1066 = vpow.pop %v1065
      %v1067 = vadd.f32 %v1064, 1.0
      %v1068 = vadd.f32 %v1066, 1.0
      %v1069 = vrcp.pop %v1067
      %v1070 = vmul.f32 %v1067, %v1069
      %v1071 = vsub.f32 1.0, %v1070
      %v1072 = vmul.f32 %v1069, %v1071
      %v1073 = vadd.f32 %v1069, %v1072
      %vm1074 = vweird.f32 %v1067
      %vm1075 = vweird.f32 %v1069
      %vm1076 = vmor %vm1074, %vm1075
      %v1077 = vsel %vm1076, %v1069, %v1073
      %v1078 = vand.u32 2147483647, %v1067
      %vm1079 = vcmp.eq.f32.partialorder %v1078, 8.507059e+37
      %v1080 = vand.u32 %v1067, 2147483648
      %v1081 = vor.u32 1.1754944e-38, %v1080
      %v1082 = vsel %vm1079, %v1081, %v1077
      %v1083 = vmul.f32 1.0, %v1082
      %v1084 = vrcp.pop %v1068
      %v1085 = vmul.f32 %v1068, %v1084
      %v1086 = vsub.f32 1.0, %v1085
      %v1087 = vmul.f32 %v1084, %v1086
      %v1088 = vadd.f32 %v1084, %v1087
      %vm1089 = vweird.f32 %v1068
      %vm1090 = vweird.f32 %v1084
      %vm1091 = vmor %vm1089, %vm1090
      %v1092 = vsel %vm1091, %v1084, %v1088
      %v1093 = vand.u32 2147483647, %v1068
      %vm1094 = vcmp.eq.f32.partialorder %v1093, 8.507059e+37
      %v1095 = vand.u32 %v1068, 2147483648
      %v1096 = vor.u32 1.1754944e-38, %v1095
      %v1097 = vsel %vm1094, %v1096, %v1092
      %v1098 = vmul.f32 1.0, %v1097
      %v1099 = vmul.f32 %v1059, %v1083
      %v1100 = vmul.f32 %v1060, %v1098
      %s1101 = scalar_lea.vmem %s373, 16
      %1102 = vst [vmem:[%s1101] sm:$0xff] %v1099
      %1103 = vst [vmem:[%s1101 + $0x8] sm:$0xff] %v1100
      %v1104 = vld [vmem:[%s588] sm:$0xf]
      %v1105 = vld [vmem:[%s588 + $0x4] sm:$0xf]
      %v1106 = vld [vmem:[%s354] sm:$0x3]
      %v1107 = vld [vmem:[%s588 + $0x8] sm:$0x1]
      %v1108 = vld [vmem:[%s382] sm:$0x3]
      %v1112 = vunpack.c.l.b16 %v1104
      %v1113 = vunpack.c.l.b16 %v1105
      %v1114 = vunpack.c.l.b16 %v1107
      %v1115 = vpack.c.b16 %v1113, %v1112
      %v1116 = vpack.c.b16 %v1114, %v1114
      %v1118 = vshrl.u32 %v1115, 16
      %v1120 = vshll.u32 %v1115, 16
      %v1122 = vrot.slane %v1120, 1
      %v1123 = vor.u32 %v1118, %v1122
      %v1125 = vshll.u32 %v1116, 16
      %v1127 = vrot.slane %v1125, 1
      %v1128 = vsel %vm392, %v1123, %v1127
      %v1130 = vsel %vm405, %v1128, 0
      %v1133 = vsel %vm409, %v1108, 0
      %1135 = vmatpush.bf16.msra.mxu0 0
      %1136 = vmatpush.bf16.msra.mxu0 0
      %1137 = vmatpush.bf16.msra.mxu0 0
      %1138 = vmatpush.bf16.msra.mxu0 0
      %1139 = vmatpush.bf16.msra.mxu0 0
      %1140 = vmatpush.bf16.msra.mxu0 0
      %1141 = vmatpush.bf16.msra.mxu0 0
      %1142 = vmatpush.bf16.msra.mxu0 %v1133
      %1143 = vmatmul.bf16.gmra.mxu0 %v1130
      %v1144 = vpop.f32.mrf.mxu0
      %v1145 = vadd.f32 0.0, %v1144
      %v1146 = vpop.f32.mrf.mxu0
      %v1147 = vadd.f32 0.0, %v1146
      %1148 = vdwg.mxu0
      %v1149 = vsel %vm405, %v1115, 0
      %v1152 = vsel %vm409, %v1106, 0
      %1154 = vmatpush.bf16.msra.mxu0 0
      %1155 = vmatpush.bf16.msra.mxu0 0
      %1156 = vmatpush.bf16.msra.mxu0 0
      %1157 = vmatpush.bf16.msra.mxu0 0
      %1158 = vmatpush.bf16.msra.mxu0 0
      %1159 = vmatpush.bf16.msra.mxu0 0
      %1160 = vmatpush.bf16.msra.mxu0 0
      %1161 = vmatpush.bf16.msra.mxu0 %v1152
      %1162 = vmatmul.bf16.gmra.mxu0 %v1149
      %v1163 = vpop.f32.mrf.mxu0
      %v1164 = vadd.f32 %v1145, %v1163
      %v1165 = vpop.f32.mrf.mxu0
      %v1166 = vadd.f32 %v1147, %v1165
      %1167 = vdwg.mxu0
      %v1168 = vld [vmem:[%s588] sm:$0xe]
      %v1169 = vld [vmem:[%s447] sm:$0x3]
      %v1171 = vunpack.c.l.b16 %v1168
      %v1172 = vpack.c.b16 %v1113, %v1171
      %v1173 = vrot.slane %v1172, 1
      %v1174 = vrot.slane %v1116, 1
      %v1175 = vsel %vm452, %v1173, %v1174
      %v1177 = vsel %vm405, %v1175, 0
      %v1180 = vsel %vm409, %v1169, 0
      %1182 = vmatpush.bf16.msra.mxu0 0
      %1183 = vmatpush.bf16.msra.mxu0 0
      %1184 = vmatpush.bf16.msra.mxu0 0
      %1185 = vmatpush.bf16.msra.mxu0 0
      %1186 = vmatpush.bf16.msra.mxu0 0
      %1187 = vmatpush.bf16.msra.mxu0 0
      %1188 = vmatpush.bf16.msra.mxu0 0
      %1189 = vmatpush.bf16.msra.mxu0 %v1180
      %1190 = vmatmul.bf16.gmra.mxu0 %v1177
      %v1191 = vpop.f32.mrf.mxu0
      %v1192 = vadd.f32 0.0, %v1191
      %v1193 = vpop.f32.mrf.mxu0
      %v1194 = vadd.f32 0.0, %v1193
      %1195 = vdwg.mxu0
      %v1196 = vadd.f32 %v1164, %v1192
      %v1197 = vadd.f32 %v1166, %v1194
      %v1198 = vld [vmem:[%s950] sm:$0xf]
      %v1199 = vld [vmem:[%s950 + $0x4] sm:$0xf]
      %v1200 = vld [vmem:[%s481] sm:$0x3]
      %v1203 = vunpack.c.l.b16 %v1198
      %v1204 = vunpack.c.l.b16 %v1199
      %v1205 = vpack.c.b16 %v1204, %v1203
      %v1207 = vsel %vm405, %v1205, 0
      %v1210 = vsel %vm409, %v1200, 0
      %1212 = vmatpush.bf16.msra.mxu0 0
      %1213 = vmatpush.bf16.msra.mxu0 0
      %1214 = vmatpush.bf16.msra.mxu0 0
      %1215 = vmatpush.bf16.msra.mxu0 0
      %1216 = vmatpush.bf16.msra.mxu0 0
      %1217 = vmatpush.bf16.msra.mxu0 0
      %1218 = vmatpush.bf16.msra.mxu0 0
      %1219 = vmatpush.bf16.msra.mxu0 %v1210
      %1220 = vmatmul.bf16.gmra.mxu0 %v1207
      %v1221 = vpop.f32.mrf.mxu0
      %v1222 = vadd.f32 0.0, %v1221
      %v1223 = vpop.f32.mrf.mxu0
      %v1224 = vadd.f32 0.0, %v1223
      %1225 = vdwg.mxu0
      %v1226 = vadd.f32 %v1196, %v1222
      %v1227 = vadd.f32 %v1197, %v1224
      %v1228 = vld [vmem:[%s950] sm:$0xf]
      %v1229 = vld [vmem:[%s950 + $0x4] sm:$0xf]
      %v1230 = vld [vmem:[%s950 + $0x8] sm:$0x1]
      %v1231 = vld [vmem:[%s513] sm:$0x3]
      %v1235 = vunpack.c.l.b16 %v1228
      %v1236 = vunpack.c.l.b16 %v1229
      %v1237 = vunpack.c.l.b16 %v1230
      %v1238 = vpack.c.b16 %v1236, %v1235
      %v1239 = vpack.c.b16 %v1237, %v1237
      %v1241 = vshrl.u32 %v1238, 16
      %v1243 = vshll.u32 %v1238, 16
      %v1245 = vrot.slane %v1243, 1
      %v1246 = vor.u32 %v1241, %v1245
      %v1248 = vshll.u32 %v1239, 16
      %v1250 = vrot.slane %v1248, 1
      %v1251 = vsel %vm392, %v1246, %v1250
      %v1253 = vsel %vm405, %v1251, 0
      %v1256 = vsel %vm409, %v1231, 0
      %1258 = vmatpush.bf16.msra.mxu0 0
      %1259 = vmatpush.bf16.msra.mxu0 0
      %1260 = vmatpush.bf16.msra.mxu0 0
      %1261 = vmatpush.bf16.msra.mxu0 0
      %1262 = vmatpush.bf16.msra.mxu0 0
      %1263 = vmatpush.bf16.msra.mxu0 0
      %1264 = vmatpush.bf16.msra.mxu0 0
      %1265 = vmatpush.bf16.msra.mxu0 %v1256
      %1266 = vmatmul.bf16.gmra.mxu0 %v1253
      %v1267 = vpop.f32.mrf.mxu0
      %v1268 = vadd.f32 0.0, %v1267
      %v1269 = vpop.f32.mrf.mxu0
      %v1270 = vadd.f32 0.0, %v1269
      %1271 = vdwg.mxu0
      %v1272 = vadd.f32 %v1226, %v1268
      %v1273 = vadd.f32 %v1227, %v1270
      %v1274 = vld [vmem:[%s950] sm:$0xe]
      %v1275 = vld [vmem:[%s558] sm:$0x3]
      %v1277 = vunpack.c.l.b16 %v1274
      %v1278 = vpack.c.b16 %v1236, %v1277
      %v1279 = vrot.slane %v1278, 1
      %v1280 = vrot.slane %v1239, 1
      %v1281 = vsel %vm452, %v1279, %v1280
      %v1283 = vsel %vm405, %v1281, 0
      %v1286 = vsel %vm409, %v1275, 0
      %1288 = vmatpush.bf16.msra.mxu0 0
      %1289 = vmatpush.bf16.msra.mxu0 0
      %1290 = vmatpush.bf16.msra.mxu0 0
      %1291 = vmatpush.bf16.msra.mxu0 0
      %1292 = vmatpush.bf16.msra.mxu0 0
      %1293 = vmatpush.bf16.msra.mxu0 0
      %1294 = vmatpush.bf16.msra.mxu0 0
      %1295 = vmatpush.bf16.msra.mxu0 %v1286
      %1296 = vmatmul.bf16.gmra.mxu0 %v1283
      %v1297 = vpop.f32.mrf.mxu0
      %v1298 = vadd.f32 0.0, %v1297
      %v1299 = vpop.f32.mrf.mxu0
      %v1300 = vadd.f32 0.0, %v1299
      %1301 = vdwg.mxu0
      %v1302 = vadd.f32 %v1272, %v1298
      %v1303 = vadd.f32 %v1273, %v1300
      %s1304 = scalar_lea.vmem %s336, 48
      %v1305 = vld [vmem:[%s1304] sm:$0xf]
      %v1306 = vld [vmem:[%s1304 + $0x4] sm:$0xf]
      %v1307 = vld [vmem:[%s591] sm:$0x3]
      %v1310 = vunpack.c.l.b16 %v1305
      %v1311 = vunpack.c.l.b16 %v1306
      %v1312 = vpack.c.b16 %v1311, %v1310
      %v1314 = vsel %vm405, %v1312, 0
      %v1317 = vsel %vm409, %v1307, 0
      %1319 = vmatpush.bf16.msra.mxu0 0
      %1320 = vmatpush.bf16.msra.mxu0 0
      %1321 = vmatpush.bf16.msra.mxu0 0
      %1322 = vmatpush.bf16.msra.mxu0 0
      %1323 = vmatpush.bf16.msra.mxu0 0
      %1324 = vmatpush.bf16.msra.mxu0 0
      %1325 = vmatpush.bf16.msra.mxu0 0
      %1326 = vmatpush.bf16.msra.mxu0 %v1317
      %1327 = vmatmul.bf16.gmra.mxu0 %v1314
      %v1328 = vpop.f32.mrf.mxu0
      %v1329 = vadd.f32 0.0, %v1328
      %v1330 = vpop.f32.mrf.mxu0
      %v1331 = vadd.f32 0.0, %v1330
      %1332 = vdwg.mxu0
      %v1333 = vadd.f32 %v1302, %v1329
      %v1334 = vadd.f32 %v1303, %v1331
      %v1335 = vld [vmem:[%s1304] sm:$0xf]
      %v1336 = vld [vmem:[%s1304 + $0x4] sm:$0xf]
      %v1337 = vld [vmem:[%s1304 + $0x8] sm:$0x1]
      %v1338 = vld [vmem:[%s623] sm:$0x3]
      %v1342 = vunpack.c.l.b16 %v1335
      %v1343 = vunpack.c.l.b16 %v1336
      %v1344 = vunpack.c.l.b16 %v1337
      %v1345 = vpack.c.b16 %v1343, %v1342
      %v1346 = vpack.c.b16 %v1344, %v1344
      %v1348 = vshrl.u32 %v1345, 16
      %v1350 = vshll.u32 %v1345, 16
      %v1352 = vrot.slane %v1350, 1
      %v1353 = vor.u32 %v1348, %v1352
      %v1355 = vshll.u32 %v1346, 16
      %v1357 = vrot.slane %v1355, 1
      %v1358 = vsel %vm392, %v1353, %v1357
      %v1360 = vsel %vm405, %v1358, 0
      %v1363 = vsel %vm409, %v1338, 0
      %1365 = vmatpush.bf16.msra.mxu0 0
      %1366 = vmatpush.bf16.msra.mxu0 0
      %1367 = vmatpush.bf16.msra.mxu0 0
      %1368 = vmatpush.bf16.msra.mxu0 0
      %1369 = vmatpush.bf16.msra.mxu0 0
      %1370 = vmatpush.bf16.msra.mxu0 0
      %1371 = vmatpush.bf16.msra.mxu0 0
      %1372 = vmatpush.bf16.msra.mxu0 %v1363
      %1373 = vmatmul.bf16.gmra.mxu0 %v1360
      %v1374 = vpop.f32.mrf.mxu0
      %v1375 = vadd.f32 0.0, %v1374
      %v1376 = vpop.f32.mrf.mxu0
      %v1377 = vadd.f32 0.0, %v1376
      %1378 = vdwg.mxu0
      %v1379 = vadd.f32 %v1333, %v1375
      %v1380 = vadd.f32 %v1334, %v1377
      %v1381 = vld [vmem:[%s1304] sm:$0xe]
      %v1382 = vld [vmem:[%s668] sm:$0x3]
      %v1384 = vunpack.c.l.b16 %v1381
      %v1385 = vpack.c.b16 %v1343, %v1384
      %v1386 = vrot.slane %v1385, 1
      %v1387 = vrot.slane %v1346, 1
      %v1388 = vsel %vm452, %v1386, %v1387
      %v1390 = vsel %vm405, %v1388, 0
      %v1393 = vsel %vm409, %v1382, 0
      %1395 = vmatpush.bf16.msra.mxu0 0
      %1396 = vmatpush.bf16.msra.mxu0 0
      %1397 = vmatpush.bf16.msra.mxu0 0
      %1398 = vmatpush.bf16.msra.mxu0 0
      %1399 = vmatpush.bf16.msra.mxu0 0
      %1400 = vmatpush.bf16.msra.mxu0 0
      %1401 = vmatpush.bf16.msra.mxu0 0
      %1402 = vmatpush.bf16.msra.mxu0 %v1393
      %1403 = vmatmul.bf16.gmra.mxu0 %v1390
      %v1404 = vpop.f32.mrf.mxu0
      %v1405 = vadd.f32 0.0, %v1404
      %v1406 = vpop.f32.mrf.mxu0
      %v1407 = vadd.f32 0.0, %v1406
      %1408 = vdwg.mxu0
      %v1409 = vadd.f32 %v1379, %v1405
      %v1410 = vadd.f32 %v1380, %v1407
      %v1411 = vmul.f32 %v1409, %v699
      %v1412 = vmul.f32 %v1410, %v699
      %v1413 = vadd.f32 %v1411, %v704
      %v1414 = vadd.f32 %v1412, %v704
      %v1415 = vxor.u32 %v1413, 2147483648
      %v1416 = vxor.u32 %v1414, 2147483648
      %v1417 = vmul.f32 %v1415, 1.442695
      %v1418 = vpow.pop %v1417
      %v1419 = vmul.f32 %v1416, 1.442695
      %v1420 = vpow.pop %v1419
      %v1421 = vadd.f32 %v1418, 1.0
      %v1422 = vadd.f32 %v1420, 1.0
      %v1423 = vrcp.pop %v1421
      %v1424 = vmul.f32 %v1421, %v1423
      %v1425 = vsub.f32 1.0, %v1424
      %v1426 = vmul.f32 %v1423, %v1425
      %v1427 = vadd.f32 %v1423, %v1426
      %vm1428 = vweird.f32 %v1421
      %vm1429 = vweird.f32 %v1423
      %vm1430 = vmor %vm1428, %vm1429
      %v1431 = vsel %vm1430, %v1423, %v1427
      %v1432 = vand.u32 2147483647, %v1421
      %vm1433 = vcmp.eq.f32.partialorder %v1432, 8.507059e+37
      %v1434 = vand.u32 %v1421, 2147483648
      %v1435 = vor.u32 1.1754944e-38, %v1434
      %v1436 = vsel %vm1433, %v1435, %v1431
      %v1437 = vmul.f32 1.0, %v1436
      %v1438 = vrcp.pop %v1422
      %v1439 = vmul.f32 %v1422, %v1438
      %v1440 = vsub.f32 1.0, %v1439
      %v1441 = vmul.f32 %v1438, %v1440
      %v1442 = vadd.f32 %v1438, %v1441
      %vm1443 = vweird.f32 %v1422
      %vm1444 = vweird.f32 %v1438
      %vm1445 = vmor %vm1443, %vm1444
      %v1446 = vsel %vm1445, %v1438, %v1442
      %v1447 = vand.u32 2147483647, %v1422
      %vm1448 = vcmp.eq.f32.partialorder %v1447, 8.507059e+37
      %v1449 = vand.u32 %v1422, 2147483648
      %v1450 = vor.u32 1.1754944e-38, %v1449
      %v1451 = vsel %vm1448, %v1450, %v1446
      %v1452 = vmul.f32 1.0, %v1451
      %v1453 = vmul.f32 %v1413, %v1437
      %v1454 = vmul.f32 %v1414, %v1452
      %s1455 = scalar_lea.vmem %s373, 32
      %1456 = vst [vmem:[%s1455] sm:$0xff] %v1453
      %1457 = vst [vmem:[%s1455 + $0x8] sm:$0xff] %v1454
      %v1458 = vld [vmem:[%s950] sm:$0xf]
      %v1459 = vld [vmem:[%s950 + $0x4] sm:$0xf]
      %v1460 = vld [vmem:[%s354] sm:$0x3]
      %v1461 = vld [vmem:[%s950 + $0x8] sm:$0x1]
      %v1462 = vld [vmem:[%s382] sm:$0x3]
      %v1466 = vunpack.c.l.b16 %v1458
      %v1467 = vunpack.c.l.b16 %v1459
      %v1468 = vunpack.c.l.b16 %v1461
      %v1469 = vpack.c.b16 %v1467, %v1466
      %v1470 = vpack.c.b16 %v1468, %v1468
      %v1472 = vshrl.u32 %v1469, 16
      %v1474 = vshll.u32 %v1469, 16
      %v1476 = vrot.slane %v1474, 1
      %v1477 = vor.u32 %v1472, %v1476
      %v1479 = vshll.u32 %v1470, 16
      %v1481 = vrot.slane %v1479, 1
      %v1482 = vsel %vm392, %v1477, %v1481
      %v1484 = vsel %vm405, %v1482, 0
      %v1487 = vsel %vm409, %v1462, 0
      %1489 = vmatpush.bf16.msra.mxu0 0
      %1490 = vmatpush.bf16.msra.mxu0 0
      %1491 = vmatpush.bf16.msra.mxu0 0
      %1492 = vmatpush.bf16.msra.mxu0 0
      %1493 = vmatpush.bf16.msra.mxu0 0
      %1494 = vmatpush.bf16.msra.mxu0 0
      %1495 = vmatpush.bf16.msra.mxu0 0
      %1496 = vmatpush.bf16.msra.mxu0 %v1487
      %1497 = vmatmul.bf16.gmra.mxu0 %v1484
      %v1498 = vpop.f32.mrf.mxu0
      %v1499 = vadd.f32 0.0, %v1498
      %v1500 = vpop.f32.mrf.mxu0
      %v1501 = vadd.f32 0.0, %v1500
      %1502 = vdwg.mxu0
      %v1503 = vsel %vm405, %v1469, 0
      %v1506 = vsel %vm409, %v1460, 0
      %1508 = vmatpush.bf16.msra.mxu0 0
      %1509 = vmatpush.bf16.msra.mxu0 0
      %1510 = vmatpush.bf16.msra.mxu0 0
      %1511 = vmatpush.bf16.msra.mxu0 0
      %1512 = vmatpush.bf16.msra.mxu0 0
      %1513 = vmatpush.bf16.msra.mxu0 0
      %1514 = vmatpush.bf16.msra.mxu0 0
      %1515 = vmatpush.bf16.msra.mxu0 %v1506
      %1516 = vmatmul.bf16.gmra.mxu0 %v1503
      %v1517 = vpop.f32.mrf.mxu0
      %v1518 = vadd.f32 %v1499, %v1517
      %v1519 = vpop.f32.mrf.mxu0
      %v1520 = vadd.f32 %v1501, %v1519
      %1521 = vdwg.mxu0
      %v1522 = vld [vmem:[%s950] sm:$0xe]
      %v1523 = vld [vmem:[%s447] sm:$0x3]
      %v1525 = vunpack.c.l.b16 %v1522
      %v1526 = vpack.c.b16 %v1467, %v1525
      %v1527 = vrot.slane %v1526, 1
      %v1528 = vrot.slane %v1470, 1
      %v1529 = vsel %vm452, %v1527, %v1528
      %v1531 = vsel %vm405, %v1529, 0
      %v1534 = vsel %vm409, %v1523, 0
      %1536 = vmatpush.bf16.msra.mxu0 0
      %1537 = vmatpush.bf16.msra.mxu0 0
      %1538 = vmatpush.bf16.msra.mxu0 0
      %1539 = vmatpush.bf16.msra.mxu0 0
      %1540 = vmatpush.bf16.msra.mxu0 0
      %1541 = vmatpush.bf16.msra.mxu0 0
      %1542 = vmatpush.bf16.msra.mxu0 0
      %1543 = vmatpush.bf16.msra.mxu0 %v1534
      %1544 = vmatmul.bf16.gmra.mxu0 %v1531
      %v1545 = vpop.f32.mrf.mxu0
      %v1546 = vadd.f32 0.0, %v1545
      %v1547 = vpop.f32.mrf.mxu0
      %v1548 = vadd.f32 0.0, %v1547
      %1549 = vdwg.mxu0
      %v1550 = vadd.f32 %v1518, %v1546
      %v1551 = vadd.f32 %v1520, %v1548
      %v1552 = vld [vmem:[%s1304] sm:$0xf]
      %v1553 = vld [vmem:[%s1304 + $0x4] sm:$0xf]
      %v1554 = vld [vmem:[%s481] sm:$0x3]
      %v1557 = vunpack.c.l.b16 %v1552
      %v1558 = vunpack.c.l.b16 %v1553
      %v1559 = vpack.c.b16 %v1558, %v1557
      %v1561 = vsel %vm405, %v1559, 0
      %v1564 = vsel %vm409, %v1554, 0
      %1566 = vmatpush.bf16.msra.mxu0 0
      %1567 = vmatpush.bf16.msra.mxu0 0
      %1568 = vmatpush.bf16.msra.mxu0 0
      %1569 = vmatpush.bf16.msra.mxu0 0
      %1570 = vmatpush.bf16.msra.mxu0 0
      %1571 = vmatpush.bf16.msra.mxu0 0
      %1572 = vmatpush.bf16.msra.mxu0 0
      %1573 = vmatpush.bf16.msra.mxu0 %v1564
      %1574 = vmatmul.bf16.gmra.mxu0 %v1561
      %v1575 = vpop.f32.mrf.mxu0
      %v1576 = vadd.f32 0.0, %v1575
      %v1577 = vpop.f32.mrf.mxu0
      %v1578 = vadd.f32 0.0, %v1577
      %1579 = vdwg.mxu0
      %v1580 = vadd.f32 %v1550, %v1576
      %v1581 = vadd.f32 %v1551, %v1578
      %v1582 = vld [vmem:[%s1304] sm:$0xf]
      %v1583 = vld [vmem:[%s1304 + $0x4] sm:$0xf]
      %v1584 = vld [vmem:[%s1304 + $0x8] sm:$0x1]
      %v1585 = vld [vmem:[%s513] sm:$0x3]
      %v1589 = vunpack.c.l.b16 %v1582
      %v1590 = vunpack.c.l.b16 %v1583
      %v1591 = vunpack.c.l.b16 %v1584
      %v1592 = vpack.c.b16 %v1590, %v1589
      %v1593 = vpack.c.b16 %v1591, %v1591
      %v1595 = vshrl.u32 %v1592, 16
      %v1597 = vshll.u32 %v1592, 16
      %v1599 = vrot.slane %v1597, 1
      %v1600 = vor.u32 %v1595, %v1599
      %v1602 = vshll.u32 %v1593, 16
      %v1604 = vrot.slane %v1602, 1
      %v1605 = vsel %vm392, %v1600, %v1604
      %v1607 = vsel %vm405, %v1605, 0
      %v1610 = vsel %vm409, %v1585, 0
      %1612 = vmatpush.bf16.msra.mxu0 0
      %1613 = vmatpush.bf16.msra.mxu0 0
      %1614 = vmatpush.bf16.msra.mxu0 0
      %1615 = vmatpush.bf16.msra.mxu0 0
      %1616 = vmatpush.bf16.msra.mxu0 0
      %1617 = vmatpush.bf16.msra.mxu0 0
      %1618 = vmatpush.bf16.msra.mxu0 0
      %1619 = vmatpush.bf16.msra.mxu0 %v1610
      %1620 = vmatmul.bf16.gmra.mxu0 %v1607
      %v1621 = vpop.f32.mrf.mxu0
      %v1622 = vadd.f32 0.0, %v1621
      %v1623 = vpop.f32.mrf.mxu0
      %v1624 = vadd.f32 0.0, %v1623
      %1625 = vdwg.mxu0
      %v1626 = vadd.f32 %v1580, %v1622
      %v1627 = vadd.f32 %v1581, %v1624
      %v1628 = vld [vmem:[%s1304] sm:$0xe]
      %v1629 = vld [vmem:[%s558] sm:$0x3]
      %v1631 = vunpack.c.l.b16 %v1628
      %v1632 = vpack.c.b16 %v1590, %v1631
      %v1633 = vrot.slane %v1632, 1
      %v1634 = vrot.slane %v1593, 1
      %v1635 = vsel %vm452, %v1633, %v1634
      %v1637 = vsel %vm405, %v1635, 0
      %v1640 = vsel %vm409, %v1629, 0
      %1642 = vmatpush.bf16.msra.mxu0 0
      %1643 = vmatpush.bf16.msra.mxu0 0
      %1644 = vmatpush.bf16.msra.mxu0 0
      %1645 = vmatpush.bf16.msra.mxu0 0
      %1646 = vmatpush.bf16.msra.mxu0 0
      %1647 = vmatpush.bf16.msra.mxu0 0
      %1648 = vmatpush.bf16.msra.mxu0 0
      %1649 = vmatpush.bf16.msra.mxu0 %v1640
      %1650 = vmatmul.bf16.gmra.mxu0 %v1637
      %v1651 = vpop.f32.mrf.mxu0
      %v1652 = vadd.f32 0.0, %v1651
      %v1653 = vpop.f32.mrf.mxu0
      %v1654 = vadd.f32 0.0, %v1653
      %1655 = vdwg.mxu0
      %v1656 = vadd.f32 %v1626, %v1652
      %v1657 = vadd.f32 %v1627, %v1654
      %s1658 = scalar_lea.vmem %s336, 60
      %v1659 = vld [vmem:[%s1658] sm:$0xf]
      %v1660 = vld [vmem:[%s1658 + $0x4] sm:$0xf]
      %v1661 = vld [vmem:[%s591] sm:$0x3]
      %v1664 = vunpack.c.l.b16 %v1659
      %v1665 = vunpack.c.l.b16 %v1660
      %v1666 = vpack.c.b16 %v1665, %v1664
      %v1668 = vsel %vm405, %v1666, 0
      %v1671 = vsel %vm409, %v1661, 0
      %1673 = vmatpush.bf16.msra.mxu0 0
      %1674 = vmatpush.bf16.msra.mxu0 0
      %1675 = vmatpush.bf16.msra.mxu0 0
      %1676 = vmatpush.bf16.msra.mxu0 0
      %1677 = vmatpush.bf16.msra.mxu0 0
      %1678 = vmatpush.bf16.msra.mxu0 0
      %1679 = vmatpush.bf16.msra.mxu0 0
      %1680 = vmatpush.bf16.msra.mxu0 %v1671
      %1681 = vmatmul.bf16.gmra.mxu0 %v1668
      %v1682 = vpop.f32.mrf.mxu0
      %v1683 = vadd.f32 0.0, %v1682
      %v1684 = vpop.f32.mrf.mxu0
      %v1685 = vadd.f32 0.0, %v1684
      %1686 = vdwg.mxu0
      %v1687 = vadd.f32 %v1656, %v1683
      %v1688 = vadd.f32 %v1657, %v1685
      %v1689 = vld [vmem:[%s1658] sm:$0xf]
      %v1690 = vld [vmem:[%s1658 + $0x4] sm:$0xf]
      %v1691 = vld [vmem:[%s1658 + $0x8] sm:$0x1]
      %v1692 = vld [vmem:[%s623] sm:$0x3]
      %v1696 = vunpack.c.l.b16 %v1689
      %v1697 = vunpack.c.l.b16 %v1690
      %v1698 = vunpack.c.l.b16 %v1691
      %v1699 = vpack.c.b16 %v1697, %v1696
      %v1700 = vpack.c.b16 %v1698, %v1698
      %v1702 = vshrl.u32 %v1699, 16
      %v1704 = vshll.u32 %v1699, 16
      %v1706 = vrot.slane %v1704, 1
      %v1707 = vor.u32 %v1702, %v1706
      %v1709 = vshll.u32 %v1700, 16
      %v1711 = vrot.slane %v1709, 1
      %v1712 = vsel %vm392, %v1707, %v1711
      %v1714 = vsel %vm405, %v1712, 0
      %v1717 = vsel %vm409, %v1692, 0
      %1719 = vmatpush.bf16.msra.mxu0 0
      %1720 = vmatpush.bf16.msra.mxu0 0
      %1721 = vmatpush.bf16.msra.mxu0 0
      %1722 = vmatpush.bf16.msra.mxu0 0
      %1723 = vmatpush.bf16.msra.mxu0 0
      %1724 = vmatpush.bf16.msra.mxu0 0
      %1725 = vmatpush.bf16.msra.mxu0 0
      %1726 = vmatpush.bf16.msra.mxu0 %v1717
      %1727 = vmatmul.bf16.gmra.mxu0 %v1714
      %v1728 = vpop.f32.mrf.mxu0
      %v1729 = vadd.f32 0.0, %v1728
      %v1730 = vpop.f32.mrf.mxu0
      %v1731 = vadd.f32 0.0, %v1730
      %1732 = vdwg.mxu0
      %v1733 = vadd.f32 %v1687, %v1729
      %v1734 = vadd.f32 %v1688, %v1731
      %v1735 = vld [vmem:[%s1658] sm:$0xe]
      %v1736 = vld [vmem:[%s668] sm:$0x3]
      %v1738 = vunpack.c.l.b16 %v1735
      %v1739 = vpack.c.b16 %v1697, %v1738
      %v1740 = vrot.slane %v1739, 1
      %v1741 = vrot.slane %v1700, 1
      %v1742 = vsel %vm452, %v1740, %v1741
      %v1744 = vsel %vm405, %v1742, 0
      %v1747 = vsel %vm409, %v1736, 0
      %1749 = vmatpush.bf16.msra.mxu0 0
      %1750 = vmatpush.bf16.msra.mxu0 0
      %1751 = vmatpush.bf16.msra.mxu0 0
      %1752 = vmatpush.bf16.msra.mxu0 0
      %1753 = vmatpush.bf16.msra.mxu0 0
      %1754 = vmatpush.bf16.msra.mxu0 0
      %1755 = vmatpush.bf16.msra.mxu0 0
      %1756 = vmatpush.bf16.msra.mxu0 %v1747
      %1757 = vmatmul.bf16.gmra.mxu0 %v1744
      %v1758 = vpop.f32.mrf.mxu0
      %v1759 = vadd.f32 0.0, %v1758
      %v1760 = vpop.f32.mrf.mxu0
      %v1761 = vadd.f32 0.0, %v1760
      %1762 = vdwg.mxu0
      %v1763 = vadd.f32 %v1733, %v1759
      %v1764 = vadd.f32 %v1734, %v1761
      %v1765 = vmul.f32 %v1763, %v699
      %v1766 = vmul.f32 %v1764, %v699
      %v1767 = vadd.f32 %v1765, %v704
      %v1768 = vadd.f32 %v1766, %v704
      %v1769 = vxor.u32 %v1767, 2147483648
      %v1770 = vxor.u32 %v1768, 2147483648
      %v1771 = vmul.f32 %v1769, 1.442695
      %v1772 = vpow.pop %v1771
      %v1773 = vmul.f32 %v1770, 1.442695
      %v1774 = vpow.pop %v1773
      %v1775 = vadd.f32 %v1772, 1.0
      %v1776 = vadd.f32 %v1774, 1.0
      %v1777 = vrcp.pop %v1775
      %v1778 = vmul.f32 %v1775, %v1777
      %v1779 = vsub.f32 1.0, %v1778
      %v1780 = vmul.f32 %v1777, %v1779
      %v1781 = vadd.f32 %v1777, %v1780
      %vm1782 = vweird.f32 %v1775
      %vm1783 = vweird.f32 %v1777
      %vm1784 = vmor %vm1782, %vm1783
      %v1785 = vsel %vm1784, %v1777, %v1781
      %v1786 = vand.u32 2147483647, %v1775
      %vm1787 = vcmp.eq.f32.partialorder %v1786, 8.507059e+37
      %v1788 = vand.u32 %v1775, 2147483648
      %v1789 = vor.u32 1.1754944e-38, %v1788
      %v1790 = vsel %vm1787, %v1789, %v1785
      %v1791 = vmul.f32 1.0, %v1790
      %v1792 = vrcp.pop %v1776
      %v1793 = vmul.f32 %v1776, %v1792
      %v1794 = vsub.f32 1.0, %v1793
      %v1795 = vmul.f32 %v1792, %v1794
      %v1796 = vadd.f32 %v1792, %v1795
      %vm1797 = vweird.f32 %v1776
      %vm1798 = vweird.f32 %v1792
      %vm1799 = vmor %vm1797, %vm1798
      %v1800 = vsel %vm1799, %v1792, %v1796
      %v1801 = vand.u32 2147483647, %v1776
      %vm1802 = vcmp.eq.f32.partialorder %v1801, 8.507059e+37
      %v1803 = vand.u32 %v1776, 2147483648
      %v1804 = vor.u32 1.1754944e-38, %v1803
      %v1805 = vsel %vm1802, %v1804, %v1800
      %v1806 = vmul.f32 1.0, %v1805
      %v1807 = vmul.f32 %v1767, %v1791
      %v1808 = vmul.f32 %v1768, %v1806
      %s1809 = scalar_lea.vmem %s373, 48
      %1810 = vst [vmem:[%s1809] sm:$0xff] %v1807
      %1811 = vst [vmem:[%s1809 + $0x8] sm:$0xff] %v1808
      %v1812 = vld [vmem:[%s1304] sm:$0xf]
      %v1813 = vld [vmem:[%s1304 + $0x4] sm:$0xf]
      %v1814 = vld [vmem:[%s354] sm:$0x3]
      %v1815 = vld [vmem:[%s1304 + $0x8] sm:$0x1]
      %v1816 = vld [vmem:[%s382] sm:$0x3]
      %v1820 = vunpack.c.l.b16 %v1812
      %v1821 = vunpack.c.l.b16 %v1813
      %v1822 = vunpack.c.l.b16 %v1815
      %v1823 = vpack.c.b16 %v1821, %v1820
      %v1824 = vpack.c.b16 %v1822, %v1822
      %v1826 = vshrl.u32 %v1823, 16
      %v1828 = vshll.u32 %v1823, 16
      %v1830 = vrot.slane %v1828, 1
      %v1831 = vor.u32 %v1826, %v1830
      %v1833 = vshll.u32 %v1824, 16
      %v1835 = vrot.slane %v1833, 1
      %v1836 = vsel %vm392, %v1831, %v1835
      %v1838 = vsel %vm405, %v1836, 0
      %v1841 = vsel %vm409, %v1816, 0
      %1843 = vmatpush.bf16.msra.mxu0 0
      %1844 = vmatpush.bf16.msra.mxu0 0
      %1845 = vmatpush.bf16.msra.mxu0 0
      %1846 = vmatpush.bf16.msra.mxu0 0
      %1847 = vmatpush.bf16.msra.mxu0 0
      %1848 = vmatpush.bf16.msra.mxu0 0
      %1849 = vmatpush.bf16.msra.mxu0 0
      %1850 = vmatpush.bf16.msra.mxu0 %v1841
      %1851 = vmatmul.bf16.gmra.mxu0 %v1838
      %v1852 = vpop.f32.mrf.mxu0
      %v1853 = vadd.f32 0.0, %v1852
      %v1854 = vpop.f32.mrf.mxu0
      %v1855 = vadd.f32 0.0, %v1854
      %1856 = vdwg.mxu0
      %v1857 = vsel %vm405, %v1823, 0
      %v1860 = vsel %vm409, %v1814, 0
      %1862 = vmatpush.bf16.msra.mxu0 0
      %1863 = vmatpush.bf16.msra.mxu0 0
      %1864 = vmatpush.bf16.msra.mxu0 0
      %1865 = vmatpush.bf16.msra.mxu0 0
      %1866 = vmatpush.bf16.msra.mxu0 0
      %1867 = vmatpush.bf16.msra.mxu0 0
      %1868 = vmatpush.bf16.msra.mxu0 0
      %1869 = vmatpush.bf16.msra.mxu0 %v1860
      %1870 = vmatmul.bf16.gmra.mxu0 %v1857
      %v1871 = vpop.f32.mrf.mxu0
      %v1872 = vadd.f32 %v1853, %v1871
      %v1873 = vpop.f32.mrf.mxu0
      %v1874 = vadd.f32 %v1855, %v1873
      %1875 = vdwg.mxu0
      %v1876 = vld [vmem:[%s1304] sm:$0xe]
      %v1877 = vld [vmem:[%s447] sm:$0x3]
      %v1879 = vunpack.c.l.b16 %v1876
      %v1880 = vpack.c.b16 %v1821, %v1879
      %v1881 = vrot.slane %v1880, 1
      %v1882 = vrot.slane %v1824, 1
      %v1883 = vsel %vm452, %v1881, %v1882
      %v1885 = vsel %vm405, %v1883, 0
      %v1888 = vsel %vm409, %v1877, 0
      %1890 = vmatpush.bf16.msra.mxu0 0
      %1891 = vmatpush.bf16.msra.mxu0 0
      %1892 = vmatpush.bf16.msra.mxu0 0
      %1893 = vmatpush.bf16.msra.mxu0 0
      %1894 = vmatpush.bf16.msra.mxu0 0
      %1895 = vmatpush.bf16.msra.mxu0 0
      %1896 = vmatpush.bf16.msra.mxu0 0
      %1897 = vmatpush.bf16.msra.mxu0 %v1888
      %1898 = vmatmul.bf16.gmra.mxu0 %v1885
      %v1899 = vpop.f32.mrf.mxu0
      %v1900 = vadd.f32 0.0, %v1899
      %v1901 = vpop.f32.mrf.mxu0
      %v1902 = vadd.f32 0.0, %v1901
      %1903 = vdwg.mxu0
      %v1904 = vadd.f32 %v1872, %v1900
      %v1905 = vadd.f32 %v1874, %v1902
      %v1906 = vld [vmem:[%s1658] sm:$0xf]
      %v1907 = vld [vmem:[%s1658 + $0x4] sm:$0xf]
      %v1908 = vld [vmem:[%s481] sm:$0x3]
      %v1911 = vunpack.c.l.b16 %v1906
      %v1912 = vunpack.c.l.b16 %v1907
      %v1913 = vpack.c.b16 %v1912, %v1911
      %v1915 = vsel %vm405, %v1913, 0
      %v1918 = vsel %vm409, %v1908, 0
      %1920 = vmatpush.bf16.msra.mxu0 0
      %1921 = vmatpush.bf16.msra.mxu0 0
      %1922 = vmatpush.bf16.msra.mxu0 0
      %1923 = vmatpush.bf16.msra.mxu0 0
      %1924 = vmatpush.bf16.msra.mxu0 0
      %1925 = vmatpush.bf16.msra.mxu0 0
      %1926 = vmatpush.bf16.msra.mxu0 0
      %1927 = vmatpush.bf16.msra.mxu0 %v1918
      %1928 = vmatmul.bf16.gmra.mxu0 %v1915
      %v1929 = vpop.f32.mrf.mxu0
      %v1930 = vadd.f32 0.0, %v1929
      %v1931 = vpop.f32.mrf.mxu0
      %v1932 = vadd.f32 0.0, %v1931
      %1933 = vdwg.mxu0
      %v1934 = vadd.f32 %v1904, %v1930
      %v1935 = vadd.f32 %v1905, %v1932
      %v1936 = vld [vmem:[%s1658] sm:$0xf]
      %v1937 = vld [vmem:[%s1658 + $0x4] sm:$0xf]
      %v1938 = vld [vmem:[%s1658 + $0x8] sm:$0x1]
      %v1939 = vld [vmem:[%s513] sm:$0x3]
      %v1943 = vunpack.c.l.b16 %v1936
      %v1944 = vunpack.c.l.b16 %v1937
      %v1945 = vunpack.c.l.b16 %v1938
      %v1946 = vpack.c.b16 %v1944, %v1943
      %v1947 = vpack.c.b16 %v1945, %v1945
      %v1949 = vshrl.u32 %v1946, 16
      %v1951 = vshll.u32 %v1946, 16
      %v1953 = vrot.slane %v1951, 1
      %v1954 = vor.u32 %v1949, %v1953
      %v1956 = vshll.u32 %v1947, 16
      %v1958 = vrot.slane %v1956, 1
      %v1959 = vsel %vm392, %v1954, %v1958
      %v1961 = vsel %vm405, %v1959, 0
      %v1964 = vsel %vm409, %v1939, 0
      %1966 = vmatpush.bf16.msra.mxu0 0
      %1967 = vmatpush.bf16.msra.mxu0 0
      %1968 = vmatpush.bf16.msra.mxu0 0
      %1969 = vmatpush.bf16.msra.mxu0 0
      %1970 = vmatpush.bf16.msra.mxu0 0
      %1971 = vmatpush.bf16.msra.mxu0 0
      %1972 = vmatpush.bf16.msra.mxu0 0
      %1973 = vmatpush.bf16.msra.mxu0 %v1964
      %1974 = vmatmul.bf16.gmra.mxu0 %v1961
      %v1975 = vpop.f32.mrf.mxu0
      %v1976 = vadd.f32 0.0, %v1975
      %v1977 = vpop.f32.mrf.mxu0
      %v1978 = vadd.f32 0.0, %v1977
      %1979 = vdwg.mxu0
      %v1980 = vadd.f32 %v1934, %v1976
      %v1981 = vadd.f32 %v1935, %v1978
      %v1982 = vld [vmem:[%s1658] sm:$0xe]
      %v1983 = vld [vmem:[%s558] sm:$0x3]
      %v1985 = vunpack.c.l.b16 %v1982
      %v1986 = vpack.c.b16 %v1944, %v1985
      %v1987 = vrot.slane %v1986, 1
      %v1988 = vrot.slane %v1947, 1
      %v1989 = vsel %vm452, %v1987, %v1988
      %v1991 = vsel %vm405, %v1989, 0
      %v1994 = vsel %vm409, %v1983, 0
      %1996 = vmatpush.bf16.msra.mxu0 0
      %1997 = vmatpush.bf16.msra.mxu0 0
      %1998 = vmatpush.bf16.msra.mxu0 0
      %1999 = vmatpush.bf16.msra.mxu0 0
      %2000 = vmatpush.bf16.msra.mxu0 0
      %2001 = vmatpush.bf16.msra.mxu0 0
      %2002 = vmatpush.bf16.msra.mxu0 0
      %2003 = vmatpush.bf16.msra.mxu0 %v1994
      %2004 = vmatmul.bf16.gmra.mxu0 %v1991
      %v2005 = vpop.f32.mrf.mxu0
      %v2006 = vadd.f32 0.0, %v2005
      %v2007 = vpop.f32.mrf.mxu0
      %v2008 = vadd.f32 0.0, %v2007
      %2009 = vdwg.mxu0
      %v2010 = vadd.f32 %v1980, %v2006
      %v2011 = vadd.f32 %v1981, %v2008
      %s2012 = scalar_lea.vmem %s336, 72
      %v2013 = vld [vmem:[%s2012] sm:$0xf]
      %v2014 = vld [vmem:[%s2012 + $0x4] sm:$0xf]
      %v2015 = vld [vmem:[%s591] sm:$0x3]
      %v2018 = vunpack.c.l.b16 %v2013
      %v2019 = vunpack.c.l.b16 %v2014
      %v2020 = vpack.c.b16 %v2019, %v2018
      %v2022 = vsel %vm405, %v2020, 0
      %v2025 = vsel %vm409, %v2015, 0
      %2027 = vmatpush.bf16.msra.mxu0 0
      %2028 = vmatpush.bf16.msra.mxu0 0
      %2029 = vmatpush.bf16.msra.mxu0 0
      %2030 = vmatpush.bf16.msra.mxu0 0
      %2031 = vmatpush.bf16.msra.mxu0 0
      %2032 = vmatpush.bf16.msra.mxu0 0
      %2033 = vmatpush.bf16.msra.mxu0 0
      %2034 = vmatpush.bf16.msra.mxu0 %v2025
      %2035 = vmatmul.bf16.gmra.mxu0 %v2022
      %v2036 = vpop.f32.mrf.mxu0
      %v2037 = vadd.f32 0.0, %v2036
      %v2038 = vpop.f32.mrf.mxu0
      %v2039 = vadd.f32 0.0, %v2038
      %2040 = vdwg.mxu0
      %v2041 = vadd.f32 %v2010, %v2037
      %v2042 = vadd.f32 %v2011, %v2039
      %v2043 = vld [vmem:[%s2012] sm:$0xf]
      %v2044 = vld [vmem:[%s2012 + $0x4] sm:$0xf]
      %v2045 = vld [vmem:[%s2012 + $0x8] sm:$0x1]
      %v2046 = vld [vmem:[%s623] sm:$0x3]
      %v2050 = vunpack.c.l.b16 %v2043
      %v2051 = vunpack.c.l.b16 %v2044
      %v2052 = vunpack.c.l.b16 %v2045
      %v2053 = vpack.c.b16 %v2051, %v2050
      %v2054 = vpack.c.b16 %v2052, %v2052
      %v2056 = vshrl.u32 %v2053, 16
      %v2058 = vshll.u32 %v2053, 16
      %v2060 = vrot.slane %v2058, 1
      %v2061 = vor.u32 %v2056, %v2060
      %v2063 = vshll.u32 %v2054, 16
      %v2065 = vrot.slane %v2063, 1
      %v2066 = vsel %vm392, %v2061, %v2065
      %v2068 = vsel %vm405, %v2066, 0
      %v2071 = vsel %vm409, %v2046, 0
      %2073 = vmatpush.bf16.msra.mxu0 0
      %2074 = vmatpush.bf16.msra.mxu0 0
      %2075 = vmatpush.bf16.msra.mxu0 0
      %2076 = vmatpush.bf16.msra.mxu0 0
      %2077 = vmatpush.bf16.msra.mxu0 0
      %2078 = vmatpush.bf16.msra.mxu0 0
      %2079 = vmatpush.bf16.msra.mxu0 0
      %2080 = vmatpush.bf16.msra.mxu0 %v2071
      %2081 = vmatmul.bf16.gmra.mxu0 %v2068
      %v2082 = vpop.f32.mrf.mxu0
      %v2083 = vadd.f32 0.0, %v2082
      %v2084 = vpop.f32.mrf.mxu0
      %v2085 = vadd.f32 0.0, %v2084
      %2086 = vdwg.mxu0
      %v2087 = vadd.f32 %v2041, %v2083
      %v2088 = vadd.f32 %v2042, %v2085
      %v2089 = vld [vmem:[%s2012] sm:$0xe]
      %v2090 = vld [vmem:[%s668] sm:$0x3]
      %v2092 = vunpack.c.l.b16 %v2089
      %v2093 = vpack.c.b16 %v2051, %v2092
      %v2094 = vrot.slane %v2093, 1
      %v2095 = vrot.slane %v2054, 1
      %v2096 = vsel %vm452, %v2094, %v2095
      %v2098 = vsel %vm405, %v2096, 0
      %v2101 = vsel %vm409, %v2090, 0
      %2103 = vmatpush.bf16.msra.mxu0 0
      %2104 = vmatpush.bf16.msra.mxu0 0
      %2105 = vmatpush.bf16.msra.mxu0 0
      %2106 = vmatpush.bf16.msra.mxu0 0
      %2107 = vmatpush.bf16.msra.mxu0 0
      %2108 = vmatpush.bf16.msra.mxu0 0
      %2109 = vmatpush.bf16.msra.mxu0 0
      %2110 = vmatpush.bf16.msra.mxu0 %v2101
      %2111 = vmatmul.bf16.gmra.mxu0 %v2098
      %v2112 = vpop.f32.mrf.mxu0
      %v2113 = vadd.f32 0.0, %v2112
      %v2114 = vpop.f32.mrf.mxu0
      %v2115 = vadd.f32 0.0, %v2114
      %2116 = vdwg.mxu0
      %v2117 = vadd.f32 %v2087, %v2113
      %v2118 = vadd.f32 %v2088, %v2115
      %v2119 = vmul.f32 %v2117, %v699
      %v2120 = vmul.f32 %v2118, %v699
      %v2121 = vadd.f32 %v2119, %v704
      %v2122 = vadd.f32 %v2120, %v704
      %v2123 = vxor.u32 %v2121, 2147483648
      %v2124 = vxor.u32 %v2122, 2147483648
      %v2125 = vmul.f32 %v2123, 1.442695
      %v2126 = vpow.pop %v2125
      %v2127 = vmul.f32 %v2124, 1.442695
      %v2128 = vpow.pop %v2127
      %v2129 = vadd.f32 %v2126, 1.0
      %v2130 = vadd.f32 %v2128, 1.0
      %v2131 = vrcp.pop %v2129
      %v2132 = vmul.f32 %v2129, %v2131
      %v2133 = vsub.f32 1.0, %v2132
      %v2134 = vmul.f32 %v2131, %v2133
      %v2135 = vadd.f32 %v2131, %v2134
      %vm2136 = vweird.f32 %v2129
      %vm2137 = vweird.f32 %v2131
      %vm2138 = vmor %vm2136, %vm2137
      %v2139 = vsel %vm2138, %v2131, %v2135
      %v2140 = vand.u32 2147483647, %v2129
      %vm2141 = vcmp.eq.f32.partialorder %v2140, 8.507059e+37
      %v2142 = vand.u32 %v2129, 2147483648
      %v2143 = vor.u32 1.1754944e-38, %v2142
      %v2144 = vsel %vm2141, %v2143, %v2139
      %v2145 = vmul.f32 1.0, %v2144
      %v2146 = vrcp.pop %v2130
      %v2147 = vmul.f32 %v2130, %v2146
      %v2148 = vsub.f32 1.0, %v2147
      %v2149 = vmul.f32 %v2146, %v2148
      %v2150 = vadd.f32 %v2146, %v2149
      %vm2151 = vweird.f32 %v2130
      %vm2152 = vweird.f32 %v2146
      %vm2153 = vmor %vm2151, %vm2152
      %v2154 = vsel %vm2153, %v2146, %v2150
      %v2155 = vand.u32 2147483647, %v2130
      %vm2156 = vcmp.eq.f32.partialorder %v2155, 8.507059e+37
      %v2157 = vand.u32 %v2130, 2147483648
      %v2158 = vor.u32 1.1754944e-38, %v2157
      %v2159 = vsel %vm2156, %v2158, %v2154
      %v2160 = vmul.f32 1.0, %v2159
      %v2161 = vmul.f32 %v2121, %v2145
      %v2162 = vmul.f32 %v2122, %v2160
      %s2163 = scalar_lea.vmem %s373, 64
      %2164 = vst [vmem:[%s2163] sm:$0xff] %v2161
      %2165 = vst [vmem:[%s2163 + $0x8] sm:$0xff] %v2162
      %v2166 = vld [vmem:[%s1658] sm:$0xf]
      %v2167 = vld [vmem:[%s1658 + $0x4] sm:$0xf]
      %v2168 = vld [vmem:[%s354] sm:$0x3]
      %v2169 = vld [vmem:[%s1658 + $0x8] sm:$0x1]
      %v2170 = vld [vmem:[%s382] sm:$0x3]
      %v2174 = vunpack.c.l.b16 %v2166
      %v2175 = vunpack.c.l.b16 %v2167
      %v2176 = vunpack.c.l.b16 %v2169
      %v2177 = vpack.c.b16 %v2175, %v2174
      %v2178 = vpack.c.b16 %v2176, %v2176
      %v2180 = vshrl.u32 %v2177, 16
      %v2182 = vshll.u32 %v2177, 16
      %v2184 = vrot.slane %v2182, 1
      %v2185 = vor.u32 %v2180, %v2184
      %v2187 = vshll.u32 %v2178, 16
      %v2189 = vrot.slane %v2187, 1
      %v2190 = vsel %vm392, %v2185, %v2189
      %v2192 = vsel %vm405, %v2190, 0
      %v2195 = vsel %vm409, %v2170, 0
      %2197 = vmatpush.bf16.msra.mxu0 0
      %2198 = vmatpush.bf16.msra.mxu0 0
      %2199 = vmatpush.bf16.msra.mxu0 0
      %2200 = vmatpush.bf16.msra.mxu0 0
      %2201 = vmatpush.bf16.msra.mxu0 0
      %2202 = vmatpush.bf16.msra.mxu0 0
      %2203 = vmatpush.bf16.msra.mxu0 0
      %2204 = vmatpush.bf16.msra.mxu0 %v2195
      %2205 = vmatmul.bf16.gmra.mxu0 %v2192
      %v2206 = vpop.f32.mrf.mxu0
      %v2207 = vadd.f32 0.0, %v2206
      %v2208 = vpop.f32.mrf.mxu0
      %v2209 = vadd.f32 0.0, %v2208
      %2210 = vdwg.mxu0
      %v2211 = vsel %vm405, %v2177, 0
      %v2214 = vsel %vm409, %v2168, 0
      %2216 = vmatpush.bf16.msra.mxu0 0
      %2217 = vmatpush.bf16.msra.mxu0 0
      %2218 = vmatpush.bf16.msra.mxu0 0
      %2219 = vmatpush.bf16.msra.mxu0 0
      %2220 = vmatpush.bf16.msra.mxu0 0
      %2221 = vmatpush.bf16.msra.mxu0 0
      %2222 = vmatpush.bf16.msra.mxu0 0
      %2223 = vmatpush.bf16.msra.mxu0 %v2214
      %2224 = vmatmul.bf16.gmra.mxu0 %v2211
      %v2225 = vpop.f32.mrf.mxu0
      %v2226 = vadd.f32 %v2207, %v2225
      %v2227 = vpop.f32.mrf.mxu0
      %v2228 = vadd.f32 %v2209, %v2227
      %2229 = vdwg.mxu0
      %v2230 = vld [vmem:[%s1658] sm:$0xe]
      %v2231 = vld [vmem:[%s447] sm:$0x3]
      %v2233 = vunpack.c.l.b16 %v2230
      %v2234 = vpack.c.b16 %v2175, %v2233
      %v2235 = vrot.slane %v2234, 1
      %v2236 = vrot.slane %v2178, 1
      %v2237 = vsel %vm452, %v2235, %v2236
      %v2239 = vsel %vm405, %v2237, 0
      %v2242 = vsel %vm409, %v2231, 0
      %2244 = vmatpush.bf16.msra.mxu0 0
      %2245 = vmatpush.bf16.msra.mxu0 0
      %2246 = vmatpush.bf16.msra.mxu0 0
      %2247 = vmatpush.bf16.msra.mxu0 0
      %2248 = vmatpush.bf16.msra.mxu0 0
      %2249 = vmatpush.bf16.msra.mxu0 0
      %2250 = vmatpush.bf16.msra.mxu0 0
      %2251 = vmatpush.bf16.msra.mxu0 %v2242
      %2252 = vmatmul.bf16.gmra.mxu0 %v2239
      %v2253 = vpop.f32.mrf.mxu0
      %v2254 = vadd.f32 0.0, %v2253
      %v2255 = vpop.f32.mrf.mxu0
      %v2256 = vadd.f32 0.0, %v2255
      %2257 = vdwg.mxu0
      %v2258 = vadd.f32 %v2226, %v2254
      %v2259 = vadd.f32 %v2228, %v2256
      %v2260 = vld [vmem:[%s2012] sm:$0xf]
      %v2261 = vld [vmem:[%s2012 + $0x4] sm:$0xf]
      %v2262 = vld [vmem:[%s481] sm:$0x3]
      %v2265 = vunpack.c.l.b16 %v2260
      %v2266 = vunpack.c.l.b16 %v2261
      %v2267 = vpack.c.b16 %v2266, %v2265
      %v2269 = vsel %vm405, %v2267, 0
      %v2272 = vsel %vm409, %v2262, 0
      %2274 = vmatpush.bf16.msra.mxu0 0
      %2275 = vmatpush.bf16.msra.mxu0 0
      %2276 = vmatpush.bf16.msra.mxu0 0
      %2277 = vmatpush.bf16.msra.mxu0 0
      %2278 = vmatpush.bf16.msra.mxu0 0
      %2279 = vmatpush.bf16.msra.mxu0 0
      %2280 = vmatpush.bf16.msra.mxu0 0
      %2281 = vmatpush.bf16.msra.mxu0 %v2272
      %2282 = vmatmul.bf16.gmra.mxu0 %v2269
      %v2283 = vpop.f32.mrf.mxu0
      %v2284 = vadd.f32 0.0, %v2283
      %v2285 = vpop.f32.mrf.mxu0
      %v2286 = vadd.f32 0.0, %v2285
      %2287 = vdwg.mxu0
      %v2288 = vadd.f32 %v2258, %v2284
      %v2289 = vadd.f32 %v2259, %v2286
      %v2290 = vld [vmem:[%s2012] sm:$0xf]
      %v2291 = vld [vmem:[%s2012 + $0x4] sm:$0xf]
      %v2292 = vld [vmem:[%s2012 + $0x8] sm:$0x1]
      %v2293 = vld [vmem:[%s513] sm:$0x3]
      %v2297 = vunpack.c.l.b16 %v2290
      %v2298 = vunpack.c.l.b16 %v2291
      %v2299 = vunpack.c.l.b16 %v2292
      %v2300 = vpack.c.b16 %v2298, %v2297
      %v2301 = vpack.c.b16 %v2299, %v2299
      %v2303 = vshrl.u32 %v2300, 16
      %v2305 = vshll.u32 %v2300, 16
      %v2307 = vrot.slane %v2305, 1
      %v2308 = vor.u32 %v2303, %v2307
      %v2310 = vshll.u32 %v2301, 16
      %v2312 = vrot.slane %v2310, 1
      %v2313 = vsel %vm392, %v2308, %v2312
      %v2315 = vsel %vm405, %v2313, 0
      %v2318 = vsel %vm409, %v2293, 0
      %2320 = vmatpush.bf16.msra.mxu0 0
      %2321 = vmatpush.bf16.msra.mxu0 0
      %2322 = vmatpush.bf16.msra.mxu0 0
      %2323 = vmatpush.bf16.msra.mxu0 0
      %2324 = vmatpush.bf16.msra.mxu0 0
      %2325 = vmatpush.bf16.msra.mxu0 0
      %2326 = vmatpush.bf16.msra.mxu0 0
      %2327 = vmatpush.bf16.msra.mxu0 %v2318
      %2328 = vmatmul.bf16.gmra.mxu0 %v2315
      %v2329 = vpop.f32.mrf.mxu0
      %v2330 = vadd.f32 0.0, %v2329
      %v2331 = vpop.f32.mrf.mxu0
      %v2332 = vadd.f32 0.0, %v2331
      %2333 = vdwg.mxu0
      %v2334 = vadd.f32 %v2288, %v2330
      %v2335 = vadd.f32 %v2289, %v2332
      %v2336 = vld [vmem:[%s2012] sm:$0xe]
      %v2337 = vld [vmem:[%s558] sm:$0x3]
      %v2339 = vunpack.c.l.b16 %v2336
      %v2340 = vpack.c.b16 %v2298, %v2339
      %v2341 = vrot.slane %v2340, 1
      %v2342 = vrot.slane %v2301, 1
      %v2343 = vsel %vm452, %v2341, %v2342
      %v2345 = vsel %vm405, %v2343, 0
      %v2348 = vsel %vm409, %v2337, 0
      %2350 = vmatpush.bf16.msra.mxu0 0
      %2351 = vmatpush.bf16.msra.mxu0 0
      %2352 = vmatpush.bf16.msra.mxu0 0
      %2353 = vmatpush.bf16.msra.mxu0 0
      %2354 = vmatpush.bf16.msra.mxu0 0
      %2355 = vmatpush.bf16.msra.mxu0 0
      %2356 = vmatpush.bf16.msra.mxu0 0
      %2357 = vmatpush.bf16.msra.mxu0 %v2348
      %2358 = vmatmul.bf16.gmra.mxu0 %v2345
      %v2359 = vpop.f32.mrf.mxu0
      %v2360 = vadd.f32 0.0, %v2359
      %v2361 = vpop.f32.mrf.mxu0
      %v2362 = vadd.f32 0.0, %v2361
      %2363 = vdwg.mxu0
      %v2364 = vadd.f32 %v2334, %v2360
      %v2365 = vadd.f32 %v2335, %v2362
      %s2366 = scalar_lea.vmem %s336, 84
      %v2367 = vld [vmem:[%s2366] sm:$0xf]
      %v2368 = vld [vmem:[%s2366 + $0x4] sm:$0xf]
      %v2369 = vld [vmem:[%s591] sm:$0x3]
      %v2372 = vunpack.c.l.b16 %v2367
      %v2373 = vunpack.c.l.b16 %v2368
      %v2374 = vpack.c.b16 %v2373, %v2372
      %v2376 = vsel %vm405, %v2374, 0
      %v2379 = vsel %vm409, %v2369, 0
      %2381 = vmatpush.bf16.msra.mxu0 0
      %2382 = vmatpush.bf16.msra.mxu0 0
      %2383 = vmatpush.bf16.msra.mxu0 0
      %2384 = vmatpush.bf16.msra.mxu0 0
      %2385 = vmatpush.bf16.msra.mxu0 0
      %2386 = vmatpush.bf16.msra.mxu0 0
      %2387 = vmatpush.bf16.msra.mxu0 0
      %2388 = vmatpush.bf16.msra.mxu0 %v2379
      %2389 = vmatmul.bf16.gmra.mxu0 %v2376
      %v2390 = vpop.f32.mrf.mxu0
      %v2391 = vadd.f32 0.0, %v2390
      %v2392 = vpop.f32.mrf.mxu0
      %v2393 = vadd.f32 0.0, %v2392
      %2394 = vdwg.mxu0
      %v2395 = vadd.f32 %v2364, %v2391
      %v2396 = vadd.f32 %v2365, %v2393
      %v2397 = vld [vmem:[%s2366] sm:$0xf]
      %v2398 = vld [vmem:[%s2366 + $0x4] sm:$0xf]
      %v2399 = vld [vmem:[%s2366 + $0x8] sm:$0x1]
      %v2400 = vld [vmem:[%s623] sm:$0x3]
      %v2404 = vunpack.c.l.b16 %v2397
      %v2405 = vunpack.c.l.b16 %v2398
      %v2406 = vunpack.c.l.b16 %v2399
      %v2407 = vpack.c.b16 %v2405, %v2404
      %v2408 = vpack.c.b16 %v2406, %v2406
      %v2410 = vshrl.u32 %v2407, 16
      %v2412 = vshll.u32 %v2407, 16
      %v2414 = vrot.slane %v2412, 1
      %v2415 = vor.u32 %v2410, %v2414
      %v2417 = vshll.u32 %v2408, 16
      %v2419 = vrot.slane %v2417, 1
      %v2420 = vsel %vm392, %v2415, %v2419
      %v2422 = vsel %vm405, %v2420, 0
      %v2425 = vsel %vm409, %v2400, 0
      %2427 = vmatpush.bf16.msra.mxu0 0
      %2428 = vmatpush.bf16.msra.mxu0 0
      %2429 = vmatpush.bf16.msra.mxu0 0
      %2430 = vmatpush.bf16.msra.mxu0 0
      %2431 = vmatpush.bf16.msra.mxu0 0
      %2432 = vmatpush.bf16.msra.mxu0 0
      %2433 = vmatpush.bf16.msra.mxu0 0
      %2434 = vmatpush.bf16.msra.mxu0 %v2425
      %2435 = vmatmul.bf16.gmra.mxu0 %v2422
      %v2436 = vpop.f32.mrf.mxu0
      %v2437 = vadd.f32 0.0, %v2436
      %v2438 = vpop.f32.mrf.mxu0
      %v2439 = vadd.f32 0.0, %v2438
      %2440 = vdwg.mxu0
      %v2441 = vadd.f32 %v2395, %v2437
      %v2442 = vadd.f32 %v2396, %v2439
      %v2443 = vld [vmem:[%s2366] sm:$0xe]
      %v2444 = vld [vmem:[%s668] sm:$0x3]
      %v2446 = vunpack.c.l.b16 %v2443
      %v2447 = vpack.c.b16 %v2405, %v2446
      %v2448 = vrot.slane %v2447, 1
      %v2449 = vrot.slane %v2408, 1
      %v2450 = vsel %vm452, %v2448, %v2449
      %v2452 = vsel %vm405, %v2450, 0
      %v2455 = vsel %vm409, %v2444, 0
      %2457 = vmatpush.bf16.msra.mxu0 0
      %2458 = vmatpush.bf16.msra.mxu0 0
      %2459 = vmatpush.bf16.msra.mxu0 0
      %2460 = vmatpush.bf16.msra.mxu0 0
      %2461 = vmatpush.bf16.msra.mxu0 0
      %2462 = vmatpush.bf16.msra.mxu0 0
      %2463 = vmatpush.bf16.msra.mxu0 0
      %2464 = vmatpush.bf16.msra.mxu0 %v2455
      %2465 = vmatmul.bf16.gmra.mxu0 %v2452
      %v2466 = vpop.f32.mrf.mxu0
      %v2467 = vadd.f32 0.0, %v2466
      %v2468 = vpop.f32.mrf.mxu0
      %v2469 = vadd.f32 0.0, %v2468
      %2470 = vdwg.mxu0
      %v2471 = vadd.f32 %v2441, %v2467
      %v2472 = vadd.f32 %v2442, %v2469
      %v2473 = vmul.f32 %v2471, %v699
      %v2474 = vmul.f32 %v2472, %v699
      %v2475 = vadd.f32 %v2473, %v704
      %v2476 = vadd.f32 %v2474, %v704
      %v2477 = vxor.u32 %v2475, 2147483648
      %v2478 = vxor.u32 %v2476, 2147483648
      %v2479 = vmul.f32 %v2477, 1.442695
      %v2480 = vpow.pop %v2479
      %v2481 = vmul.f32 %v2478, 1.442695
      %v2482 = vpow.pop %v2481
      %v2483 = vadd.f32 %v2480, 1.0
      %v2484 = vadd.f32 %v2482, 1.0
      %v2485 = vrcp.pop %v2483
      %v2486 = vmul.f32 %v2483, %v2485
      %v2487 = vsub.f32 1.0, %v2486
      %v2488 = vmul.f32 %v2485, %v2487
      %v2489 = vadd.f32 %v2485, %v2488
      %vm2490 = vweird.f32 %v2483
      %vm2491 = vweird.f32 %v2485
      %vm2492 = vmor %vm2490, %vm2491
      %v2493 = vsel %vm2492, %v2485, %v2489
      %v2494 = vand.u32 2147483647, %v2483
      %vm2495 = vcmp.eq.f32.partialorder %v2494, 8.507059e+37
      %v2496 = vand.u32 %v2483, 2147483648
      %v2497 = vor.u32 1.1754944e-38, %v2496
      %v2498 = vsel %vm2495, %v2497, %v2493
      %v2499 = vmul.f32 1.0, %v2498
      %v2500 = vrcp.pop %v2484
      %v2501 = vmul.f32 %v2484, %v2500
      %v2502 = vsub.f32 1.0, %v2501
      %v2503 = vmul.f32 %v2500, %v2502
      %v2504 = vadd.f32 %v2500, %v2503
      %vm2505 = vweird.f32 %v2484
      %vm2506 = vweird.f32 %v2500
      %vm2507 = vmor %vm2505, %vm2506
      %v2508 = vsel %vm2507, %v2500, %v2504
      %v2509 = vand.u32 2147483647, %v2484
      %vm2510 = vcmp.eq.f32.partialorder %v2509, 8.507059e+37
      %v2511 = vand.u32 %v2484, 2147483648
      %v2512 = vor.u32 1.1754944e-38, %v2511
      %v2513 = vsel %vm2510, %v2512, %v2508
      %v2514 = vmul.f32 1.0, %v2513
      %v2515 = vmul.f32 %v2475, %v2499
      %v2516 = vmul.f32 %v2476, %v2514
      %s2517 = scalar_lea.vmem %s373, 80
      %2518 = vst [vmem:[%s2517] sm:$0xff] %v2515
      %2519 = vst [vmem:[%s2517 + $0x8] sm:$0xff] %v2516
      %v2520 = vld [vmem:[%s2012] sm:$0xf]
      %v2521 = vld [vmem:[%s2012 + $0x4] sm:$0xf]
      %v2522 = vld [vmem:[%s354] sm:$0x3]
      %v2523 = vld [vmem:[%s2012 + $0x8] sm:$0x1]
      %v2524 = vld [vmem:[%s382] sm:$0x3]
      %v2528 = vunpack.c.l.b16 %v2520
      %v2529 = vunpack.c.l.b16 %v2521
      %v2530 = vunpack.c.l.b16 %v2523
      %v2531 = vpack.c.b16 %v2529, %v2528
      %v2532 = vpack.c.b16 %v2530, %v2530
      %v2534 = vshrl.u32 %v2531, 16
      %v2536 = vshll.u32 %v2531, 16
      %v2538 = vrot.slane %v2536, 1
      %v2539 = vor.u32 %v2534, %v2538
      %v2541 = vshll.u32 %v2532, 16
      %v2543 = vrot.slane %v2541, 1
      %v2544 = vsel %vm392, %v2539, %v2543
      %v2546 = vsel %vm405, %v2544, 0
      %v2549 = vsel %vm409, %v2524, 0
      %2551 = vmatpush.bf16.msra.mxu0 0
      %2552 = vmatpush.bf16.msra.mxu0 0
      %2553 = vmatpush.bf16.msra.mxu0 0
      %2554 = vmatpush.bf16.msra.mxu0 0
      %2555 = vmatpush.bf16.msra.mxu0 0
      %2556 = vmatpush.bf16.msra.mxu0 0
      %2557 = vmatpush.bf16.msra.mxu0 0
      %2558 = vmatpush.bf16.msra.mxu0 %v2549
      %2559 = vmatmul.bf16.gmra.mxu0 %v2546
      %v2560 = vpop.f32.mrf.mxu0
      %v2561 = vadd.f32 0.0, %v2560
      %v2562 = vpop.f32.mrf.mxu0
      %v2563 = vadd.f32 0.0, %v2562
      %2564 = vdwg.mxu0
      %v2565 = vsel %vm405, %v2531, 0
      %v2568 = vsel %vm409, %v2522, 0
      %2570 = vmatpush.bf16.msra.mxu0 0
      %2571 = vmatpush.bf16.msra.mxu0 0
      %2572 = vmatpush.bf16.msra.mxu0 0
      %2573 = vmatpush.bf16.msra.mxu0 0
      %2574 = vmatpush.bf16.msra.mxu0 0
      %2575 = vmatpush.bf16.msra.mxu0 0
      %2576 = vmatpush.bf16.msra.mxu0 0
      %2577 = vmatpush.bf16.msra.mxu0 %v2568
      %2578 = vmatmul.bf16.gmra.mxu0 %v2565
      %v2579 = vpop.f32.mrf.mxu0
      %v2580 = vadd.f32 %v2561, %v2579
      %v2581 = vpop.f32.mrf.mxu0
      %v2582 = vadd.f32 %v2563, %v2581
      %2583 = vdwg.mxu0
      %v2584 = vld [vmem:[%s2012] sm:$0xe]
      %v2585 = vld [vmem:[%s447] sm:$0x3]
      %v2587 = vunpack.c.l.b16 %v2584
      %v2588 = vpack.c.b16 %v2529, %v2587
      %v2589 = vrot.slane %v2588, 1
      %v2590 = vrot.slane %v2532, 1
      %v2591 = vsel %vm452, %v2589, %v2590
      %v2593 = vsel %vm405, %v2591, 0
      %v2596 = vsel %vm409, %v2585, 0
      %2598 = vmatpush.bf16.msra.mxu0 0
      %2599 = vmatpush.bf16.msra.mxu0 0
      %2600 = vmatpush.bf16.msra.mxu0 0
      %2601 = vmatpush.bf16.msra.mxu0 0
      %2602 = vmatpush.bf16.msra.mxu0 0
      %2603 = vmatpush.bf16.msra.mxu0 0
      %2604 = vmatpush.bf16.msra.mxu0 0
      %2605 = vmatpush.bf16.msra.mxu0 %v2596
      %2606 = vmatmul.bf16.gmra.mxu0 %v2593
      %v2607 = vpop.f32.mrf.mxu0
      %v2608 = vadd.f32 0.0, %v2607
      %v2609 = vpop.f32.mrf.mxu0
      %v2610 = vadd.f32 0.0, %v2609
      %2611 = vdwg.mxu0
      %v2612 = vadd.f32 %v2580, %v2608
      %v2613 = vadd.f32 %v2582, %v2610
      %v2614 = vld [vmem:[%s2366] sm:$0xf]
      %v2615 = vld [vmem:[%s2366 + $0x4] sm:$0xf]
      %v2616 = vld [vmem:[%s481] sm:$0x3]
      %v2619 = vunpack.c.l.b16 %v2614
      %v2620 = vunpack.c.l.b16 %v2615
      %v2621 = vpack.c.b16 %v2620, %v2619
      %v2623 = vsel %vm405, %v2621, 0
      %v2626 = vsel %vm409, %v2616, 0
      %2628 = vmatpush.bf16.msra.mxu0 0
      %2629 = vmatpush.bf16.msra.mxu0 0
      %2630 = vmatpush.bf16.msra.mxu0 0
      %2631 = vmatpush.bf16.msra.mxu0 0
      %2632 = vmatpush.bf16.msra.mxu0 0
      %2633 = vmatpush.bf16.msra.mxu0 0
      %2634 = vmatpush.bf16.msra.mxu0 0
      %2635 = vmatpush.bf16.msra.mxu0 %v2626
      %2636 = vmatmul.bf16.gmra.mxu0 %v2623
      %v2637 = vpop.f32.mrf.mxu0
      %v2638 = vadd.f32 0.0, %v2637
      %v2639 = vpop.f32.mrf.mxu0
      %v2640 = vadd.f32 0.0, %v2639
      %2641 = vdwg.mxu0
      %v2642 = vadd.f32 %v2612, %v2638
      %v2643 = vadd.f32 %v2613, %v2640
      %v2644 = vld [vmem:[%s2366] sm:$0xf]
      %v2645 = vld [vmem:[%s2366 + $0x4] sm:$0xf]
      %v2646 = vld [vmem:[%s2366 + $0x8] sm:$0x1]
      %v2647 = vld [vmem:[%s513] sm:$0x3]
      %v2651 = vunpack.c.l.b16 %v2644
      %v2652 = vunpack.c.l.b16 %v2645
      %v2653 = vunpack.c.l.b16 %v2646
      %v2654 = vpack.c.b16 %v2652, %v2651
      %v2655 = vpack.c.b16 %v2653, %v2653
      %v2657 = vshrl.u32 %v2654, 16
      %v2659 = vshll.u32 %v2654, 16
      %v2661 = vrot.slane %v2659, 1
      %v2662 = vor.u32 %v2657, %v2661
      %v2664 = vshll.u32 %v2655, 16
      %v2666 = vrot.slane %v2664, 1
      %v2667 = vsel %vm392, %v2662, %v2666
      %v2669 = vsel %vm405, %v2667, 0
      %v2672 = vsel %vm409, %v2647, 0
      %2674 = vmatpush.bf16.msra.mxu0 0
      %2675 = vmatpush.bf16.msra.mxu0 0
      %2676 = vmatpush.bf16.msra.mxu0 0
      %2677 = vmatpush.bf16.msra.mxu0 0
      %2678 = vmatpush.bf16.msra.mxu0 0
      %2679 = vmatpush.bf16.msra.mxu0 0
      %2680 = vmatpush.bf16.msra.mxu0 0
      %2681 = vmatpush.bf16.msra.mxu0 %v2672
      %2682 = vmatmul.bf16.gmra.mxu0 %v2669
      %v2683 = vpop.f32.mrf.mxu0
      %v2684 = vadd.f32 0.0, %v2683
      %v2685 = vpop.f32.mrf.mxu0
      %v2686 = vadd.f32 0.0, %v2685
      %2687 = vdwg.mxu0
      %v2688 = vadd.f32 %v2642, %v2684
      %v2689 = vadd.f32 %v2643, %v2686
      %v2690 = vld [vmem:[%s2366] sm:$0xe]
      %v2691 = vld [vmem:[%s558] sm:$0x3]
      %v2693 = vunpack.c.l.b16 %v2690
      %v2694 = vpack.c.b16 %v2652, %v2693
      %v2695 = vrot.slane %v2694, 1
      %v2696 = vrot.slane %v2655, 1
      %v2697 = vsel %vm452, %v2695, %v2696
      %v2699 = vsel %vm405, %v2697, 0
      %v2702 = vsel %vm409, %v2691, 0
      %2704 = vmatpush.bf16.msra.mxu0 0
      %2705 = vmatpush.bf16.msra.mxu0 0
      %2706 = vmatpush.bf16.msra.mxu0 0
      %2707 = vmatpush.bf16.msra.mxu0 0
      %2708 = vmatpush.bf16.msra.mxu0 0
      %2709 = vmatpush.bf16.msra.mxu0 0
      %2710 = vmatpush.bf16.msra.mxu0 0
      %2711 = vmatpush.bf16.msra.mxu0 %v2702
      %2712 = vmatmul.bf16.gmra.mxu0 %v2699
      %v2713 = vpop.f32.mrf.mxu0
      %v2714 = vadd.f32 0.0, %v2713
      %v2715 = vpop.f32.mrf.mxu0
      %v2716 = vadd.f32 0.0, %v2715
      %2717 = vdwg.mxu0
      %v2718 = vadd.f32 %v2688, %v2714
      %v2719 = vadd.f32 %v2689, %v2716
      %v2720 = vld [vmem:[%s348] sm:$0xf]
      %v2721 = vld [vmem:[%s348 + $0x4] sm:$0xf]
      %v2722 = vld [vmem:[%s591] sm:$0x3]
      %v2725 = vunpack.c.l.b16 %v2720
      %v2726 = vunpack.c.l.b16 %v2721
      %v2727 = vpack.c.b16 %v2726, %v2725
      %v2729 = vsel %vm405, %v2727, 0
      %v2732 = vsel %vm409, %v2722, 0
      %2734 = vmatpush.bf16.msra.mxu0 0
      %2735 = vmatpush.bf16.msra.mxu0 0
      %2736 = vmatpush.bf16.msra.mxu0 0
      %2737 = vmatpush.bf16.msra.mxu0 0
      %2738 = vmatpush.bf16.msra.mxu0 0
      %2739 = vmatpush.bf16.msra.mxu0 0
      %2740 = vmatpush.bf16.msra.mxu0 0
      %2741 = vmatpush.bf16.msra.mxu0 %v2732
      %2742 = vmatmul.bf16.gmra.mxu0 %v2729
      %v2743 = vpop.f32.mrf.mxu0
      %v2744 = vadd.f32 0.0, %v2743
      %v2745 = vpop.f32.mrf.mxu0
      %v2746 = vadd.f32 0.0, %v2745
      %2747 = vdwg.mxu0
      %v2748 = vadd.f32 %v2718, %v2744
      %v2749 = vadd.f32 %v2719, %v2746
      %v2750 = vld [vmem:[%s348] sm:$0xf]
      %v2751 = vld [vmem:[%s348 + $0x4] sm:$0xf]
      %v2752 = vld [vmem:[%s348 + $0x8] sm:$0x1]
      %v2753 = vld [vmem:[%s623] sm:$0x3]
      %v2757 = vunpack.c.l.b16 %v2750
      %v2758 = vunpack.c.l.b16 %v2751
      %v2759 = vunpack.c.l.b16 %v2752
      %v2760 = vpack.c.b16 %v2758, %v2757
      %v2761 = vpack.c.b16 %v2759, %v2759
      %v2763 = vshrl.u32 %v2760, 16
      %v2765 = vshll.u32 %v2760, 16
      %v2767 = vrot.slane %v2765, 1
      %v2768 = vor.u32 %v2763, %v2767
      %v2770 = vshll.u32 %v2761, 16
      %v2772 = vrot.slane %v2770, 1
      %v2773 = vsel %vm392, %v2768, %v2772
      %v2775 = vsel %vm405, %v2773, 0
      %v2778 = vsel %vm409, %v2753, 0
      %2780 = vmatpush.bf16.msra.mxu0 0
      %2781 = vmatpush.bf16.msra.mxu0 0
      %2782 = vmatpush.bf16.msra.mxu0 0
      %2783 = vmatpush.bf16.msra.mxu0 0
      %2784 = vmatpush.bf16.msra.mxu0 0
      %2785 = vmatpush.bf16.msra.mxu0 0
      %2786 = vmatpush.bf16.msra.mxu0 0
      %2787 = vmatpush.bf16.msra.mxu0 %v2778
      %2788 = vmatmul.bf16.gmra.mxu0 %v2775
      %v2789 = vpop.f32.mrf.mxu0
      %v2790 = vadd.f32 0.0, %v2789
      %v2791 = vpop.f32.mrf.mxu0
      %v2792 = vadd.f32 0.0, %v2791
      %2793 = vdwg.mxu0
      %v2794 = vadd.f32 %v2748, %v2790
      %v2795 = vadd.f32 %v2749, %v2792
      %v2796 = vld [vmem:[%s348] sm:$0xe]
      %v2797 = vld [vmem:[%s668] sm:$0x3]
      %v2799 = vunpack.c.l.b16 %v2796
      %v2800 = vpack.c.b16 %v2758, %v2799
      %v2801 = vrot.slane %v2800, 1
      %v2802 = vrot.slane %v2761, 1
      %v2803 = vsel %vm452, %v2801, %v2802
      %v2805 = vsel %vm405, %v2803, 0
      %v2808 = vsel %vm409, %v2797, 0
      %2810 = vmatpush.bf16.msra.mxu0 0
      %2811 = vmatpush.bf16.msra.mxu0 0
      %2812 = vmatpush.bf16.msra.mxu0 0
      %2813 = vmatpush.bf16.msra.mxu0 0
      %2814 = vmatpush.bf16.msra.mxu0 0
      %2815 = vmatpush.bf16.msra.mxu0 0
      %2816 = vmatpush.bf16.msra.mxu0 0
      %2817 = vmatpush.bf16.msra.mxu0 %v2808
      %2818 = vmatmul.bf16.gmra.mxu0 %v2805
      %v2819 = vpop.f32.mrf.mxu0
      %v2820 = vadd.f32 0.0, %v2819
      %v2821 = vpop.f32.mrf.mxu0
      %v2822 = vadd.f32 0.0, %v2821
      %2823 = vdwg.mxu0
      %v2824 = vadd.f32 %v2794, %v2820
      %v2825 = vadd.f32 %v2795, %v2822
      %v2826 = vmul.f32 %v2824, %v699
      %v2827 = vmul.f32 %v2825, %v699
      %v2828 = vadd.f32 %v2826, %v704
      %v2829 = vadd.f32 %v2827, %v704
      %v2830 = vxor.u32 %v2828, 2147483648
      %v2831 = vxor.u32 %v2829, 2147483648
      %v2832 = vmul.f32 %v2830, 1.442695
      %v2833 = vpow.pop %v2832
      %v2834 = vmul.f32 %v2831, 1.442695
      %v2835 = vpow.pop %v2834
      %v2836 = vadd.f32 %v2833, 1.0
      %v2837 = vadd.f32 %v2835, 1.0
      %v2838 = vrcp.pop %v2836
      %v2839 = vmul.f32 %v2836, %v2838
      %v2840 = vsub.f32 1.0, %v2839
      %v2841 = vmul.f32 %v2838, %v2840
      %v2842 = vadd.f32 %v2838, %v2841
      %vm2843 = vweird.f32 %v2836
      %vm2844 = vweird.f32 %v2838
      %vm2845 = vmor %vm2843, %vm2844
      %v2846 = vsel %vm2845, %v2838, %v2842
      %v2847 = vand.u32 2147483647, %v2836
      %vm2848 = vcmp.eq.f32.partialorder %v2847, 8.507059e+37
      %v2849 = vand.u32 %v2836, 2147483648
      %v2850 = vor.u32 1.1754944e-38, %v2849
      %v2851 = vsel %vm2848, %v2850, %v2846
      %v2852 = vmul.f32 1.0, %v2851
      %v2853 = vrcp.pop %v2837
      %v2854 = vmul.f32 %v2837, %v2853
      %v2855 = vsub.f32 1.0, %v2854
      %v2856 = vmul.f32 %v2853, %v2855
      %v2857 = vadd.f32 %v2853, %v2856
      %vm2858 = vweird.f32 %v2837
      %vm2859 = vweird.f32 %v2853
      %vm2860 = vmor %vm2858, %vm2859
      %v2861 = vsel %vm2860, %v2853, %v2857
      %v2862 = vand.u32 2147483647, %v2837
      %vm2863 = vcmp.eq.f32.partialorder %v2862, 8.507059e+37
      %v2864 = vand.u32 %v2837, 2147483648
      %v2865 = vor.u32 1.1754944e-38, %v2864
      %v2866 = vsel %vm2863, %v2865, %v2861
      %v2867 = vmul.f32 1.0, %v2866
      %v2868 = vmul.f32 %v2828, %v2852
      %v2869 = vmul.f32 %v2829, %v2867
      %s2870 = scalar_lea.vmem %s373, 96
      %2871 = vst [vmem:[%s2870] sm:$0xff] %v2868
      %2872 = vst [vmem:[%s2870 + $0x8] sm:$0xff] %v2869
      %v2873 = vld [vmem:[%s2366] sm:$0xf]
      %v2874 = vld [vmem:[%s2366 + $0x4] sm:$0xf]
      %v2875 = vld [vmem:[%s354] sm:$0x3]
      %v2876 = vld [vmem:[%s2366 + $0x8] sm:$0x1]
      %v2877 = vld [vmem:[%s382] sm:$0x3]
      %v2881 = vunpack.c.l.b16 %v2873
      %v2882 = vunpack.c.l.b16 %v2874
      %v2883 = vunpack.c.l.b16 %v2876
      %v2884 = vpack.c.b16 %v2882, %v2881
      %v2885 = vpack.c.b16 %v2883, %v2883
      %v2887 = vshrl.u32 %v2884, 16
      %v2889 = vshll.u32 %v2884, 16
      %v2891 = vrot.slane %v2889, 1
      %v2892 = vor.u32 %v2887, %v2891
      %v2894 = vshll.u32 %v2885, 16
      %v2896 = vrot.slane %v2894, 1
      %v2897 = vsel %vm392, %v2892, %v2896
      %v2899 = vsel %vm405, %v2897, 0
      %v2902 = vsel %vm409, %v2877, 0
      %2904 = vmatpush.bf16.msra.mxu0 0
      %2905 = vmatpush.bf16.msra.mxu0 0
      %2906 = vmatpush.bf16.msra.mxu0 0
      %2907 = vmatpush.bf16.msra.mxu0 0
      %2908 = vmatpush.bf16.msra.mxu0 0
      %2909 = vmatpush.bf16.msra.mxu0 0
      %2910 = vmatpush.bf16.msra.mxu0 0
      %2911 = vmatpush.bf16.msra.mxu0 %v2902
      %2912 = vmatmul.bf16.gmra.mxu0 %v2899
      %v2913 = vpop.f32.mrf.mxu0
      %v2914 = vadd.f32 0.0, %v2913
      %v2915 = vpop.f32.mrf.mxu0
      %v2916 = vadd.f32 0.0, %v2915
      %2917 = vdwg.mxu0
      %v2918 = vsel %vm405, %v2884, 0
      %v2921 = vsel %vm409, %v2875, 0
      %2923 = vmatpush.bf16.msra.mxu0 0
      %2924 = vmatpush.bf16.msra.mxu0 0
      %2925 = vmatpush.bf16.msra.mxu0 0
      %2926 = vmatpush.bf16.msra.mxu0 0
      %2927 = vmatpush.bf16.msra.mxu0 0
      %2928 = vmatpush.bf16.msra.mxu0 0
      %2929 = vmatpush.bf16.msra.mxu0 0
      %2930 = vmatpush.bf16.msra.mxu0 %v2921
      %2931 = vmatmul.bf16.gmra.mxu0 %v2918
      %v2932 = vpop.f32.mrf.mxu0
      %v2933 = vadd.f32 %v2914, %v2932
      %v2934 = vpop.f32.mrf.mxu0
      %v2935 = vadd.f32 %v2916, %v2934
      %2936 = vdwg.mxu0
      %v2937 = vld [vmem:[%s2366] sm:$0xe]
      %v2938 = vld [vmem:[%s447] sm:$0x3]
      %v2940 = vunpack.c.l.b16 %v2937
      %v2941 = vpack.c.b16 %v2882, %v2940
      %v2942 = vrot.slane %v2941, 1
      %v2943 = vrot.slane %v2885, 1
      %v2944 = vsel %vm452, %v2942, %v2943
      %v2946 = vsel %vm405, %v2944, 0
      %v2949 = vsel %vm409, %v2938, 0
      %2951 = vmatpush.bf16.msra.mxu0 0
      %2952 = vmatpush.bf16.msra.mxu0 0
      %2953 = vmatpush.bf16.msra.mxu0 0
      %2954 = vmatpush.bf16.msra.mxu0 0
      %2955 = vmatpush.bf16.msra.mxu0 0
      %2956 = vmatpush.bf16.msra.mxu0 0
      %2957 = vmatpush.bf16.msra.mxu0 0
      %2958 = vmatpush.bf16.msra.mxu0 %v2949
      %2959 = vmatmul.bf16.gmra.mxu0 %v2946
      %v2960 = vpop.f32.mrf.mxu0
      %v2961 = vadd.f32 0.0, %v2960
      %v2962 = vpop.f32.mrf.mxu0
      %v2963 = vadd.f32 0.0, %v2962
      %2964 = vdwg.mxu0
      %v2965 = vadd.f32 %v2933, %v2961
      %v2966 = vadd.f32 %v2935, %v2963
      %v2967 = vld [vmem:[%s348] sm:$0xf]
      %v2968 = vld [vmem:[%s348 + $0x4] sm:$0xf]
      %v2969 = vld [vmem:[%s481] sm:$0x3]
      %v2972 = vunpack.c.l.b16 %v2967
      %v2973 = vunpack.c.l.b16 %v2968
      %v2974 = vpack.c.b16 %v2973, %v2972
      %v2976 = vsel %vm405, %v2974, 0
      %v2979 = vsel %vm409, %v2969, 0
      %2981 = vmatpush.bf16.msra.mxu0 0
      %2982 = vmatpush.bf16.msra.mxu0 0
      %2983 = vmatpush.bf16.msra.mxu0 0
      %2984 = vmatpush.bf16.msra.mxu0 0
      %2985 = vmatpush.bf16.msra.mxu0 0
      %2986 = vmatpush.bf16.msra.mxu0 0
      %2987 = vmatpush.bf16.msra.mxu0 0
      %2988 = vmatpush.bf16.msra.mxu0 %v2979
      %2989 = vmatmul.bf16.gmra.mxu0 %v2976
      %v2990 = vpop.f32.mrf.mxu0
      %v2991 = vadd.f32 0.0, %v2990
      %v2992 = vpop.f32.mrf.mxu0
      %v2993 = vadd.f32 0.0, %v2992
      %2994 = vdwg.mxu0
      %v2995 = vadd.f32 %v2965, %v2991
      %v2996 = vadd.f32 %v2966, %v2993
      %v2997 = vld [vmem:[%s348] sm:$0xf]
      %v2998 = vld [vmem:[%s348 + $0x4] sm:$0xf]
      %v2999 = vld [vmem:[%s348 + $0x8] sm:$0x1]
      %v3000 = vld [vmem:[%s513] sm:$0x3]
      %v3004 = vunpack.c.l.b16 %v2997
      %v3005 = vunpack.c.l.b16 %v2998
      %v3006 = vunpack.c.l.b16 %v2999
      %v3007 = vpack.c.b16 %v3005, %v3004
      %v3008 = vpack.c.b16 %v3006, %v3006
      %v3010 = vshrl.u32 %v3007, 16
      %v3012 = vshll.u32 %v3007, 16
      %v3014 = vrot.slane %v3012, 1
      %v3015 = vor.u32 %v3010, %v3014
      %v3017 = vshll.u32 %v3008, 16
      %v3019 = vrot.slane %v3017, 1
      %v3020 = vsel %vm392, %v3015, %v3019
      %v3022 = vsel %vm405, %v3020, 0
      %v3025 = vsel %vm409, %v3000, 0
      %3027 = vmatpush.bf16.msra.mxu0 0
      %3028 = vmatpush.bf16.msra.mxu0 0
      %3029 = vmatpush.bf16.msra.mxu0 0
      %3030 = vmatpush.bf16.msra.mxu0 0
      %3031 = vmatpush.bf16.msra.mxu0 0
      %3032 = vmatpush.bf16.msra.mxu0 0
      %3033 = vmatpush.bf16.msra.mxu0 0
      %3034 = vmatpush.bf16.msra.mxu0 %v3025
      %3035 = vmatmul.bf16.gmra.mxu0 %v3022
      %v3036 = vpop.f32.mrf.mxu0
      %v3037 = vadd.f32 0.0, %v3036
      %v3038 = vpop.f32.mrf.mxu0
      %v3039 = vadd.f32 0.0, %v3038
      %3040 = vdwg.mxu0
      %v3041 = vadd.f32 %v2995, %v3037
      %v3042 = vadd.f32 %v2996, %v3039
      %v3043 = vld [vmem:[%s348] sm:$0xe]
      %v3044 = vld [vmem:[%s558] sm:$0x3]
      %v3046 = vunpack.c.l.b16 %v3043
      %v3047 = vpack.c.b16 %v3005, %v3046
      %v3048 = vrot.slane %v3047, 1
      %v3049 = vrot.slane %v3008, 1
      %v3050 = vsel %vm452, %v3048, %v3049
      %v3052 = vsel %vm405, %v3050, 0
      %v3055 = vsel %vm409, %v3044, 0
      %3057 = vmatpush.bf16.msra.mxu0 0
      %3058 = vmatpush.bf16.msra.mxu0 0
      %3059 = vmatpush.bf16.msra.mxu0 0
      %3060 = vmatpush.bf16.msra.mxu0 0
      %3061 = vmatpush.bf16.msra.mxu0 0
      %3062 = vmatpush.bf16.msra.mxu0 0
      %3063 = vmatpush.bf16.msra.mxu0 0
      %3064 = vmatpush.bf16.msra.mxu0 %v3055
      %3065 = vmatmul.bf16.gmra.mxu0 %v3052
      %v3066 = vpop.f32.mrf.mxu0
      %v3067 = vadd.f32 0.0, %v3066
      %v3068 = vpop.f32.mrf.mxu0
      %v3069 = vadd.f32 0.0, %v3068
      %3070 = vdwg.mxu0
      %v3071 = vadd.f32 %v3041, %v3067
      %v3072 = vadd.f32 %v3042, %v3069
      %s3073 = scalar_lea.vmem %s348, 12
      %v3074 = vld [vmem:[%s3073] sm:$0xf]
      %v3075 = vld [vmem:[%s3073 + $0x4] sm:$0xf]
      %v3076 = vld [vmem:[%s591] sm:$0x3]
      %v3079 = vunpack.c.l.b16 %v3074
      %v3080 = vunpack.c.l.b16 %v3075
      %v3081 = vpack.c.b16 %v3080, %v3079
      %v3083 = vsel %vm405, %v3081, 0
      %v3086 = vsel %vm409, %v3076, 0
      %3088 = vmatpush.bf16.msra.mxu0 0
      %3089 = vmatpush.bf16.msra.mxu0 0
      %3090 = vmatpush.bf16.msra.mxu0 0
      %3091 = vmatpush.bf16.msra.mxu0 0
      %3092 = vmatpush.bf16.msra.mxu0 0
      %3093 = vmatpush.bf16.msra.mxu0 0
      %3094 = vmatpush.bf16.msra.mxu0 0
      %3095 = vmatpush.bf16.msra.mxu0 %v3086
      %3096 = vmatmul.bf16.gmra.mxu0 %v3083
      %v3097 = vpop.f32.mrf.mxu0
      %v3098 = vadd.f32 0.0, %v3097
      %v3099 = vpop.f32.mrf.mxu0
      %v3100 = vadd.f32 0.0, %v3099
      %3101 = vdwg.mxu0
      %v3102 = vadd.f32 %v3071, %v3098
      %v3103 = vadd.f32 %v3072, %v3100
      %v3104 = vld [vmem:[%s3073] sm:$0xf]
      %v3105 = vld [vmem:[%s3073 + $0x4] sm:$0xf]
      %v3106 = vld [vmem:[%s3073 + $0x8] sm:$0x1]
      %v3107 = vld [vmem:[%s623] sm:$0x3]
      %v3111 = vunpack.c.l.b16 %v3104
      %v3112 = vunpack.c.l.b16 %v3105
      %v3113 = vunpack.c.l.b16 %v3106
      %v3114 = vpack.c.b16 %v3112, %v3111
      %v3115 = vpack.c.b16 %v3113, %v3113
      %v3117 = vshrl.u32 %v3114, 16
      %v3119 = vshll.u32 %v3114, 16
      %v3121 = vrot.slane %v3119, 1
      %v3122 = vor.u32 %v3117, %v3121
      %v3124 = vshll.u32 %v3115, 16
      %v3126 = vrot.slane %v3124, 1
      %v3127 = vsel %vm392, %v3122, %v3126
      %v3129 = vsel %vm405, %v3127, 0
      %v3132 = vsel %vm409, %v3107, 0
      %3134 = vmatpush.bf16.msra.mxu0 0
      %3135 = vmatpush.bf16.msra.mxu0 0
      %3136 = vmatpush.bf16.msra.mxu0 0
      %3137 = vmatpush.bf16.msra.mxu0 0
      %3138 = vmatpush.bf16.msra.mxu0 0
      %3139 = vmatpush.bf16.msra.mxu0 0
      %3140 = vmatpush.bf16.msra.mxu0 0
      %3141 = vmatpush.bf16.msra.mxu0 %v3132
      %3142 = vmatmul.bf16.gmra.mxu0 %v3129
      %v3143 = vpop.f32.mrf.mxu0
      %v3144 = vadd.f32 0.0, %v3143
      %v3145 = vpop.f32.mrf.mxu0
      %v3146 = vadd.f32 0.0, %v3145
      %3147 = vdwg.mxu0
      %v3148 = vadd.f32 %v3102, %v3144
      %v3149 = vadd.f32 %v3103, %v3146
      %v3150 = vld [vmem:[%s3073] sm:$0xe]
      %v3151 = vld [vmem:[%s668] sm:$0x3]
      %v3153 = vunpack.c.l.b16 %v3150
      %v3154 = vpack.c.b16 %v3112, %v3153
      %v3155 = vrot.slane %v3154, 1
      %v3156 = vrot.slane %v3115, 1
      %v3157 = vsel %vm452, %v3155, %v3156
      %v3159 = vsel %vm405, %v3157, 0
      %v3162 = vsel %vm409, %v3151, 0
      %3164 = vmatpush.bf16.msra.mxu0 0
      %3165 = vmatpush.bf16.msra.mxu0 0
      %3166 = vmatpush.bf16.msra.mxu0 0
      %3167 = vmatpush.bf16.msra.mxu0 0
      %3168 = vmatpush.bf16.msra.mxu0 0
      %3169 = vmatpush.bf16.msra.mxu0 0
      %3170 = vmatpush.bf16.msra.mxu0 0
      %3171 = vmatpush.bf16.msra.mxu0 %v3162
      %3172 = vmatmul.bf16.gmra.mxu0 %v3159
      %v3173 = vpop.f32.mrf.mxu0
      %v3174 = vadd.f32 0.0, %v3173
      %v3175 = vpop.f32.mrf.mxu0
      %v3176 = vadd.f32 0.0, %v3175
      %3177 = vdwg.mxu0
      %v3178 = vadd.f32 %v3148, %v3174
      %v3179 = vadd.f32 %v3149, %v3176
      %v3180 = vmul.f32 %v3178, %v699
      %v3181 = vmul.f32 %v3179, %v699
      %v3182 = vadd.f32 %v3180, %v704
      %v3183 = vadd.f32 %v3181, %v704
      %v3184 = vxor.u32 %v3182, 2147483648
      %v3185 = vxor.u32 %v3183, 2147483648
      %v3186 = vmul.f32 %v3184, 1.442695
      %v3187 = vpow.pop %v3186
      %v3188 = vmul.f32 %v3185, 1.442695
      %v3189 = vpow.pop %v3188
      %v3190 = vadd.f32 %v3187, 1.0
      %v3191 = vadd.f32 %v3189, 1.0
      %v3192 = vrcp.pop %v3190
      %v3193 = vmul.f32 %v3190, %v3192
      %v3194 = vsub.f32 1.0, %v3193
      %v3195 = vmul.f32 %v3192, %v3194
      %v3196 = vadd.f32 %v3192, %v3195
      %vm3197 = vweird.f32 %v3190
      %vm3198 = vweird.f32 %v3192
      %vm3199 = vmor %vm3197, %vm3198
      %v3200 = vsel %vm3199, %v3192, %v3196
      %v3201 = vand.u32 2147483647, %v3190
      %vm3202 = vcmp.eq.f32.partialorder %v3201, 8.507059e+37
      %v3203 = vand.u32 %v3190, 2147483648
      %v3204 = vor.u32 1.1754944e-38, %v3203
      %v3205 = vsel %vm3202, %v3204, %v3200
      %v3206 = vmul.f32 1.0, %v3205
      %v3207 = vrcp.pop %v3191
      %v3208 = vmul.f32 %v3191, %v3207
      %v3209 = vsub.f32 1.0, %v3208
      %v3210 = vmul.f32 %v3207, %v3209
      %v3211 = vadd.f32 %v3207, %v3210
      %vm3212 = vweird.f32 %v3191
      %vm3213 = vweird.f32 %v3207
      %vm3214 = vmor %vm3212, %vm3213
      %v3215 = vsel %vm3214, %v3207, %v3211
      %v3216 = vand.u32 2147483647, %v3191
      %vm3217 = vcmp.eq.f32.partialorder %v3216, 8.507059e+37
      %v3218 = vand.u32 %v3191, 2147483648
      %v3219 = vor.u32 1.1754944e-38, %v3218
      %v3220 = vsel %vm3217, %v3219, %v3215
      %v3221 = vmul.f32 1.0, %v3220
      %v3222 = vmul.f32 %v3182, %v3206
      %v3223 = vmul.f32 %v3183, %v3221
      %s3224 = scalar_lea.vmem %s373, 112
      %3225 = vst [vmem:[%s3224] sm:$0xff] %v3222
      %3226 = vst [vmem:[%s3224 + $0x8] sm:$0xff] %v3223
      %s3227 = smul.u32 8, %s23
      %p3228 = scmp.lt.s32.totalorder %s22, 1
      %s3229 = scalar_select %p3228, %s22, 1
      %p3230 = scmp.lt.s32.totalorder %s3227, 15
      %s3231 = scalar_select %p3230, %s3227, 15
      %p3232 = scmp.lt.s32.totalorder %s21, 0
      %s3233 = scalar_select %p3232, %s21, 0
      %s3234 = smul.addr %s3231, 2
      %s3235 = sadd.s32 %s3233, %s3234
      %s3236 = smul.addr %s3229, 32
      %s3237 = sadd.s32 %s3235, %s3236
      %s3238 = smul.addr %s3237, 8
      %s3239 = scalar_lea.vmem %s5, %s3238
      // Predicated region
      $region41: #{basic_conv.1} parent=39 // pred_check
        %p3240 = pneg %p193
      $region42: #{basic_conv.1} parent=39 // pred_check_branch
        %3242 = sbr.rel (%p3240) target = $region44
      $region43: #{basic_conv.1} parent=39 // pred_region
        %s3243 = smul.u32 8, %s23
      $region44: #{basic_conv.1} parent=39 // pred_fallthru
        _
    $region40: #{basic_conv.1} parent=5 // pred_fallthru
      _
    %p3244 = scmp.le.s32.totalorder 2, %s11
    // Predicated region
    $region45: #{basic_conv.1} parent=5 // pred_check
      %p3245 = pneg %p3244
    $region46: #{basic_conv.1} parent=5 // pred_check_branch
      %3247 = sbr.rel (%p3245) target = $region48
    $region47: #{basic_conv.1} parent=5 // pred_region
      %s3248 = ssub.s32 %s11, 2
      // Predicated region
      $region49: #{basic_conv.1} parent=47 // pred_check
        %p3249 = pneg %p199
      $region50: #{basic_conv.1} parent=47 // pred_check_branch
        %3251 = sbr.rel (%p3249) target = $region52
      $region51: #{basic_conv.1} parent=47 // pred_region
        %s3252 = smul.u32 8, %s26
        %p3253 = scmp.lt.s32.totalorder %s25, 1
        %s3254 = scalar_select %p3253, %s25, 1
        %p3255 = scmp.lt.s32.totalorder %s3252, 15
        %s3256 = scalar_select %p3255, %s3252, 15
        %p3257 = scmp.lt.s32.totalorder %s24, 0
        %s3258 = scalar_select %p3257, %s24, 0
        %s3259 = smul.addr %s3256, 2
        %s3260 = sadd.s32 %s3258, %s3259
        %s3261 = smul.addr %s3254, 32
        %s3262 = sadd.s32 %s3260, %s3261
        %s3263 = smul.addr %s3262, 8
        %s3264 = scalar_lea.vmem %s5, %s3263
      $region52: #{basic_conv.1} parent=47 // pred_fallthru
        _
    $region48: #{basic_conv.1} parent=5 // pred_fallthru
      _
  $region6: #{basic_conv.1} parent=0 // loop_footer
    %s15 = sadd.s32 1, %s11
  $region7: #{basic_conv.1} parent=0 // loop_footer_branch
    %10 = sbr.rel target = $region3
  $region8: #{basic_conv.1} parent=0 // loop_exit
    _

</llo_original>
